<compile_context>
chip_gen: v7x
topology: tpu7x:2x2x1
jax: 0.10.0
libtpu: 0.0.40
codegen_flags: <defaults>
</compile_context>

<pallas_src>
import jax
import jax.numpy as jnp
from jax import lax
from jax.experimental import pallas as pl
from jax.experimental.pallas import tpu as pltpu


def decoder_kernel(mask_ref,            # SMEM (T,) int32 : 1 -> feed argmax(input[t]), 0 -> argmax(prev logits)
                   inp_ref,             # VMEM (T, B, Vp)  padded lanes = float32 min
                   h0_ref, c0_ref,      # VMEM (L, B, H)
                   emb_ref,             # VMEM (Vp, H)     padded rows = 0
                   wih_ref,             # VMEM (L, H, 4H)  pre-transposed, gate order (i,f,o,g)
                   whh_ref,             # VMEM (L*H, L*4H) block-diagonal, pre-transposed, reordered
                   bias_ref,            # VMEM (1, L*4H)   (b_ih + b_hh), reordered, layer-major
                   wout_ref,            # VMEM (H, Vp)     pre-transposed, padded cols = 0
                   bout_ref,            # VMEM (1, Vp)     padded cols = float32 min
                   out_ref,             # VMEM (T, B, Vp)
                   hN_ref, cN_ref):     # VMEM (L, B, H)
    T, B, Vp = inp_ref.shape
    L, _, H = h0_ref.shape
    H4 = 4 * H

    # ---- loop constants (hoisted; no in-kernel transposes, broadcasts hoisted) ----
    emb = emb_ref[...]                                   # (Vp, H)
    wih = [wih_ref[l] for l in range(L)]                 # each (H, 4H)
    whh_bd = whh_ref[...]                                # (L*H, L*4H)
    bias_b = jnp.broadcast_to(bias_ref[...], (B, L * H4))
    wout = wout_ref[...]                                 # (H, Vp)
    bout_b = jnp.broadcast_to(bout_ref[...], (B, Vp))
    lane_iota = lax.broadcasted_iota(jnp.int32, (B, Vp), 1)

    h = [h0_ref[l] for l in range(L)]                    # each (B, H)
    c = [c0_ref[l] for l in range(L)]
    idx_prev = jnp.zeros((B, 1), jnp.int32)              # argmax of the all-zero initial logits

    # ---- time loop: fully unrolled (T is static & small) ----
    for t in range(T):
        use_gt = mask_ref[t] > 0
        idx_gt = jnp.argmax(inp_ref[t], axis=1, keepdims=True).astype(jnp.int32)   # (B,1)
        idx = jnp.where(use_gt, idx_gt, idx_prev)                                  # (B,1)
        onehot = (idx == lane_iota).astype(jnp.float32)                            # (B,Vp)
        x = jnp.dot(onehot, emb, preferred_element_type=jnp.float32)               # (B,H)

        # all-layer recurrent contribution in ONE matmul, bias folded in once
        h_all = jnp.concatenate(h, axis=1)                                         # (B, L*H)
        hh = jnp.dot(h_all, whh_bd, preferred_element_type=jnp.float32) + bias_b   # (B, L*4H)

        for l in range(L):
            gates = (jnp.dot(x, wih[l], preferred_element_type=jnp.float32)
                     + hh[:, l * H4:(l + 1) * H4])                                 # (B, 4H)
            sg = jax.nn.sigmoid(gates[:, :3 * H])          # i, f, o in one EUP pass
            gg = jnp.tanh(gates[:, 3 * H:])                # g
            i_g = sg[:, 0 * H:1 * H]
            f_g = sg[:, 1 * H:2 * H]
            o_g = sg[:, 2 * H:3 * H]
            c_l = f_g * c[l] + i_g * gg
            h_l = o_g * jnp.tanh(c_l)
            c[l] = c_l
            h[l] = h_l
            x = h_l                                        # feed next layer (eval: no dropout)

        logits = jnp.dot(x, wout, preferred_element_type=jnp.float32) + bout_b     # (B, Vp)
        out_ref[t] = logits
        idx_prev = jnp.argmax(logits, axis=1, keepdims=True).astype(jnp.int32)

    for l in range(L):
        hN_ref[l] = h[l]
        cN_ref[l] = c[l]


def _prep_params(params, H, V, L, Vp):
    """Wrapper-side layout plumbing: gate reorder (i,f,g,o)->(i,f,o,g), transpose,
    block-diagonal Whh, lane padding of the V dimension."""
    emb, wih, whh, bias, wout, bout = params
    H4 = 4 * H
    NEG = jnp.finfo(jnp.float32).min
    perm = jnp.array([0, 1, 3, 2], dtype=jnp.int32)       # (i,f,g,o) -> (i,f,o,g)

    def reorder_rows(w):                                  # (L, 4H, H)
        return w.reshape(L, 4, H, H)[:, perm].reshape(L, H4, H)

    wih_t = jnp.transpose(reorder_rows(wih), (0, 2, 1))   # (L, H, 4H)
    whh_t = jnp.transpose(reorder_rows(whh), (0, 2, 1))   # (L, H, 4H)

    whh_bd = jnp.zeros((L * H, L * H4), jnp.float32)
    for l in range(L):
        whh_bd = whh_bd.at[l * H:(l + 1) * H, l * H4:(l + 1) * H4].set(whh_t[l])

    bias_flat = bias.reshape(L, 4, H)[:, perm].reshape(1, L * H4)

    emb_p = jnp.zeros((Vp, H), jnp.float32).at[:V].set(emb)
    wout_t = jnp.zeros((H, Vp), jnp.float32).at[:, :V].set(wout.T)
    bout_p = jnp.full((1, Vp), NEG, jnp.float32).at[:, :V].set(bout)
    return emb_p, wih_t, whh_bd, bias_flat, wout_t, bout_p


def decoder_forward(inp_btv, h0, c0, params, mask):
    """inp_btv: (B, T, V) float32; h0/c0: (L, B, H); mask: (T,) int32."""
    B, T, V = inp_btv.shape
    L, _, H = h0.shape
    Vp = max(128, ((V + 127) // 128) * 128)
    NEG = jnp.finfo(jnp.float32).min

    emb_p, wih_t, whh_bd, bias_flat, wout_t, bout_p = _prep_params(params, H, V, L, Vp)

    inp_tbv = jnp.transpose(inp_btv, (1, 0, 2))                          # time-major
    inp_pad = jnp.full((T, B, Vp), NEG, jnp.float32).at[:, :, :V].set(inp_tbv)

    vmem = pl.BlockSpec(memory_space=pltpu.MemorySpace.VMEM)
    smem = pl.BlockSpec(memory_space=pltpu.MemorySpace.SMEM)

    out_tbv, hN, cN = pl.pallas_call(
        decoder_kernel,
        out_shape=(
            jax.ShapeDtypeStruct((T, B, Vp), jnp.float32),
            jax.ShapeDtypeStruct((L, B, H), jnp.float32),
            jax.ShapeDtypeStruct((L, B, H), jnp.float32),
        ),
        in_specs=[smem, vmem, vmem, vmem, vmem, vmem, vmem, vmem, vmem, vmem],
        out_specs=(vmem, vmem, vmem),
    )(mask, inp_pad, h0, c0, emb_p, wih_t, whh_bd, bias_flat, wout_t, bout_p)

    outputscross = jnp.transpose(out_tbv[:, :, :V], (1, 0, 2))           # back to (B, T, V)
    return outputscross, (hN, cN)


def init_params(key, hidden_size, output_size, numlayer):
    H, V, L = hidden_size, output_size, numlayer
    ks = jax.random.split(key, 8)
    s = 1.0 / jnp.sqrt(H)
    emb = jax.random.normal(ks[0], (V, H), jnp.float32)
    wih = jax.random.uniform(ks[1], (L, 4 * H, H), jnp.float32, -s, s)
    whh = jax.random.uniform(ks[2], (L, 4 * H, H), jnp.float32, -s, s)
    b_ih = jax.random.uniform(ks[3], (L, 1, 4 * H), jnp.float32, -s, s)
    b_hh = jax.random.uniform(ks[4], (L, 1, 4 * H), jnp.float32, -s, s)
    bias = b_ih + b_hh
    wout = jax.random.uniform(ks[5], (V, H), jnp.float32, -s, s)
    bout = jax.random.uniform(ks[6], (1, V), jnp.float32, -s, s)
    return emb, wih, whh, bias, wout, bout


if __name__ == "__main__":
    # small shapes consistent with the module
    B, H, V, T, L = 2, 32, 16, 8, 3      # batch, hidden_size, output_size, output_size_perline, numlayer
    teacherforcing = 0.3

    key = jax.random.PRNGKey(0)
    k_inp, k_h, k_c, k_p, k_m = jax.random.split(key, 5)

    x = jax.random.normal(k_inp, (B, T, V), jnp.float32)        # "input" logits/one-hot-ish targets
    h0 = jax.random.normal(k_h, (L, B, H), jnp.float32)
    c0 = jax.random.normal(k_c, (L, B, H), jnp.float32)
    params = init_params(k_p, H, V, L)

    # deterministic stand-in for `i == 0 or random.random() > teacherforcing`
    rand = jax.random.uniform(k_m, (T,))
    mask = (rand > teacherforcing).astype(jnp.int32).at[0].set(1)

    outputscross, (hN, cN) = decoder_forward(x, h0, c0, params, mask)
    jax.block_until_ready((outputscross, hN, cN))

    assert outputscross.shape == (B, T, V)
    assert hN.shape == (L, B, H) and cN.shape == (L, B, H)
    assert bool(jnp.all(jnp.isfinite(outputscross)))
    print("KERNEL_OK")
</pallas_src>

<mosaic_0001>
module attributes {stable_mosaic.version = 11 : i64} {
  func.func @decoder_kernel(%arg0: memref<8xi32, #tpu.memory_space<smem>>, %arg1: memref<8x2x128xf32, #tpu.memory_space<vmem>>, %arg2: memref<3x2x32xf32, #tpu.memory_space<vmem>>, %arg3: memref<3x2x32xf32, #tpu.memory_space<vmem>>, %arg4: memref<128x32xf32, #tpu.memory_space<vmem>>, %arg5: memref<3x32x128xf32, #tpu.memory_space<vmem>>, %arg6: memref<96x384xf32, #tpu.memory_space<vmem>>, %arg7: memref<1x384xf32, #tpu.memory_space<vmem>>, %arg8: memref<32x128xf32, #tpu.memory_space<vmem>>, %arg9: memref<1x128xf32, #tpu.memory_space<vmem>>, %arg10: memref<8x2x128xf32, #tpu.memory_space<vmem>>, %arg11: memref<3x2x32xf32, #tpu.memory_space<vmem>>, %arg12: memref<3x2x32xf32, #tpu.memory_space<vmem>>) attributes {dimension_semantics = [], scalar_prefetch = 0 : i64, scratch_operands = 0 : i64, tpu.core_type = #tpu.core_type<tc>} {
    %c0 = arith.constant 0 : index
    %c0_0 = arith.constant 0 : index
    %0 = vector.load %arg4[%c0, %c0_0] : memref<128x32xf32, #tpu.memory_space<vmem>>, vector<128x32xf32>
    %c0_1 = arith.constant 0 : index
    %c0_2 = arith.constant 0 : index
    %c0_3 = arith.constant 0 : index
    %1 = vector.load %arg5[%c0_1, %c0_2, %c0_3] : memref<3x32x128xf32, #tpu.memory_space<vmem>>, vector<1x32x128xf32>
    %2 = vector.shape_cast %1 : vector<1x32x128xf32> to vector<32x128xf32>
    %c1 = arith.constant 1 : index
    %c0_4 = arith.constant 0 : index
    %c0_5 = arith.constant 0 : index
    %3 = vector.load %arg5[%c1, %c0_4, %c0_5] : memref<3x32x128xf32, #tpu.memory_space<vmem>>, vector<1x32x128xf32>
    %4 = vector.shape_cast %3 : vector<1x32x128xf32> to vector<32x128xf32>
    %c2 = arith.constant 2 : index
    %c0_6 = arith.constant 0 : index
    %c0_7 = arith.constant 0 : index
    %5 = vector.load %arg5[%c2, %c0_6, %c0_7] : memref<3x32x128xf32, #tpu.memory_space<vmem>>, vector<1x32x128xf32>
    %6 = vector.shape_cast %5 : vector<1x32x128xf32> to vector<32x128xf32>
    %c0_8 = arith.constant 0 : index
    %c0_9 = arith.constant 0 : index
    %7 = vector.load %arg6[%c0_8, %c0_9] : memref<96x384xf32, #tpu.memory_space<vmem>>, vector<96x384xf32>
    %c0_10 = arith.constant 0 : index
    %c0_11 = arith.constant 0 : index
    %8 = vector.load %arg7[%c0_10, %c0_11] : memref<1x384xf32, #tpu.memory_space<vmem>>, vector<1x384xf32>
    %9 = vector.shape_cast %8 : vector<1x384xf32> to vector<1x384xf32>
    %10 = vector.broadcast %9 : vector<1x384xf32> to vector<2x384xf32>
    %c0_12 = arith.constant 0 : index
    %c0_13 = arith.constant 0 : index
    %11 = vector.load %arg8[%c0_12, %c0_13] : memref<32x128xf32, #tpu.memory_space<vmem>>, vector<32x128xf32>
    %c0_14 = arith.constant 0 : index
    %c0_15 = arith.constant 0 : index
    %12 = vector.load %arg9[%c0_14, %c0_15] : memref<1x128xf32, #tpu.memory_space<vmem>>, vector<1x128xf32>
    %13 = vector.shape_cast %12 : vector<1x128xf32> to vector<1x128xf32>
    %14 = vector.broadcast %13 : vector<1x128xf32> to vector<2x128xf32>
    %15 = tpu.iota {dimensions = array<i32: 1>} : vector<2x128xi32>
    %c0_16 = arith.constant 0 : index
    %c0_17 = arith.constant 0 : index
    %c0_18 = arith.constant 0 : index
    %16 = vector.load %arg2[%c0_16, %c0_17, %c0_18] : memref<3x2x32xf32, #tpu.memory_space<vmem>>, vector<1x2x32xf32>
    %17 = vector.shape_cast %16 : vector<1x2x32xf32> to vector<2x32xf32>
    %c1_19 = arith.constant 1 : index
    %c0_20 = arith.constant 0 : index
    %c0_21 = arith.constant 0 : index
    %18 = vector.load %arg2[%c1_19, %c0_20, %c0_21] : memref<3x2x32xf32, #tpu.memory_space<vmem>>, vector<1x2x32xf32>
    %19 = vector.shape_cast %18 : vector<1x2x32xf32> to vector<2x32xf32>
    %c2_22 = arith.constant 2 : index
    %c0_23 = arith.constant 0 : index
    %c0_24 = arith.constant 0 : index
    %20 = vector.load %arg2[%c2_22, %c0_23, %c0_24] : memref<3x2x32xf32, #tpu.memory_space<vmem>>, vector<1x2x32xf32>
    %21 = vector.shape_cast %20 : vector<1x2x32xf32> to vector<2x32xf32>
    %c0_25 = arith.constant 0 : index
    %c0_26 = arith.constant 0 : index
    %c0_27 = arith.constant 0 : index
    %22 = vector.load %arg3[%c0_25, %c0_26, %c0_27] : memref<3x2x32xf32, #tpu.memory_space<vmem>>, vector<1x2x32xf32>
    %23 = vector.shape_cast %22 : vector<1x2x32xf32> to vector<2x32xf32>
    %c1_28 = arith.constant 1 : index
    %c0_29 = arith.constant 0 : index
    %c0_30 = arith.constant 0 : index
    %24 = vector.load %arg3[%c1_28, %c0_29, %c0_30] : memref<3x2x32xf32, #tpu.memory_space<vmem>>, vector<1x2x32xf32>
    %25 = vector.shape_cast %24 : vector<1x2x32xf32> to vector<2x32xf32>
    %c2_31 = arith.constant 2 : index
    %c0_32 = arith.constant 0 : index
    %c0_33 = arith.constant 0 : index
    %26 = vector.load %arg3[%c2_31, %c0_32, %c0_33] : memref<3x2x32xf32, #tpu.memory_space<vmem>>, vector<1x2x32xf32>
    %27 = vector.shape_cast %26 : vector<1x2x32xf32> to vector<2x32xf32>
    %c0_i32 = arith.constant 0 : i32
    %28 = vector.broadcast %c0_i32 : i32 to vector<2x1xi32>
    %c0_34 = arith.constant 0 : index
    %29 = memref.load %arg0[%c0_34] : memref<8xi32, #tpu.memory_space<smem>>
    %c0_i32_35 = arith.constant 0 : i32
    %30 = arith.cmpi sgt, %29, %c0_i32_35 : i32
    %c0_36 = arith.constant 0 : index
    %c0_37 = arith.constant 0 : index
    %c0_38 = arith.constant 0 : index
    %31 = vector.load %arg1[%c0_36, %c0_37, %c0_38] : memref<8x2x128xf32, #tpu.memory_space<vmem>>, vector<1x2x128xf32>
    %32 = vector.shape_cast %31 : vector<1x2x128xf32> to vector<2x128xf32>
    %33 = tpu.reduce_index %32 {axis = 1 : i32, kind = #tpu.reduction_kind<arg_max>} : vector<2x128xf32> -> vector<2xi32>
    %34 = vector.shape_cast %33 : vector<2xi32> to vector<2x1xi32>
    %35 = arith.select %30, %34, %28 : vector<2x1xi32>
    %36 = vector.broadcast %35 : vector<2x1xi32> to vector<2x128xi32>
    %37 = arith.cmpi eq, %36, %15 : vector<2x128xi32>
    %38 = arith.extui %37 : vector<2x128xi1> to vector<2x128xi32>
    %39 = arith.sitofp %38 : vector<2x128xi32> to vector<2x128xf32>
    %cst = arith.constant dense<0.000000e+00> : vector<2x32xf32>
    %40 = tpu.matmul %39, %0, %cst {dimension_numbers = #tpu.dot_dimension_numbers<[1], [0], [0], [1], [0, 0, 1, 1], [], []>} : vector<2x128xf32>, vector<128x32xf32>, vector<2x32xf32> -> vector<2x32xf32>
    %41 = tpu.concatenate %17, %19, %21 in 1 : vector<2x32xf32>, vector<2x32xf32>, vector<2x32xf32> -> vector<2x96xf32>
    %cst_39 = arith.constant dense<0.000000e+00> : vector<2x384xf32>
    %42 = tpu.matmul %41, %7, %cst_39 {dimension_numbers = #tpu.dot_dimension_numbers<[1], [0], [0], [1], [0, 0, 1, 1], [], []>} : vector<2x96xf32>, vector<96x384xf32>, vector<2x384xf32> -> vector<2x384xf32>
    %43 = arith.addf %42, %10 : vector<2x384xf32>
    %cst_40 = arith.constant dense<0.000000e+00> : vector<2x128xf32>
    %44 = tpu.matmul %40, %2, %cst_40 {dimension_numbers = #tpu.dot_dimension_numbers<[1], [0], [0], [1], [0, 0, 1, 1], [], []>} : vector<2x32xf32>, vector<32x128xf32>, vector<2x128xf32> -> vector<2x128xf32>
    %45 = vector.extract_strided_slice %43 {offsets = [0, 0], sizes = [2, 128], strides = [1, 1]} : vector<2x384xf32> to vector<2x128xf32>
    %46 = arith.addf %44, %45 : vector<2x128xf32>
    %47 = vector.extract_strided_slice %46 {offsets = [0, 0], sizes = [2, 96], strides = [1, 1]} : vector<2x128xf32> to vector<2x96xf32>
    %48 = arith.negf %47 : vector<2x96xf32>
    %49 = math.exp %48 : vector<2x96xf32>
    %cst_41 = arith.constant 1.000000e+00 : f32
    %50 = vector.broadcast %cst_41 : f32 to vector<2x96xf32>
    %51 = arith.addf %50, %49 : vector<2x96xf32>
    %52 = arith.divf %50, %51 : vector<2x96xf32>
    %53 = vector.extract_strided_slice %46 {offsets = [0, 96], sizes = [2, 32], strides = [1, 1]} : vector<2x128xf32> to vector<2x32xf32>
    %54 = math.tanh %53 : vector<2x32xf32>
    %55 = vector.extract_strided_slice %52 {offsets = [0, 0], sizes = [2, 32], strides = [1, 1]} : vector<2x96xf32> to vector<2x32xf32>
    %56 = vector.extract_strided_slice %52 {offsets = [0, 32], sizes = [2, 32], strides = [1, 1]} : vector<2x96xf32> to vector<2x32xf32>
    %57 = vector.extract_strided_slice %52 {offsets = [0, 64], sizes = [2, 32], strides = [1, 1]} : vector<2x96xf32> to vector<2x32xf32>
    %58 = arith.mulf %56, %23 : vector<2x32xf32>
    %59 = arith.mulf %55, %54 : vector<2x32xf32>
    %60 = arith.addf %58, %59 : vector<2x32xf32>
    %61 = math.tanh %60 : vector<2x32xf32>
    %62 = arith.mulf %57, %61 : vector<2x32xf32>
    %cst_42 = arith.constant dense<0.000000e+00> : vector<2x128xf32>
    %63 = tpu.matmul %62, %4, %cst_42 {dimension_numbers = #tpu.dot_dimension_numbers<[1], [0], [0], [1], [0, 0, 1, 1], [], []>} : vector<2x32xf32>, vector<32x128xf32>, vector<2x128xf32> -> vector<2x128xf32>
    %64 = vector.extract_strided_slice %43 {offsets = [0, 128], sizes = [2, 128], strides = [1, 1]} : vector<2x384xf32> to vector<2x128xf32>
    %65 = arith.addf %63, %64 : vector<2x128xf32>
    %66 = vector.extract_strided_slice %65 {offsets = [0, 0], sizes = [2, 96], strides = [1, 1]} : vector<2x128xf32> to vector<2x96xf32>
    %67 = arith.negf %66 : vector<2x96xf32>
    %68 = math.exp %67 : vector<2x96xf32>
    %cst_43 = arith.constant 1.000000e+00 : f32
    %69 = vector.broadcast %cst_43 : f32 to vector<2x96xf32>
    %70 = arith.addf %69, %68 : vector<2x96xf32>
    %71 = arith.divf %69, %70 : vector<2x96xf32>
    %72 = vector.extract_strided_slice %65 {offsets = [0, 96], sizes = [2, 32], strides = [1, 1]} : vector<2x128xf32> to vector<2x32xf32>
    %73 = math.tanh %72 : vector<2x32xf32>
    %74 = vector.extract_strided_slice %71 {offsets = [0, 0], sizes = [2, 32], strides = [1, 1]} : vector<2x96xf32> to vector<2x32xf32>
    %75 = vector.extract_strided_slice %71 {offsets = [0, 32], sizes = [2, 32], strides = [1, 1]} : vector<2x96xf32> to vector<2x32xf32>
    %76 = vector.extract_strided_slice %71 {offsets = [0, 64], sizes = [2, 32], strides = [1, 1]} : vector<2x96xf32> to vector<2x32xf32>
    %77 = arith.mulf %75, %25 : vector<2x32xf32>
    %78 = arith.mulf %74, %73 : vector<2x32xf32>
    %79 = arith.addf %77, %78 : vector<2x32xf32>
    %80 = math.tanh %79 : vector<2x32xf32>
    %81 = arith.mulf %76, %80 : vector<2x32xf32>
    %cst_44 = arith.constant dense<0.000000e+00> : vector<2x128xf32>
    %82 = tpu.matmul %81, %6, %cst_44 {dimension_numbers = #tpu.dot_dimension_numbers<[1], [0], [0], [1], [0, 0, 1, 1], [], []>} : vector<2x32xf32>, vector<32x128xf32>, vector<2x128xf32> -> vector<2x128xf32>
    %83 = vector.extract_strided_slice %43 {offsets = [0, 256], sizes = [2, 128], strides = [1, 1]} : vector<2x384xf32> to vector<2x128xf32>
    %84 = arith.addf %82, %83 : vector<2x128xf32>
    %85 = vector.extract_strided_slice %84 {offsets = [0, 0], sizes = [2, 96], strides = [1, 1]} : vector<2x128xf32> to vector<2x96xf32>
    %86 = arith.negf %85 : vector<2x96xf32>
    %87 = math.exp %86 : vector<2x96xf32>
    %cst_45 = arith.constant 1.000000e+00 : f32
    %88 = vector.broadcast %cst_45 : f32 to vector<2x96xf32>
    %89 = arith.addf %88, %87 : vector<2x96xf32>
    %90 = arith.divf %88, %89 : vector<2x96xf32>
    %91 = vector.extract_strided_slice %84 {offsets = [0, 96], sizes = [2, 32], strides = [1, 1]} : vector<2x128xf32> to vector<2x32xf32>
    %92 = math.tanh %91 : vector<2x32xf32>
    %93 = vector.extract_strided_slice %90 {offsets = [0, 0], sizes = [2, 32], strides = [1, 1]} : vector<2x96xf32> to vector<2x32xf32>
    %94 = vector.extract_strided_slice %90 {offsets = [0, 32], sizes = [2, 32], strides = [1, 1]} : vector<2x96xf32> to vector<2x32xf32>
    %95 = vector.extract_strided_slice %90 {offsets = [0, 64], sizes = [2, 32], strides = [1, 1]} : vector<2x96xf32> to vector<2x32xf32>
    %96 = arith.mulf %94, %27 : vector<2x32xf32>
    %97 = arith.mulf %93, %92 : vector<2x32xf32>
    %98 = arith.addf %96, %97 : vector<2x32xf32>
    %99 = math.tanh %98 : vector<2x32xf32>
    %100 = arith.mulf %95, %99 : vector<2x32xf32>
    %cst_46 = arith.constant dense<0.000000e+00> : vector<2x128xf32>
    %101 = tpu.matmul %100, %11, %cst_46 {dimension_numbers = #tpu.dot_dimension_numbers<[1], [0], [0], [1], [0, 0, 1, 1], [], []>} : vector<2x32xf32>, vector<32x128xf32>, vector<2x128xf32> -> vector<2x128xf32>
    %102 = arith.addf %101, %14 : vector<2x128xf32>
    %c0_47 = arith.constant 0 : index
    %c0_48 = arith.constant 0 : index
    %c0_49 = arith.constant 0 : index
    %103 = vector.load %arg10[%c0_47, %c0_48, %c0_49] : memref<8x2x128xf32, #tpu.memory_space<vmem>>, vector<1x2x128xf32>
    %104 = vector.shape_cast %103 : vector<1x2x128xf32> to vector<2x128xf32>
    %105 = vector.shape_cast %102 : vector<2x128xf32> to vector<1x2x128xf32>
    tpu.vector_store %arg10[%c0_47, %c0_48, %c0_49], %105 {strides = array<i32>} : memref<8x2x128xf32, #tpu.memory_space<vmem>>, vector<1x2x128xf32>,
    %106 = tpu.reduce_index %102 {axis = 1 : i32, kind = #tpu.reduction_kind<arg_max>} : vector<2x128xf32> -> vector<2xi32>
    %107 = vector.shape_cast %106 : vector<2xi32> to vector<2x1xi32>
    %c1_50 = arith.constant 1 : index
    %108 = memref.load %arg0[%c1_50] : memref<8xi32, #tpu.memory_space<smem>>
    %c0_i32_51 = arith.constant 0 : i32
    %109 = arith.cmpi sgt, %108, %c0_i32_51 : i32
    %c1_52 = arith.constant 1 : index
    %c0_53 = arith.constant 0 : index
    %c0_54 = arith.constant 0 : index
    %110 = vector.load %arg1[%c1_52, %c0_53, %c0_54] : memref<8x2x128xf32, #tpu.memory_space<vmem>>, vector<1x2x128xf32>
    %111 = vector.shape_cast %110 : vector<1x2x128xf32> to vector<2x128xf32>
    %112 = tpu.reduce_index %111 {axis = 1 : i32, kind = #tpu.reduction_kind<arg_max>} : vector<2x128xf32> -> vector<2xi32>
    %113 = vector.shape_cast %112 : vector<2xi32> to vector<2x1xi32>
    %114 = arith.select %109, %113, %107 : vector<2x1xi32>
    %115 = vector.broadcast %114 : vector<2x1xi32> to vector<2x128xi32>
    %116 = arith.cmpi eq, %115, %15 : vector<2x128xi32>
    %117 = arith.extui %116 : vector<2x128xi1> to vector<2x128xi32>
    %118 = arith.sitofp %117 : vector<2x128xi32> to vector<2x128xf32>
    %cst_55 = arith.constant dense<0.000000e+00> : vector<2x32xf32>
    %119 = tpu.matmul %118, %0, %cst_55 {dimension_numbers = #tpu.dot_dimension_numbers<[1], [0], [0], [1], [0, 0, 1, 1], [], []>} : vector<2x128xf32>, vector<128x32xf32>, vector<2x32xf32> -> vector<2x32xf32>
    %120 = tpu.concatenate %62, %81, %100 in 1 : vector<2x32xf32>, vector<2x32xf32>, vector<2x32xf32> -> vector<2x96xf32>
    %cst_56 = arith.constant dense<0.000000e+00> : vector<2x384xf32>
    %121 = tpu.matmul %120, %7, %cst_56 {dimension_numbers = #tpu.dot_dimension_numbers<[1], [0], [0], [1], [0, 0, 1, 1], [], []>} : vector<2x96xf32>, vector<96x384xf32>, vector<2x384xf32> -> vector<2x384xf32>
    %122 = arith.addf %121, %10 : vector<2x384xf32>
    %cst_57 = arith.constant dense<0.000000e+00> : vector<2x128xf32>
    %123 = tpu.matmul %119, %2, %cst_57 {dimension_numbers = #tpu.dot_dimension_numbers<[1], [0], [0], [1], [0, 0, 1, 1], [], []>} : vector<2x32xf32>, vector<32x128xf32>, vector<2x128xf32> -> vector<2x128xf32>
    %124 = vector.extract_strided_slice %122 {offsets = [0, 0], sizes = [2, 128], strides = [1, 1]} : vector<2x384xf32> to vector<2x128xf32>
    %125 = arith.addf %123, %124 : vector<2x128xf32>
    %126 = vector.extract_strided_slice %125 {offsets = [0, 0], sizes = [2, 96], strides = [1, 1]} : vector<2x128xf32> to vector<2x96xf32>
    %127 = arith.negf %126 : vector<2x96xf32>
    %128 = math.exp %127 : vector<2x96xf32>
    %cst_58 = arith.constant 1.000000e+00 : f32
    %129 = vector.broadcast %cst_58 : f32 to vector<2x96xf32>
    %130 = arith.addf %129, %128 : vector<2x96xf32>
    %131 = arith.divf %129, %130 : vector<2x96xf32>
    %132 = vector.extract_strided_slice %125 {offsets = [0, 96], sizes = [2, 32], strides = [1, 1]} : vector<2x128xf32> to vector<2x32xf32>
    %133 = math.tanh %132 : vector<2x32xf32>
    %134 = vector.extract_strided_slice %131 {offsets = [0, 0], sizes = [2, 32], strides = [1, 1]} : vector<2x96xf32> to vector<2x32xf32>
    %135 = vector.extract_strided_slice %131 {offsets = [0, 32], sizes = [2, 32], strides = [1, 1]} : vector<2x96xf32> to vector<2x32xf32>
    %136 = vector.extract_strided_slice %131 {offsets = [0, 64], sizes = [2, 32], strides = [1, 1]} : vector<2x96xf32> to vector<2x32xf32>
    %137 = arith.mulf %135, %60 : vector<2x32xf32>
    %138 = arith.mulf %134, %133 : vector<2x32xf32>
    %139 = arith.addf %137, %138 : vector<2x32xf32>
    %140 = math.tanh %139 : vector<2x32xf32>
    %141 = arith.mulf %136, %140 : vector<2x32xf32>
    %cst_59 = arith.constant dense<0.000000e+00> : vector<2x128xf32>
    %142 = tpu.matmul %141, %4, %cst_59 {dimension_numbers = #tpu.dot_dimension_numbers<[1], [0], [0], [1], [0, 0, 1, 1], [], []>} : vector<2x32xf32>, vector<32x128xf32>, vector<2x128xf32> -> vector<2x128xf32>
    %143 = vector.extract_strided_slice %122 {offsets = [0, 128], sizes = [2, 128], strides = [1, 1]} : vector<2x384xf32> to vector<2x128xf32>
    %144 = arith.addf %142, %143 : vector<2x128xf32>
    %145 = vector.extract_strided_slice %144 {offsets = [0, 0], sizes = [2, 96], strides = [1, 1]} : vector<2x128xf32> to vector<2x96xf32>
    %146 = arith.negf %145 : vector<2x96xf32>
    %147 = math.exp %146 : vector<2x96xf32>
    %cst_60 = arith.constant 1.000000e+00 : f32
    %148 = vector.broadcast %cst_60 : f32 to vector<2x96xf32>
    %149 = arith.addf %148, %147 : vector<2x96xf32>
    %150 = arith.divf %148, %149 : vector<2x96xf32>
    %151 = vector.extract_strided_slice %144 {offsets = [0, 96], sizes = [2, 32], strides = [1, 1]} : vector<2x128xf32> to vector<2x32xf32>
    %152 = math.tanh %151 : vector<2x32xf32>
    %153 = vector.extract_strided_slice %150 {offsets = [0, 0], sizes = [2, 32], strides = [1, 1]} : vector<2x96xf32> to vector<2x32xf32>
    %154 = vector.extract_strided_slice %150 {offsets = [0, 32], sizes = [2, 32], strides = [1, 1]} : vector<2x96xf32> to vector<2x32xf32>
    %155 = vector.extract_strided_slice %150 {offsets = [0, 64], sizes = [2, 32], strides = [1, 1]} : vector<2x96xf32> to vector<2x32xf32>
    %156 = arith.mulf %154, %79 : vector<2x32xf32>
    %157 = arith.mulf %153, %152 : vector<2x32xf32>
    %158 = arith.addf %156, %157 : vector<2x32xf32>
    %159 = math.tanh %158 : vector<2x32xf32>
    %160 = arith.mulf %155, %159 : vector<2x32xf32>
    %cst_61 = arith.constant dense<0.000000e+00> : vector<2x128xf32>
    %161 = tpu.matmul %160, %6, %cst_61 {dimension_numbers = #tpu.dot_dimension_numbers<[1], [0], [0], [1], [0, 0, 1, 1], [], []>} : vector<2x32xf32>, vector<32x128xf32>, vector<2x128xf32> -> vector<2x128xf32>
    %162 = vector.extract_strided_slice %122 {offsets = [0, 256], sizes = [2, 128], strides = [1, 1]} : vector<2x384xf32> to vector<2x128xf32>
    %163 = arith.addf %161, %162 : vector<2x128xf32>
    %164 = vector.extract_strided_slice %163 {offsets = [0, 0], sizes = [2, 96], strides = [1, 1]} : vector<2x128xf32> to vector<2x96xf32>
    %165 = arith.negf %164 : vector<2x96xf32>
    %166 = math.exp %165 : vector<2x96xf32>
    %cst_62 = arith.constant 1.000000e+00 : f32
    %167 = vector.broadcast %cst_62 : f32 to vector<2x96xf32>
    %168 = arith.addf %167, %166 : vector<2x96xf32>
    %169 = arith.divf %167, %168 : vector<2x96xf32>
    %170 = vector.extract_strided_slice %163 {offsets = [0, 96], sizes = [2, 32], strides = [1, 1]} : vector<2x128xf32> to vector<2x32xf32>
    %171 = math.tanh %170 : vector<2x32xf32>
    %172 = vector.extract_strided_slice %169 {offsets = [0, 0], sizes = [2, 32], strides = [1, 1]} : vector<2x96xf32> to vector<2x32xf32>
    %173 = vector.extract_strided_slice %169 {offsets = [0, 32], sizes = [2, 32], strides = [1, 1]} : vector<2x96xf32> to vector<2x32xf32>
    %174 = vector.extract_strided_slice %169 {offsets = [0, 64], sizes = [2, 32], strides = [1, 1]} : vector<2x96xf32> to vector<2x32xf32>
    %175 = arith.mulf %173, %98 : vector<2x32xf32>
    %176 = arith.mulf %172, %171 : vector<2x32xf32>
    %177 = arith.addf %175, %176 : vector<2x32xf32>
    %178 = math.tanh %177 : vector<2x32xf32>
    %179 = arith.mulf %174, %178 : vector<2x32xf32>
    %cst_63 = arith.constant dense<0.000000e+00> : vector<2x128xf32>
    %180 = tpu.matmul %179, %11, %cst_63 {dimension_numbers = #tpu.dot_dimension_numbers<[1], [0], [0], [1], [0, 0, 1, 1], [], []>} : vector<2x32xf32>, vector<32x128xf32>, vector<2x128xf32> -> vector<2x128xf32>
    %181 = arith.addf %180, %14 : vector<2x128xf32>
    %c1_64 = arith.constant 1 : index
    %c0_65 = arith.constant 0 : index
    %c0_66 = arith.constant 0 : index
    %182 = vector.load %arg10[%c1_64, %c0_65, %c0_66] : memref<8x2x128xf32, #tpu.memory_space<vmem>>, vector<1x2x128xf32>
    %183 = vector.shape_cast %182 : vector<1x2x128xf32> to vector<2x128xf32>
    %184 = vector.shape_cast %181 : vector<2x128xf32> to vector<1x2x128xf32>
    tpu.vector_store %arg10[%c1_64, %c0_65, %c0_66], %184 {strides = array<i32>} : memref<8x2x128xf32, #tpu.memory_space<vmem>>, vector<1x2x128xf32>,
    %185 = tpu.reduce_index %181 {axis = 1 : i32, kind = #tpu.reduction_kind<arg_max>} : vector<2x128xf32> -> vector<2xi32>
    %186 = vector.shape_cast %185 : vector<2xi32> to vector<2x1xi32>
    %c2_67 = arith.constant 2 : index
    %187 = memref.load %arg0[%c2_67] : memref<8xi32, #tpu.memory_space<smem>>
    %c0_i32_68 = arith.constant 0 : i32
    %188 = arith.cmpi sgt, %187, %c0_i32_68 : i32
    %c2_69 = arith.constant 2 : index
    %c0_70 = arith.constant 0 : index
    %c0_71 = arith.constant 0 : index
    %189 = vector.load %arg1[%c2_69, %c0_70, %c0_71] : memref<8x2x128xf32, #tpu.memory_space<vmem>>, vector<1x2x128xf32>
    %190 = vector.shape_cast %189 : vector<1x2x128xf32> to vector<2x128xf32>
    %191 = tpu.reduce_index %190 {axis = 1 : i32, kind = #tpu.reduction_kind<arg_max>} : vector<2x128xf32> -> vector<2xi32>
    %192 = vector.shape_cast %191 : vector<2xi32> to vector<2x1xi32>
    %193 = arith.select %188, %192, %186 : vector<2x1xi32>
    %194 = vector.broadcast %193 : vector<2x1xi32> to vector<2x128xi32>
    %195 = arith.cmpi eq, %194, %15 : vector<2x128xi32>
    %196 = arith.extui %195 : vector<2x128xi1> to vector<2x128xi32>
    %197 = arith.sitofp %196 : vector<2x128xi32> to vector<2x128xf32>
    %cst_72 = arith.constant dense<0.000000e+00> : vector<2x32xf32>
    %198 = tpu.matmul %197, %0, %cst_72 {dimension_numbers = #tpu.dot_dimension_numbers<[1], [0], [0], [1], [0, 0, 1, 1], [], []>} : vector<2x128xf32>, vector<128x32xf32>, vector<2x32xf32> -> vector<2x32xf32>
    %199 = tpu.concatenate %141, %160, %179 in 1 : vector<2x32xf32>, vector<2x32xf32>, vector<2x32xf32> -> vector<2x96xf32>
    %cst_73 = arith.constant dense<0.000000e+00> : vector<2x384xf32>
    %200 = tpu.matmul %199, %7, %cst_73 {dimension_numbers = #tpu.dot_dimension_numbers<[1], [0], [0], [1], [0, 0, 1, 1], [], []>} : vector<2x96xf32>, vector<96x384xf32>, vector<2x384xf32> -> vector<2x384xf32>
    %201 = arith.addf %200, %10 : vector<2x384xf32>
    %cst_74 = arith.constant dense<0.000000e+00> : vector<2x128xf32>
    %202 = tpu.matmul %198, %2, %cst_74 {dimension_numbers = #tpu.dot_dimension_numbers<[1], [0], [0], [1], [0, 0, 1, 1], [], []>} : vector<2x32xf32>, vector<32x128xf32>, vector<2x128xf32> -> vector<2x128xf32>
    %203 = vector.extract_strided_slice %201 {offsets = [0, 0], sizes = [2, 128], strides = [1, 1]} : vector<2x384xf32> to vector<2x128xf32>
    %204 = arith.addf %202, %203 : vector<2x128xf32>
    %205 = vector.extract_strided_slice %204 {offsets = [0, 0], sizes = [2, 96], strides = [1, 1]} : vector<2x128xf32> to vector<2x96xf32>
    %206 = arith.negf %205 : vector<2x96xf32>
    %207 = math.exp %206 : vector<2x96xf32>
    %cst_75 = arith.constant 1.000000e+00 : f32
    %208 = vector.broadcast %cst_75 : f32 to vector<2x96xf32>
    %209 = arith.addf %208, %207 : vector<2x96xf32>
    %210 = arith.divf %208, %209 : vector<2x96xf32>
    %211 = vector.extract_strided_slice %204 {offsets = [0, 96], sizes = [2, 32], strides = [1, 1]} : vector<2x128xf32> to vector<2x32xf32>
    %212 = math.tanh %211 : vector<2x32xf32>
    %213 = vector.extract_strided_slice %210 {offsets = [0, 0], sizes = [2, 32], strides = [1, 1]} : vector<2x96xf32> to vector<2x32xf32>
    %214 = vector.extract_strided_slice %210 {offsets = [0, 32], sizes = [2, 32], strides = [1, 1]} : vector<2x96xf32> to vector<2x32xf32>
    %215 = vector.extract_strided_slice %210 {offsets = [0, 64], sizes = [2, 32], strides = [1, 1]} : vector<2x96xf32> to vector<2x32xf32>
    %216 = arith.mulf %214, %139 : vector<2x32xf32>
    %217 = arith.mulf %213, %212 : vector<2x32xf32>
    %218 = arith.addf %216, %217 : vector<2x32xf32>
    %219 = math.tanh %218 : vector<2x32xf32>
    %220 = arith.mulf %215, %219 : vector<2x32xf32>
    %cst_76 = arith.constant dense<0.000000e+00> : vector<2x128xf32>
    %221 = tpu.matmul %220, %4, %cst_76 {dimension_numbers = #tpu.dot_dimension_numbers<[1], [0], [0], [1], [0, 0, 1, 1], [], []>} : vector<2x32xf32>, vector<32x128xf32>, vector<2x128xf32> -> vector<2x128xf32>
    %222 = vector.extract_strided_slice %201 {offsets = [0, 128], sizes = [2, 128], strides = [1, 1]} : vector<2x384xf32> to vector<2x128xf32>
    %223 = arith.addf %221, %222 : vector<2x128xf32>
    %224 = vector.extract_strided_slice %223 {offsets = [0, 0], sizes = [2, 96], strides = [1, 1]} : vector<2x128xf32> to vector<2x96xf32>
    %225 = arith.negf %224 : vector<2x96xf32>
    %226 = math.exp %225 : vector<2x96xf32>
    %cst_77 = arith.constant 1.000000e+00 : f32
    %227 = vector.broadcast %cst_77 : f32 to vector<2x96xf32>
    %228 = arith.addf %227, %226 : vector<2x96xf32>
    %229 = arith.divf %227, %228 : vector<2x96xf32>
    %230 = vector.extract_strided_slice %223 {offsets = [0, 96], sizes = [2, 32], strides = [1, 1]} : vector<2x128xf32> to vector<2x32xf32>
    %231 = math.tanh %230 : vector<2x32xf32>
    %232 = vector.extract_strided_slice %229 {offsets = [0, 0], sizes = [2, 32], strides = [1, 1]} : vector<2x96xf32> to vector<2x32xf32>
    %233 = vector.extract_strided_slice %229 {offsets = [0, 32], sizes = [2, 32], strides = [1, 1]} : vector<2x96xf32> to vector<2x32xf32>
    %234 = vector.extract_strided_slice %229 {offsets = [0, 64], sizes = [2, 32], strides = [1, 1]} : vector<2x96xf32> to vector<2x32xf32>
    %235 = arith.mulf %233, %158 : vector<2x32xf32>
    %236 = arith.mulf %232, %231 : vector<2x32xf32>
    %237 = arith.addf %235, %236 : vector<2x32xf32>
    %238 = math.tanh %237 : vector<2x32xf32>
    %239 = arith.mulf %234, %238 : vector<2x32xf32>
    %cst_78 = arith.constant dense<0.000000e+00> : vector<2x128xf32>
    %240 = tpu.matmul %239, %6, %cst_78 {dimension_numbers = #tpu.dot_dimension_numbers<[1], [0], [0], [1], [0, 0, 1, 1], [], []>} : vector<2x32xf32>, vector<32x128xf32>, vector<2x128xf32> -> vector<2x128xf32>
    %241 = vector.extract_strided_slice %201 {offsets = [0, 256], sizes = [2, 128], strides = [1, 1]} : vector<2x384xf32> to vector<2x128xf32>
    %242 = arith.addf %240, %241 : vector<2x128xf32>
    %243 = vector.extract_strided_slice %242 {offsets = [0, 0], sizes = [2, 96], strides = [1, 1]} : vector<2x128xf32> to vector<2x96xf32>
    %244 = arith.negf %243 : vector<2x96xf32>
    %245 = math.exp %244 : vector<2x96xf32>
    %cst_79 = arith.constant 1.000000e+00 : f32
    %246 = vector.broadcast %cst_79 : f32 to vector<2x96xf32>
    %247 = arith.addf %246, %245 : vector<2x96xf32>
    %248 = arith.divf %246, %247 : vector<2x96xf32>
    %249 = vector.extract_strided_slice %242 {offsets = [0, 96], sizes = [2, 32], strides = [1, 1]} : vector<2x128xf32> to vector<2x32xf32>
    %250 = math.tanh %249 : vector<2x32xf32>
    %251 = vector.extract_strided_slice %248 {offsets = [0, 0], sizes = [2, 32], strides = [1, 1]} : vector<2x96xf32> to vector<2x32xf32>
    %252 = vector.extract_strided_slice %248 {offsets = [0, 32], sizes = [2, 32], strides = [1, 1]} : vector<2x96xf32> to vector<2x32xf32>
    %253 = vector.extract_strided_slice %248 {offsets = [0, 64], sizes = [2, 32], strides = [1, 1]} : vector<2x96xf32> to vector<2x32xf32>
    %254 = arith.mulf %252, %177 : vector<2x32xf32>
    %255 = arith.mulf %251, %250 : vector<2x32xf32>
    %256 = arith.addf %254, %255 : vector<2x32xf32>
    %257 = math.tanh %256 : vector<2x32xf32>
    %258 = arith.mulf %253, %257 : vector<2x32xf32>
    %cst_80 = arith.constant dense<0.000000e+00> : vector<2x128xf32>
    %259 = tpu.matmul %258, %11, %cst_80 {dimension_numbers = #tpu.dot_dimension_numbers<[1], [0], [0], [1], [0, 0, 1, 1], [], []>} : vector<2x32xf32>, vector<32x128xf32>, vector<2x128xf32> -> vector<2x128xf32>
    %260 = arith.addf %259, %14 : vector<2x128xf32>
    %c2_81 = arith.constant 2 : index
    %c0_82 = arith.constant 0 : index
    %c0_83 = arith.constant 0 : index
    %261 = vector.load %arg10[%c2_81, %c0_82, %c0_83] : memref<8x2x128xf32, #tpu.memory_space<vmem>>, vector<1x2x128xf32>
    %262 = vector.shape_cast %261 : vector<1x2x128xf32> to vector<2x128xf32>
    %263 = vector.shape_cast %260 : vector<2x128xf32> to vector<1x2x128xf32>
    tpu.vector_store %arg10[%c2_81, %c0_82, %c0_83], %263 {strides = array<i32>} : memref<8x2x128xf32, #tpu.memory_space<vmem>>, vector<1x2x128xf32>,
    %264 = tpu.reduce_index %260 {axis = 1 : i32, kind = #tpu.reduction_kind<arg_max>} : vector<2x128xf32> -> vector<2xi32>
    %265 = vector.shape_cast %264 : vector<2xi32> to vector<2x1xi32>
    %c3 = arith.constant 3 : index
    %266 = memref.load %arg0[%c3] : memref<8xi32, #tpu.memory_space<smem>>
    %c0_i32_84 = arith.constant 0 : i32
    %267 = arith.cmpi sgt, %266, %c0_i32_84 : i32
    %c3_85 = arith.constant 3 : index
    %c0_86 = arith.constant 0 : index
    %c0_87 = arith.constant 0 : index
    %268 = vector.load %arg1[%c3_85, %c0_86, %c0_87] : memref<8x2x128xf32, #tpu.memory_space<vmem>>, vector<1x2x128xf32>
    %269 = vector.shape_cast %268 : vector<1x2x128xf32> to vector<2x128xf32>
    %270 = tpu.reduce_index %269 {axis = 1 : i32, kind = #tpu.reduction_kind<arg_max>} : vector<2x128xf32> -> vector<2xi32>
    %271 = vector.shape_cast %270 : vector<2xi32> to vector<2x1xi32>
    %272 = arith.select %267, %271, %265 : vector<2x1xi32>
    %273 = vector.broadcast %272 : vector<2x1xi32> to vector<2x128xi32>
    %274 = arith.cmpi eq, %273, %15 : vector<2x128xi32>
    %275 = arith.extui %274 : vector<2x128xi1> to vector<2x128xi32>
    %276 = arith.sitofp %275 : vector<2x128xi32> to vector<2x128xf32>
    %cst_88 = arith.constant dense<0.000000e+00> : vector<2x32xf32>
    %277 = tpu.matmul %276, %0, %cst_88 {dimension_numbers = #tpu.dot_dimension_numbers<[1], [0], [0], [1], [0, 0, 1, 1], [], []>} : vector<2x128xf32>, vector<128x32xf32>, vector<2x32xf32> -> vector<2x32xf32>
    %278 = tpu.concatenate %220, %239, %258 in 1 : vector<2x32xf32>, vector<2x32xf32>, vector<2x32xf32> -> vector<2x96xf32>
    %cst_89 = arith.constant dense<0.000000e+00> : vector<2x384xf32>
    %279 = tpu.matmul %278, %7, %cst_89 {dimension_numbers = #tpu.dot_dimension_numbers<[1], [0], [0], [1], [0, 0, 1, 1], [], []>} : vector<2x96xf32>, vector<96x384xf32>, vector<2x384xf32> -> vector<2x384xf32>
    %280 = arith.addf %279, %10 : vector<2x384xf32>
    %cst_90 = arith.constant dense<0.000000e+00> : vector<2x128xf32>
    %281 = tpu.matmul %277, %2, %cst_90 {dimension_numbers = #tpu.dot_dimension_numbers<[1], [0], [0], [1], [0, 0, 1, 1], [], []>} : vector<2x32xf32>, vector<32x128xf32>, vector<2x128xf32> -> vector<2x128xf32>
    %282 = vector.extract_strided_slice %280 {offsets = [0, 0], sizes = [2, 128], strides = [1, 1]} : vector<2x384xf32> to vector<2x128xf32>
    %283 = arith.addf %281, %282 : vector<2x128xf32>
    %284 = vector.extract_strided_slice %283 {offsets = [0, 0], sizes = [2, 96], strides = [1, 1]} : vector<2x128xf32> to vector<2x96xf32>
    %285 = arith.negf %284 : vector<2x96xf32>
    %286 = math.exp %285 : vector<2x96xf32>
    %cst_91 = arith.constant 1.000000e+00 : f32
    %287 = vector.broadcast %cst_91 : f32 to vector<2x96xf32>
    %288 = arith.addf %287, %286 : vector<2x96xf32>
    %289 = arith.divf %287, %288 : vector<2x96xf32>
    %290 = vector.extract_strided_slice %283 {offsets = [0, 96], sizes = [2, 32], strides = [1, 1]} : vector<2x128xf32> to vector<2x32xf32>
    %291 = math.tanh %290 : vector<2x32xf32>
    %292 = vector.extract_strided_slice %289 {offsets = [0, 0], sizes = [2, 32], strides = [1, 1]} : vector<2x96xf32> to vector<2x32xf32>
    %293 = vector.extract_strided_slice %289 {offsets = [0, 32], sizes = [2, 32], strides = [1, 1]} : vector<2x96xf32> to vector<2x32xf32>
    %294 = vector.extract_strided_slice %289 {offsets = [0, 64], sizes = [2, 32], strides = [1, 1]} : vector<2x96xf32> to vector<2x32xf32>
    %295 = arith.mulf %293, %218 : vector<2x32xf32>
    %296 = arith.mulf %292, %291 : vector<2x32xf32>
    %297 = arith.addf %295, %296 : vector<2x32xf32>
    %298 = math.tanh %297 : vector<2x32xf32>
    %299 = arith.mulf %294, %298 : vector<2x32xf32>
    %cst_92 = arith.constant dense<0.000000e+00> : vector<2x128xf32>
    %300 = tpu.matmul %299, %4, %cst_92 {dimension_numbers = #tpu.dot_dimension_numbers<[1], [0], [0], [1], [0, 0, 1, 1], [], []>} : vector<2x32xf32>, vector<32x128xf32>, vector<2x128xf32> -> vector<2x128xf32>
    %301 = vector.extract_strided_slice %280 {offsets = [0, 128], sizes = [2, 128], strides = [1, 1]} : vector<2x384xf32> to vector<2x128xf32>
    %302 = arith.addf %300, %301 : vector<2x128xf32>
    %303 = vector.extract_strided_slice %302 {offsets = [0, 0], sizes = [2, 96], strides = [1, 1]} : vector<2x128xf32> to vector<2x96xf32>
    %304 = arith.negf %303 : vector<2x96xf32>
    %305 = math.exp %304 : vector<2x96xf32>
    %cst_93 = arith.constant 1.000000e+00 : f32
    %306 = vector.broadcast %cst_93 : f32 to vector<2x96xf32>
    %307 = arith.addf %306, %305 : vector<2x96xf32>
    %308 = arith.divf %306, %307 : vector<2x96xf32>
    %309 = vector.extract_strided_slice %302 {offsets = [0, 96], sizes = [2, 32], strides = [1, 1]} : vector<2x128xf32> to vector<2x32xf32>
    %310 = math.tanh %309 : vector<2x32xf32>
    %311 = vector.extract_strided_slice %308 {offsets = [0, 0], sizes = [2, 32], strides = [1, 1]} : vector<2x96xf32> to vector<2x32xf32>
    %312 = vector.extract_strided_slice %308 {offsets = [0, 32], sizes = [2, 32], strides = [1, 1]} : vector<2x96xf32> to vector<2x32xf32>
    %313 = vector.extract_strided_slice %308 {offsets = [0, 64], sizes = [2, 32], strides = [1, 1]} : vector<2x96xf32> to vector<2x32xf32>
    %314 = arith.mulf %312, %237 : vector<2x32xf32>
    %315 = arith.mulf %311, %310 : vector<2x32xf32>
    %316 = arith.addf %314, %315 : vector<2x32xf32>
    %317 = math.tanh %316 : vector<2x32xf32>
    %318 = arith.mulf %313, %317 : vector<2x32xf32>
    %cst_94 = arith.constant dense<0.000000e+00> : vector<2x128xf32>
    %319 = tpu.matmul %318, %6, %cst_94 {dimension_numbers = #tpu.dot_dimension_numbers<[1], [0], [0], [1], [0, 0, 1, 1], [], []>} : vector<2x32xf32>, vector<32x128xf32>, vector<2x128xf32> -> vector<2x128xf32>
    %320 = vector.extract_strided_slice %280 {offsets = [0, 256], sizes = [2, 128], strides = [1, 1]} : vector<2x384xf32> to vector<2x128xf32>
    %321 = arith.addf %319, %320 : vector<2x128xf32>
    %322 = vector.extract_strided_slice %321 {offsets = [0, 0], sizes = [2, 96], strides = [1, 1]} : vector<2x128xf32> to vector<2x96xf32>
    %323 = arith.negf %322 : vector<2x96xf32>
    %324 = math.exp %323 : vector<2x96xf32>
    %cst_95 = arith.constant 1.000000e+00 : f32
    %325 = vector.broadcast %cst_95 : f32 to vector<2x96xf32>
    %326 = arith.addf %325, %324 : vector<2x96xf32>
    %327 = arith.divf %325, %326 : vector<2x96xf32>
    %328 = vector.extract_strided_slice %321 {offsets = [0, 96], sizes = [2, 32], strides = [1, 1]} : vector<2x128xf32> to vector<2x32xf32>
    %329 = math.tanh %328 : vector<2x32xf32>
    %330 = vector.extract_strided_slice %327 {offsets = [0, 0], sizes = [2, 32], strides = [1, 1]} : vector<2x96xf32> to vector<2x32xf32>
    %331 = vector.extract_strided_slice %327 {offsets = [0, 32], sizes = [2, 32], strides = [1, 1]} : vector<2x96xf32> to vector<2x32xf32>
    %332 = vector.extract_strided_slice %327 {offsets = [0, 64], sizes = [2, 32], strides = [1, 1]} : vector<2x96xf32> to vector<2x32xf32>
    %333 = arith.mulf %331, %256 : vector<2x32xf32>
    %334 = arith.mulf %330, %329 : vector<2x32xf32>
    %335 = arith.addf %333, %334 : vector<2x32xf32>
    %336 = math.tanh %335 : vector<2x32xf32>
    %337 = arith.mulf %332, %336 : vector<2x32xf32>
    %cst_96 = arith.constant dense<0.000000e+00> : vector<2x128xf32>
    %338 = tpu.matmul %337, %11, %cst_96 {dimension_numbers = #tpu.dot_dimension_numbers<[1], [0], [0], [1], [0, 0, 1, 1], [], []>} : vector<2x32xf32>, vector<32x128xf32>, vector<2x128xf32> -> vector<2x128xf32>
    %339 = arith.addf %338, %14 : vector<2x128xf32>
    %c3_97 = arith.constant 3 : index
    %c0_98 = arith.constant 0 : index
    %c0_99 = arith.constant 0 : index
    %340 = vector.load %arg10[%c3_97, %c0_98, %c0_99] : memref<8x2x128xf32, #tpu.memory_space<vmem>>, vector<1x2x128xf32>
    %341 = vector.shape_cast %340 : vector<1x2x128xf32> to vector<2x128xf32>
    %342 = vector.shape_cast %339 : vector<2x128xf32> to vector<1x2x128xf32>
    tpu.vector_store %arg10[%c3_97, %c0_98, %c0_99], %342 {strides = array<i32>} : memref<8x2x128xf32, #tpu.memory_space<vmem>>, vector<1x2x128xf32>,
    %343 = tpu.reduce_index %339 {axis = 1 : i32, kind = #tpu.reduction_kind<arg_max>} : vector<2x128xf32> -> vector<2xi32>
    %344 = vector.shape_cast %343 : vector<2xi32> to vector<2x1xi32>
    %c4 = arith.constant 4 : index
    %345 = memref.load %arg0[%c4] : memref<8xi32, #tpu.memory_space<smem>>
    %c0_i32_100 = arith.constant 0 : i32
    %346 = arith.cmpi sgt, %345, %c0_i32_100 : i32
    %c4_101 = arith.constant 4 : index
    %c0_102 = arith.constant 0 : index
    %c0_103 = arith.constant 0 : index
    %347 = vector.load %arg1[%c4_101, %c0_102, %c0_103] : memref<8x2x128xf32, #tpu.memory_space<vmem>>, vector<1x2x128xf32>
    %348 = vector.shape_cast %347 : vector<1x2x128xf32> to vector<2x128xf32>
    %349 = tpu.reduce_index %348 {axis = 1 : i32, kind = #tpu.reduction_kind<arg_max>} : vector<2x128xf32> -> vector<2xi32>
    %350 = vector.shape_cast %349 : vector<2xi32> to vector<2x1xi32>
    %351 = arith.select %346, %350, %344 : vector<2x1xi32>
    %352 = vector.broadcast %351 : vector<2x1xi32> to vector<2x128xi32>
    %353 = arith.cmpi eq, %352, %15 : vector<2x128xi32>
    %354 = arith.extui %353 : vector<2x128xi1> to vector<2x128xi32>
    %355 = arith.sitofp %354 : vector<2x128xi32> to vector<2x128xf32>
    %cst_104 = arith.constant dense<0.000000e+00> : vector<2x32xf32>
    %356 = tpu.matmul %355, %0, %cst_104 {dimension_numbers = #tpu.dot_dimension_numbers<[1], [0], [0], [1], [0, 0, 1, 1], [], []>} : vector<2x128xf32>, vector<128x32xf32>, vector<2x32xf32> -> vector<2x32xf32>
    %357 = tpu.concatenate %299, %318, %337 in 1 : vector<2x32xf32>, vector<2x32xf32>, vector<2x32xf32> -> vector<2x96xf32>
    %cst_105 = arith.constant dense<0.000000e+00> : vector<2x384xf32>
    %358 = tpu.matmul %357, %7, %cst_105 {dimension_numbers = #tpu.dot_dimension_numbers<[1], [0], [0], [1], [0, 0, 1, 1], [], []>} : vector<2x96xf32>, vector<96x384xf32>, vector<2x384xf32> -> vector<2x384xf32>
    %359 = arith.addf %358, %10 : vector<2x384xf32>
    %cst_106 = arith.constant dense<0.000000e+00> : vector<2x128xf32>
    %360 = tpu.matmul %356, %2, %cst_106 {dimension_numbers = #tpu.dot_dimension_numbers<[1], [0], [0], [1], [0, 0, 1, 1], [], []>} : vector<2x32xf32>, vector<32x128xf32>, vector<2x128xf32> -> vector<2x128xf32>
    %361 = vector.extract_strided_slice %359 {offsets = [0, 0], sizes = [2, 128], strides = [1, 1]} : vector<2x384xf32> to vector<2x128xf32>
    %362 = arith.addf %360, %361 : vector<2x128xf32>
    %363 = vector.extract_strided_slice %362 {offsets = [0, 0], sizes = [2, 96], strides = [1, 1]} : vector<2x128xf32> to vector<2x96xf32>
    %364 = arith.negf %363 : vector<2x96xf32>
    %365 = math.exp %364 : vector<2x96xf32>
    %cst_107 = arith.constant 1.000000e+00 : f32
    %366 = vector.broadcast %cst_107 : f32 to vector<2x96xf32>
    %367 = arith.addf %366, %365 : vector<2x96xf32>
    %368 = arith.divf %366, %367 : vector<2x96xf32>
    %369 = vector.extract_strided_slice %362 {offsets = [0, 96], sizes = [2, 32], strides = [1, 1]} : vector<2x128xf32> to vector<2x32xf32>
    %370 = math.tanh %369 : vector<2x32xf32>
    %371 = vector.extract_strided_slice %368 {offsets = [0, 0], sizes = [2, 32], strides = [1, 1]} : vector<2x96xf32> to vector<2x32xf32>
    %372 = vector.extract_strided_slice %368 {offsets = [0, 32], sizes = [2, 32], strides = [1, 1]} : vector<2x96xf32> to vector<2x32xf32>
    %373 = vector.extract_strided_slice %368 {offsets = [0, 64], sizes = [2, 32], strides = [1, 1]} : vector<2x96xf32> to vector<2x32xf32>
    %374 = arith.mulf %372, %297 : vector<2x32xf32>
    %375 = arith.mulf %371, %370 : vector<2x32xf32>
    %376 = arith.addf %374, %375 : vector<2x32xf32>
    %377 = math.tanh %376 : vector<2x32xf32>
    %378 = arith.mulf %373, %377 : vector<2x32xf32>
    %cst_108 = arith.constant dense<0.000000e+00> : vector<2x128xf32>
    %379 = tpu.matmul %378, %4, %cst_108 {dimension_numbers = #tpu.dot_dimension_numbers<[1], [0], [0], [1], [0, 0, 1, 1], [], []>} : vector<2x32xf32>, vector<32x128xf32>, vector<2x128xf32> -> vector<2x128xf32>
    %380 = vector.extract_strided_slice %359 {offsets = [0, 128], sizes = [2, 128], strides = [1, 1]} : vector<2x384xf32> to vector<2x128xf32>
    %381 = arith.addf %379, %380 : vector<2x128xf32>
    %382 = vector.extract_strided_slice %381 {offsets = [0, 0], sizes = [2, 96], strides = [1, 1]} : vector<2x128xf32> to vector<2x96xf32>
    %383 = arith.negf %382 : vector<2x96xf32>
    %384 = math.exp %383 : vector<2x96xf32>
    %cst_109 = arith.constant 1.000000e+00 : f32
    %385 = vector.broadcast %cst_109 : f32 to vector<2x96xf32>
    %386 = arith.addf %385, %384 : vector<2x96xf32>
    %387 = arith.divf %385, %386 : vector<2x96xf32>
    %388 = vector.extract_strided_slice %381 {offsets = [0, 96], sizes = [2, 32], strides = [1, 1]} : vector<2x128xf32> to vector<2x32xf32>
    %389 = math.tanh %388 : vector<2x32xf32>
    %390 = vector.extract_strided_slice %387 {offsets = [0, 0], sizes = [2, 32], strides = [1, 1]} : vector<2x96xf32> to vector<2x32xf32>
    %391 = vector.extract_strided_slice %387 {offsets = [0, 32], sizes = [2, 32], strides = [1, 1]} : vector<2x96xf32> to vector<2x32xf32>
    %392 = vector.extract_strided_slice %387 {offsets = [0, 64], sizes = [2, 32], strides = [1, 1]} : vector<2x96xf32> to vector<2x32xf32>
    %393 = arith.mulf %391, %316 : vector<2x32xf32>
    %394 = arith.mulf %390, %389 : vector<2x32xf32>
    %395 = arith.addf %393, %394 : vector<2x32xf32>
    %396 = math.tanh %395 : vector<2x32xf32>
    %397 = arith.mulf %392, %396 : vector<2x32xf32>
    %cst_110 = arith.constant dense<0.000000e+00> : vector<2x128xf32>
    %398 = tpu.matmul %397, %6, %cst_110 {dimension_numbers = #tpu.dot_dimension_numbers<[1], [0], [0], [1], [0, 0, 1, 1], [], []>} : vector<2x32xf32>, vector<32x128xf32>, vector<2x128xf32> -> vector<2x128xf32>
    %399 = vector.extract_strided_slice %359 {offsets = [0, 256], sizes = [2, 128], strides = [1, 1]} : vector<2x384xf32> to vector<2x128xf32>
    %400 = arith.addf %398, %399 : vector<2x128xf32>
    %401 = vector.extract_strided_slice %400 {offsets = [0, 0], sizes = [2, 96], strides = [1, 1]} : vector<2x128xf32> to vector<2x96xf32>
    %402 = arith.negf %401 : vector<2x96xf32>
    %403 = math.exp %402 : vector<2x96xf32>
    %cst_111 = arith.constant 1.000000e+00 : f32
    %404 = vector.broadcast %cst_111 : f32 to vector<2x96xf32>
    %405 = arith.addf %404, %403 : vector<2x96xf32>
    %406 = arith.divf %404, %405 : vector<2x96xf32>
    %407 = vector.extract_strided_slice %400 {offsets = [0, 96], sizes = [2, 32], strides = [1, 1]} : vector<2x128xf32> to vector<2x32xf32>
    %408 = math.tanh %407 : vector<2x32xf32>
    %409 = vector.extract_strided_slice %406 {offsets = [0, 0], sizes = [2, 32], strides = [1, 1]} : vector<2x96xf32> to vector<2x32xf32>
    %410 = vector.extract_strided_slice %406 {offsets = [0, 32], sizes = [2, 32], strides = [1, 1]} : vector<2x96xf32> to vector<2x32xf32>
    %411 = vector.extract_strided_slice %406 {offsets = [0, 64], sizes = [2, 32], strides = [1, 1]} : vector<2x96xf32> to vector<2x32xf32>
    %412 = arith.mulf %410, %335 : vector<2x32xf32>
    %413 = arith.mulf %409, %408 : vector<2x32xf32>
    %414 = arith.addf %412, %413 : vector<2x32xf32>
    %415 = math.tanh %414 : vector<2x32xf32>
    %416 = arith.mulf %411, %415 : vector<2x32xf32>
    %cst_112 = arith.constant dense<0.000000e+00> : vector<2x128xf32>
    %417 = tpu.matmul %416, %11, %cst_112 {dimension_numbers = #tpu.dot_dimension_numbers<[1], [0], [0], [1], [0, 0, 1, 1], [], []>} : vector<2x32xf32>, vector<32x128xf32>, vector<2x128xf32> -> vector<2x128xf32>
    %418 = arith.addf %417, %14 : vector<2x128xf32>
    %c4_113 = arith.constant 4 : index
    %c0_114 = arith.constant 0 : index
    %c0_115 = arith.constant 0 : index
    %419 = vector.load %arg10[%c4_113, %c0_114, %c0_115] : memref<8x2x128xf32, #tpu.memory_space<vmem>>, vector<1x2x128xf32>
    %420 = vector.shape_cast %419 : vector<1x2x128xf32> to vector<2x128xf32>
    %421 = vector.shape_cast %418 : vector<2x128xf32> to vector<1x2x128xf32>
    tpu.vector_store %arg10[%c4_113, %c0_114, %c0_115], %421 {strides = array<i32>} : memref<8x2x128xf32, #tpu.memory_space<vmem>>, vector<1x2x128xf32>,
    %422 = tpu.reduce_index %418 {axis = 1 : i32, kind = #tpu.reduction_kind<arg_max>} : vector<2x128xf32> -> vector<2xi32>
    %423 = vector.shape_cast %422 : vector<2xi32> to vector<2x1xi32>
    %c5 = arith.constant 5 : index
    %424 = memref.load %arg0[%c5] : memref<8xi32, #tpu.memory_space<smem>>
    %c0_i32_116 = arith.constant 0 : i32
    %425 = arith.cmpi sgt, %424, %c0_i32_116 : i32
    %c5_117 = arith.constant 5 : index
    %c0_118 = arith.constant 0 : index
    %c0_119 = arith.constant 0 : index
    %426 = vector.load %arg1[%c5_117, %c0_118, %c0_119] : memref<8x2x128xf32, #tpu.memory_space<vmem>>, vector<1x2x128xf32>
    %427 = vector.shape_cast %426 : vector<1x2x128xf32> to vector<2x128xf32>
    %428 = tpu.reduce_index %427 {axis = 1 : i32, kind = #tpu.reduction_kind<arg_max>} : vector<2x128xf32> -> vector<2xi32>
    %429 = vector.shape_cast %428 : vector<2xi32> to vector<2x1xi32>
    %430 = arith.select %425, %429, %423 : vector<2x1xi32>
    %431 = vector.broadcast %430 : vector<2x1xi32> to vector<2x128xi32>
    %432 = arith.cmpi eq, %431, %15 : vector<2x128xi32>
    %433 = arith.extui %432 : vector<2x128xi1> to vector<2x128xi32>
    %434 = arith.sitofp %433 : vector<2x128xi32> to vector<2x128xf32>
    %cst_120 = arith.constant dense<0.000000e+00> : vector<2x32xf32>
    %435 = tpu.matmul %434, %0, %cst_120 {dimension_numbers = #tpu.dot_dimension_numbers<[1], [0], [0], [1], [0, 0, 1, 1], [], []>} : vector<2x128xf32>, vector<128x32xf32>, vector<2x32xf32> -> vector<2x32xf32>
    %436 = tpu.concatenate %378, %397, %416 in 1 : vector<2x32xf32>, vector<2x32xf32>, vector<2x32xf32> -> vector<2x96xf32>
    %cst_121 = arith.constant dense<0.000000e+00> : vector<2x384xf32>
    %437 = tpu.matmul %436, %7, %cst_121 {dimension_numbers = #tpu.dot_dimension_numbers<[1], [0], [0], [1], [0, 0, 1, 1], [], []>} : vector<2x96xf32>, vector<96x384xf32>, vector<2x384xf32> -> vector<2x384xf32>
    %438 = arith.addf %437, %10 : vector<2x384xf32>
    %cst_122 = arith.constant dense<0.000000e+00> : vector<2x128xf32>
    %439 = tpu.matmul %435, %2, %cst_122 {dimension_numbers = #tpu.dot_dimension_numbers<[1], [0], [0], [1], [0, 0, 1, 1], [], []>} : vector<2x32xf32>, vector<32x128xf32>, vector<2x128xf32> -> vector<2x128xf32>
    %440 = vector.extract_strided_slice %438 {offsets = [0, 0], sizes = [2, 128], strides = [1, 1]} : vector<2x384xf32> to vector<2x128xf32>
    %441 = arith.addf %439, %440 : vector<2x128xf32>
    %442 = vector.extract_strided_slice %441 {offsets = [0, 0], sizes = [2, 96], strides = [1, 1]} : vector<2x128xf32> to vector<2x96xf32>
    %443 = arith.negf %442 : vector<2x96xf32>
    %444 = math.exp %443 : vector<2x96xf32>
    %cst_123 = arith.constant 1.000000e+00 : f32
    %445 = vector.broadcast %cst_123 : f32 to vector<2x96xf32>
    %446 = arith.addf %445, %444 : vector<2x96xf32>
    %447 = arith.divf %445, %446 : vector<2x96xf32>
    %448 = vector.extract_strided_slice %441 {offsets = [0, 96], sizes = [2, 32], strides = [1, 1]} : vector<2x128xf32> to vector<2x32xf32>
    %449 = math.tanh %448 : vector<2x32xf32>
    %450 = vector.extract_strided_slice %447 {offsets = [0, 0], sizes = [2, 32], strides = [1, 1]} : vector<2x96xf32> to vector<2x32xf32>
    %451 = vector.extract_strided_slice %447 {offsets = [0, 32], sizes = [2, 32], strides = [1, 1]} : vector<2x96xf32> to vector<2x32xf32>
    %452 = vector.extract_strided_slice %447 {offsets = [0, 64], sizes = [2, 32], strides = [1, 1]} : vector<2x96xf32> to vector<2x32xf32>
    %453 = arith.mulf %451, %376 : vector<2x32xf32>
    %454 = arith.mulf %450, %449 : vector<2x32xf32>
    %455 = arith.addf %453, %454 : vector<2x32xf32>
    %456 = math.tanh %455 : vector<2x32xf32>
    %457 = arith.mulf %452, %456 : vector<2x32xf32>
    %cst_124 = arith.constant dense<0.000000e+00> : vector<2x128xf32>
    %458 = tpu.matmul %457, %4, %cst_124 {dimension_numbers = #tpu.dot_dimension_numbers<[1], [0], [0], [1], [0, 0, 1, 1], [], []>} : vector<2x32xf32>, vector<32x128xf32>, vector<2x128xf32> -> vector<2x128xf32>
    %459 = vector.extract_strided_slice %438 {offsets = [0, 128], sizes = [2, 128], strides = [1, 1]} : vector<2x384xf32> to vector<2x128xf32>
    %460 = arith.addf %458, %459 : vector<2x128xf32>
    %461 = vector.extract_strided_slice %460 {offsets = [0, 0], sizes = [2, 96], strides = [1, 1]} : vector<2x128xf32> to vector<2x96xf32>
    %462 = arith.negf %461 : vector<2x96xf32>
    %463 = math.exp %462 : vector<2x96xf32>
    %cst_125 = arith.constant 1.000000e+00 : f32
    %464 = vector.broadcast %cst_125 : f32 to vector<2x96xf32>
    %465 = arith.addf %464, %463 : vector<2x96xf32>
    %466 = arith.divf %464, %465 : vector<2x96xf32>
    %467 = vector.extract_strided_slice %460 {offsets = [0, 96], sizes = [2, 32], strides = [1, 1]} : vector<2x128xf32> to vector<2x32xf32>
    %468 = math.tanh %467 : vector<2x32xf32>
    %469 = vector.extract_strided_slice %466 {offsets = [0, 0], sizes = [2, 32], strides = [1, 1]} : vector<2x96xf32> to vector<2x32xf32>
    %470 = vector.extract_strided_slice %466 {offsets = [0, 32], sizes = [2, 32], strides = [1, 1]} : vector<2x96xf32> to vector<2x32xf32>
    %471 = vector.extract_strided_slice %466 {offsets = [0, 64], sizes = [2, 32], strides = [1, 1]} : vector<2x96xf32> to vector<2x32xf32>
    %472 = arith.mulf %470, %395 : vector<2x32xf32>
    %473 = arith.mulf %469, %468 : vector<2x32xf32>
    %474 = arith.addf %472, %473 : vector<2x32xf32>
    %475 = math.tanh %474 : vector<2x32xf32>
    %476 = arith.mulf %471, %475 : vector<2x32xf32>
    %cst_126 = arith.constant dense<0.000000e+00> : vector<2x128xf32>
    %477 = tpu.matmul %476, %6, %cst_126 {dimension_numbers = #tpu.dot_dimension_numbers<[1], [0], [0], [1], [0, 0, 1, 1], [], []>} : vector<2x32xf32>, vector<32x128xf32>, vector<2x128xf32> -> vector<2x128xf32>
    %478 = vector.extract_strided_slice %438 {offsets = [0, 256], sizes = [2, 128], strides = [1, 1]} : vector<2x384xf32> to vector<2x128xf32>
    %479 = arith.addf %477, %478 : vector<2x128xf32>
    %480 = vector.extract_strided_slice %479 {offsets = [0, 0], sizes = [2, 96], strides = [1, 1]} : vector<2x128xf32> to vector<2x96xf32>
    %481 = arith.negf %480 : vector<2x96xf32>
    %482 = math.exp %481 : vector<2x96xf32>
    %cst_127 = arith.constant 1.000000e+00 : f32
    %483 = vector.broadcast %cst_127 : f32 to vector<2x96xf32>
    %484 = arith.addf %483, %482 : vector<2x96xf32>
    %485 = arith.divf %483, %484 : vector<2x96xf32>
    %486 = vector.extract_strided_slice %479 {offsets = [0, 96], sizes = [2, 32], strides = [1, 1]} : vector<2x128xf32> to vector<2x32xf32>
    %487 = math.tanh %486 : vector<2x32xf32>
    %488 = vector.extract_strided_slice %485 {offsets = [0, 0], sizes = [2, 32], strides = [1, 1]} : vector<2x96xf32> to vector<2x32xf32>
    %489 = vector.extract_strided_slice %485 {offsets = [0, 32], sizes = [2, 32], strides = [1, 1]} : vector<2x96xf32> to vector<2x32xf32>
    %490 = vector.extract_strided_slice %485 {offsets = [0, 64], sizes = [2, 32], strides = [1, 1]} : vector<2x96xf32> to vector<2x32xf32>
    %491 = arith.mulf %489, %414 : vector<2x32xf32>
    %492 = arith.mulf %488, %487 : vector<2x32xf32>
    %493 = arith.addf %491, %492 : vector<2x32xf32>
    %494 = math.tanh %493 : vector<2x32xf32>
    %495 = arith.mulf %490, %494 : vector<2x32xf32>
    %cst_128 = arith.constant dense<0.000000e+00> : vector<2x128xf32>
    %496 = tpu.matmul %495, %11, %cst_128 {dimension_numbers = #tpu.dot_dimension_numbers<[1], [0], [0], [1], [0, 0, 1, 1], [], []>} : vector<2x32xf32>, vector<32x128xf32>, vector<2x128xf32> -> vector<2x128xf32>
    %497 = arith.addf %496, %14 : vector<2x128xf32>
    %c5_129 = arith.constant 5 : index
    %c0_130 = arith.constant 0 : index
    %c0_131 = arith.constant 0 : index
    %498 = vector.load %arg10[%c5_129, %c0_130, %c0_131] : memref<8x2x128xf32, #tpu.memory_space<vmem>>, vector<1x2x128xf32>
    %499 = vector.shape_cast %498 : vector<1x2x128xf32> to vector<2x128xf32>
    %500 = vector.shape_cast %497 : vector<2x128xf32> to vector<1x2x128xf32>
    tpu.vector_store %arg10[%c5_129, %c0_130, %c0_131], %500 {strides = array<i32>} : memref<8x2x128xf32, #tpu.memory_space<vmem>>, vector<1x2x128xf32>,
    %501 = tpu.reduce_index %497 {axis = 1 : i32, kind = #tpu.reduction_kind<arg_max>} : vector<2x128xf32> -> vector<2xi32>
    %502 = vector.shape_cast %501 : vector<2xi32> to vector<2x1xi32>
    %c6 = arith.constant 6 : index
    %503 = memref.load %arg0[%c6] : memref<8xi32, #tpu.memory_space<smem>>
    %c0_i32_132 = arith.constant 0 : i32
    %504 = arith.cmpi sgt, %503, %c0_i32_132 : i32
    %c6_133 = arith.constant 6 : index
    %c0_134 = arith.constant 0 : index
    %c0_135 = arith.constant 0 : index
    %505 = vector.load %arg1[%c6_133, %c0_134, %c0_135] : memref<8x2x128xf32, #tpu.memory_space<vmem>>, vector<1x2x128xf32>
    %506 = vector.shape_cast %505 : vector<1x2x128xf32> to vector<2x128xf32>
    %507 = tpu.reduce_index %506 {axis = 1 : i32, kind = #tpu.reduction_kind<arg_max>} : vector<2x128xf32> -> vector<2xi32>
    %508 = vector.shape_cast %507 : vector<2xi32> to vector<2x1xi32>
    %509 = arith.select %504, %508, %502 : vector<2x1xi32>
    %510 = vector.broadcast %509 : vector<2x1xi32> to vector<2x128xi32>
    %511 = arith.cmpi eq, %510, %15 : vector<2x128xi32>
    %512 = arith.extui %511 : vector<2x128xi1> to vector<2x128xi32>
    %513 = arith.sitofp %512 : vector<2x128xi32> to vector<2x128xf32>
    %cst_136 = arith.constant dense<0.000000e+00> : vector<2x32xf32>
    %514 = tpu.matmul %513, %0, %cst_136 {dimension_numbers = #tpu.dot_dimension_numbers<[1], [0], [0], [1], [0, 0, 1, 1], [], []>} : vector<2x128xf32>, vector<128x32xf32>, vector<2x32xf32> -> vector<2x32xf32>
    %515 = tpu.concatenate %457, %476, %495 in 1 : vector<2x32xf32>, vector<2x32xf32>, vector<2x32xf32> -> vector<2x96xf32>
    %cst_137 = arith.constant dense<0.000000e+00> : vector<2x384xf32>
    %516 = tpu.matmul %515, %7, %cst_137 {dimension_numbers = #tpu.dot_dimension_numbers<[1], [0], [0], [1], [0, 0, 1, 1], [], []>} : vector<2x96xf32>, vector<96x384xf32>, vector<2x384xf32> -> vector<2x384xf32>
    %517 = arith.addf %516, %10 : vector<2x384xf32>
    %cst_138 = arith.constant dense<0.000000e+00> : vector<2x128xf32>
    %518 = tpu.matmul %514, %2, %cst_138 {dimension_numbers = #tpu.dot_dimension_numbers<[1], [0], [0], [1], [0, 0, 1, 1], [], []>} : vector<2x32xf32>, vector<32x128xf32>, vector<2x128xf32> -> vector<2x128xf32>
    %519 = vector.extract_strided_slice %517 {offsets = [0, 0], sizes = [2, 128], strides = [1, 1]} : vector<2x384xf32> to vector<2x128xf32>
    %520 = arith.addf %518, %519 : vector<2x128xf32>
    %521 = vector.extract_strided_slice %520 {offsets = [0, 0], sizes = [2, 96], strides = [1, 1]} : vector<2x128xf32> to vector<2x96xf32>
    %522 = arith.negf %521 : vector<2x96xf32>
    %523 = math.exp %522 : vector<2x96xf32>
    %cst_139 = arith.constant 1.000000e+00 : f32
    %524 = vector.broadcast %cst_139 : f32 to vector<2x96xf32>
    %525 = arith.addf %524, %523 : vector<2x96xf32>
    %526 = arith.divf %524, %525 : vector<2x96xf32>
    %527 = vector.extract_strided_slice %520 {offsets = [0, 96], sizes = [2, 32], strides = [1, 1]} : vector<2x128xf32> to vector<2x32xf32>
    %528 = math.tanh %527 : vector<2x32xf32>
    %529 = vector.extract_strided_slice %526 {offsets = [0, 0], sizes = [2, 32], strides = [1, 1]} : vector<2x96xf32> to vector<2x32xf32>
    %530 = vector.extract_strided_slice %526 {offsets = [0, 32], sizes = [2, 32], strides = [1, 1]} : vector<2x96xf32> to vector<2x32xf32>
    %531 = vector.extract_strided_slice %526 {offsets = [0, 64], sizes = [2, 32], strides = [1, 1]} : vector<2x96xf32> to vector<2x32xf32>
    %532 = arith.mulf %530, %455 : vector<2x32xf32>
    %533 = arith.mulf %529, %528 : vector<2x32xf32>
    %534 = arith.addf %532, %533 : vector<2x32xf32>
    %535 = math.tanh %534 : vector<2x32xf32>
    %536 = arith.mulf %531, %535 : vector<2x32xf32>
    %cst_140 = arith.constant dense<0.000000e+00> : vector<2x128xf32>
    %537 = tpu.matmul %536, %4, %cst_140 {dimension_numbers = #tpu.dot_dimension_numbers<[1], [0], [0], [1], [0, 0, 1, 1], [], []>} : vector<2x32xf32>, vector<32x128xf32>, vector<2x128xf32> -> vector<2x128xf32>
    %538 = vector.extract_strided_slice %517 {offsets = [0, 128], sizes = [2, 128], strides = [1, 1]} : vector<2x384xf32> to vector<2x128xf32>
    %539 = arith.addf %537, %538 : vector<2x128xf32>
    %540 = vector.extract_strided_slice %539 {offsets = [0, 0], sizes = [2, 96], strides = [1, 1]} : vector<2x128xf32> to vector<2x96xf32>
    %541 = arith.negf %540 : vector<2x96xf32>
    %542 = math.exp %541 : vector<2x96xf32>
    %cst_141 = arith.constant 1.000000e+00 : f32
    %543 = vector.broadcast %cst_141 : f32 to vector<2x96xf32>
    %544 = arith.addf %543, %542 : vector<2x96xf32>
    %545 = arith.divf %543, %544 : vector<2x96xf32>
    %546 = vector.extract_strided_slice %539 {offsets = [0, 96], sizes = [2, 32], strides = [1, 1]} : vector<2x128xf32> to vector<2x32xf32>
    %547 = math.tanh %546 : vector<2x32xf32>
    %548 = vector.extract_strided_slice %545 {offsets = [0, 0], sizes = [2, 32], strides = [1, 1]} : vector<2x96xf32> to vector<2x32xf32>
    %549 = vector.extract_strided_slice %545 {offsets = [0, 32], sizes = [2, 32], strides = [1, 1]} : vector<2x96xf32> to vector<2x32xf32>
    %550 = vector.extract_strided_slice %545 {offsets = [0, 64], sizes = [2, 32], strides = [1, 1]} : vector<2x96xf32> to vector<2x32xf32>
    %551 = arith.mulf %549, %474 : vector<2x32xf32>
    %552 = arith.mulf %548, %547 : vector<2x32xf32>
    %553 = arith.addf %551, %552 : vector<2x32xf32>
    %554 = math.tanh %553 : vector<2x32xf32>
    %555 = arith.mulf %550, %554 : vector<2x32xf32>
    %cst_142 = arith.constant dense<0.000000e+00> : vector<2x128xf32>
    %556 = tpu.matmul %555, %6, %cst_142 {dimension_numbers = #tpu.dot_dimension_numbers<[1], [0], [0], [1], [0, 0, 1, 1], [], []>} : vector<2x32xf32>, vector<32x128xf32>, vector<2x128xf32> -> vector<2x128xf32>
    %557 = vector.extract_strided_slice %517 {offsets = [0, 256], sizes = [2, 128], strides = [1, 1]} : vector<2x384xf32> to vector<2x128xf32>
    %558 = arith.addf %556, %557 : vector<2x128xf32>
    %559 = vector.extract_strided_slice %558 {offsets = [0, 0], sizes = [2, 96], strides = [1, 1]} : vector<2x128xf32> to vector<2x96xf32>
    %560 = arith.negf %559 : vector<2x96xf32>
    %561 = math.exp %560 : vector<2x96xf32>
    %cst_143 = arith.constant 1.000000e+00 : f32
    %562 = vector.broadcast %cst_143 : f32 to vector<2x96xf32>
    %563 = arith.addf %562, %561 : vector<2x96xf32>
    %564 = arith.divf %562, %563 : vector<2x96xf32>
    %565 = vector.extract_strided_slice %558 {offsets = [0, 96], sizes = [2, 32], strides = [1, 1]} : vector<2x128xf32> to vector<2x32xf32>
    %566 = math.tanh %565 : vector<2x32xf32>
    %567 = vector.extract_strided_slice %564 {offsets = [0, 0], sizes = [2, 32], strides = [1, 1]} : vector<2x96xf32> to vector<2x32xf32>
    %568 = vector.extract_strided_slice %564 {offsets = [0, 32], sizes = [2, 32], strides = [1, 1]} : vector<2x96xf32> to vector<2x32xf32>
    %569 = vector.extract_strided_slice %564 {offsets = [0, 64], sizes = [2, 32], strides = [1, 1]} : vector<2x96xf32> to vector<2x32xf32>
    %570 = arith.mulf %568, %493 : vector<2x32xf32>
    %571 = arith.mulf %567, %566 : vector<2x32xf32>
    %572 = arith.addf %570, %571 : vector<2x32xf32>
    %573 = math.tanh %572 : vector<2x32xf32>
    %574 = arith.mulf %569, %573 : vector<2x32xf32>
    %cst_144 = arith.constant dense<0.000000e+00> : vector<2x128xf32>
    %575 = tpu.matmul %574, %11, %cst_144 {dimension_numbers = #tpu.dot_dimension_numbers<[1], [0], [0], [1], [0, 0, 1, 1], [], []>} : vector<2x32xf32>, vector<32x128xf32>, vector<2x128xf32> -> vector<2x128xf32>
    %576 = arith.addf %575, %14 : vector<2x128xf32>
    %c6_145 = arith.constant 6 : index
    %c0_146 = arith.constant 0 : index
    %c0_147 = arith.constant 0 : index
    %577 = vector.load %arg10[%c6_145, %c0_146, %c0_147] : memref<8x2x128xf32, #tpu.memory_space<vmem>>, vector<1x2x128xf32>
    %578 = vector.shape_cast %577 : vector<1x2x128xf32> to vector<2x128xf32>
    %579 = vector.shape_cast %576 : vector<2x128xf32> to vector<1x2x128xf32>
    tpu.vector_store %arg10[%c6_145, %c0_146, %c0_147], %579 {strides = array<i32>} : memref<8x2x128xf32, #tpu.memory_space<vmem>>, vector<1x2x128xf32>,
    %580 = tpu.reduce_index %576 {axis = 1 : i32, kind = #tpu.reduction_kind<arg_max>} : vector<2x128xf32> -> vector<2xi32>
    %581 = vector.shape_cast %580 : vector<2xi32> to vector<2x1xi32>
    %c7 = arith.constant 7 : index
    %582 = memref.load %arg0[%c7] : memref<8xi32, #tpu.memory_space<smem>>
    %c0_i32_148 = arith.constant 0 : i32
    %583 = arith.cmpi sgt, %582, %c0_i32_148 : i32
    %c7_149 = arith.constant 7 : index
    %c0_150 = arith.constant 0 : index
    %c0_151 = arith.constant 0 : index
    %584 = vector.load %arg1[%c7_149, %c0_150, %c0_151] : memref<8x2x128xf32, #tpu.memory_space<vmem>>, vector<1x2x128xf32>
    %585 = vector.shape_cast %584 : vector<1x2x128xf32> to vector<2x128xf32>
    %586 = tpu.reduce_index %585 {axis = 1 : i32, kind = #tpu.reduction_kind<arg_max>} : vector<2x128xf32> -> vector<2xi32>
    %587 = vector.shape_cast %586 : vector<2xi32> to vector<2x1xi32>
    %588 = arith.select %583, %587, %581 : vector<2x1xi32>
    %589 = vector.broadcast %588 : vector<2x1xi32> to vector<2x128xi32>
    %590 = arith.cmpi eq, %589, %15 : vector<2x128xi32>
    %591 = arith.extui %590 : vector<2x128xi1> to vector<2x128xi32>
    %592 = arith.sitofp %591 : vector<2x128xi32> to vector<2x128xf32>
    %cst_152 = arith.constant dense<0.000000e+00> : vector<2x32xf32>
    %593 = tpu.matmul %592, %0, %cst_152 {dimension_numbers = #tpu.dot_dimension_numbers<[1], [0], [0], [1], [0, 0, 1, 1], [], []>} : vector<2x128xf32>, vector<128x32xf32>, vector<2x32xf32> -> vector<2x32xf32>
    %594 = tpu.concatenate %536, %555, %574 in 1 : vector<2x32xf32>, vector<2x32xf32>, vector<2x32xf32> -> vector<2x96xf32>
    %cst_153 = arith.constant dense<0.000000e+00> : vector<2x384xf32>
    %595 = tpu.matmul %594, %7, %cst_153 {dimension_numbers = #tpu.dot_dimension_numbers<[1], [0], [0], [1], [0, 0, 1, 1], [], []>} : vector<2x96xf32>, vector<96x384xf32>, vector<2x384xf32> -> vector<2x384xf32>
    %596 = arith.addf %595, %10 : vector<2x384xf32>
    %cst_154 = arith.constant dense<0.000000e+00> : vector<2x128xf32>
    %597 = tpu.matmul %593, %2, %cst_154 {dimension_numbers = #tpu.dot_dimension_numbers<[1], [0], [0], [1], [0, 0, 1, 1], [], []>} : vector<2x32xf32>, vector<32x128xf32>, vector<2x128xf32> -> vector<2x128xf32>
    %598 = vector.extract_strided_slice %596 {offsets = [0, 0], sizes = [2, 128], strides = [1, 1]} : vector<2x384xf32> to vector<2x128xf32>
    %599 = arith.addf %597, %598 : vector<2x128xf32>
    %600 = vector.extract_strided_slice %599 {offsets = [0, 0], sizes = [2, 96], strides = [1, 1]} : vector<2x128xf32> to vector<2x96xf32>
    %601 = arith.negf %600 : vector<2x96xf32>
    %602 = math.exp %601 : vector<2x96xf32>
    %cst_155 = arith.constant 1.000000e+00 : f32
    %603 = vector.broadcast %cst_155 : f32 to vector<2x96xf32>
    %604 = arith.addf %603, %602 : vector<2x96xf32>
    %605 = arith.divf %603, %604 : vector<2x96xf32>
    %606 = vector.extract_strided_slice %599 {offsets = [0, 96], sizes = [2, 32], strides = [1, 1]} : vector<2x128xf32> to vector<2x32xf32>
    %607 = math.tanh %606 : vector<2x32xf32>
    %608 = vector.extract_strided_slice %605 {offsets = [0, 0], sizes = [2, 32], strides = [1, 1]} : vector<2x96xf32> to vector<2x32xf32>
    %609 = vector.extract_strided_slice %605 {offsets = [0, 32], sizes = [2, 32], strides = [1, 1]} : vector<2x96xf32> to vector<2x32xf32>
    %610 = vector.extract_strided_slice %605 {offsets = [0, 64], sizes = [2, 32], strides = [1, 1]} : vector<2x96xf32> to vector<2x32xf32>
    %611 = arith.mulf %609, %534 : vector<2x32xf32>
    %612 = arith.mulf %608, %607 : vector<2x32xf32>
    %613 = arith.addf %611, %612 : vector<2x32xf32>
    %614 = math.tanh %613 : vector<2x32xf32>
    %615 = arith.mulf %610, %614 : vector<2x32xf32>
    %cst_156 = arith.constant dense<0.000000e+00> : vector<2x128xf32>
    %616 = tpu.matmul %615, %4, %cst_156 {dimension_numbers = #tpu.dot_dimension_numbers<[1], [0], [0], [1], [0, 0, 1, 1], [], []>} : vector<2x32xf32>, vector<32x128xf32>, vector<2x128xf32> -> vector<2x128xf32>
    %617 = vector.extract_strided_slice %596 {offsets = [0, 128], sizes = [2, 128], strides = [1, 1]} : vector<2x384xf32> to vector<2x128xf32>
    %618 = arith.addf %616, %617 : vector<2x128xf32>
    %619 = vector.extract_strided_slice %618 {offsets = [0, 0], sizes = [2, 96], strides = [1, 1]} : vector<2x128xf32> to vector<2x96xf32>
    %620 = arith.negf %619 : vector<2x96xf32>
    %621 = math.exp %620 : vector<2x96xf32>
    %cst_157 = arith.constant 1.000000e+00 : f32
    %622 = vector.broadcast %cst_157 : f32 to vector<2x96xf32>
    %623 = arith.addf %622, %621 : vector<2x96xf32>
    %624 = arith.divf %622, %623 : vector<2x96xf32>
    %625 = vector.extract_strided_slice %618 {offsets = [0, 96], sizes = [2, 32], strides = [1, 1]} : vector<2x128xf32> to vector<2x32xf32>
    %626 = math.tanh %625 : vector<2x32xf32>
    %627 = vector.extract_strided_slice %624 {offsets = [0, 0], sizes = [2, 32], strides = [1, 1]} : vector<2x96xf32> to vector<2x32xf32>
    %628 = vector.extract_strided_slice %624 {offsets = [0, 32], sizes = [2, 32], strides = [1, 1]} : vector<2x96xf32> to vector<2x32xf32>
    %629 = vector.extract_strided_slice %624 {offsets = [0, 64], sizes = [2, 32], strides = [1, 1]} : vector<2x96xf32> to vector<2x32xf32>
    %630 = arith.mulf %628, %553 : vector<2x32xf32>
    %631 = arith.mulf %627, %626 : vector<2x32xf32>
    %632 = arith.addf %630, %631 : vector<2x32xf32>
    %633 = math.tanh %632 : vector<2x32xf32>
    %634 = arith.mulf %629, %633 : vector<2x32xf32>
    %cst_158 = arith.constant dense<0.000000e+00> : vector<2x128xf32>
    %635 = tpu.matmul %634, %6, %cst_158 {dimension_numbers = #tpu.dot_dimension_numbers<[1], [0], [0], [1], [0, 0, 1, 1], [], []>} : vector<2x32xf32>, vector<32x128xf32>, vector<2x128xf32> -> vector<2x128xf32>
    %636 = vector.extract_strided_slice %596 {offsets = [0, 256], sizes = [2, 128], strides = [1, 1]} : vector<2x384xf32> to vector<2x128xf32>
    %637 = arith.addf %635, %636 : vector<2x128xf32>
    %638 = vector.extract_strided_slice %637 {offsets = [0, 0], sizes = [2, 96], strides = [1, 1]} : vector<2x128xf32> to vector<2x96xf32>
    %639 = arith.negf %638 : vector<2x96xf32>
    %640 = math.exp %639 : vector<2x96xf32>
    %cst_159 = arith.constant 1.000000e+00 : f32
    %641 = vector.broadcast %cst_159 : f32 to vector<2x96xf32>
    %642 = arith.addf %641, %640 : vector<2x96xf32>
    %643 = arith.divf %641, %642 : vector<2x96xf32>
    %644 = vector.extract_strided_slice %637 {offsets = [0, 96], sizes = [2, 32], strides = [1, 1]} : vector<2x128xf32> to vector<2x32xf32>
    %645 = math.tanh %644 : vector<2x32xf32>
    %646 = vector.extract_strided_slice %643 {offsets = [0, 0], sizes = [2, 32], strides = [1, 1]} : vector<2x96xf32> to vector<2x32xf32>
    %647 = vector.extract_strided_slice %643 {offsets = [0, 32], sizes = [2, 32], strides = [1, 1]} : vector<2x96xf32> to vector<2x32xf32>
    %648 = vector.extract_strided_slice %643 {offsets = [0, 64], sizes = [2, 32], strides = [1, 1]} : vector<2x96xf32> to vector<2x32xf32>
    %649 = arith.mulf %647, %572 : vector<2x32xf32>
    %650 = arith.mulf %646, %645 : vector<2x32xf32>
    %651 = arith.addf %649, %650 : vector<2x32xf32>
    %652 = math.tanh %651 : vector<2x32xf32>
    %653 = arith.mulf %648, %652 : vector<2x32xf32>
    %cst_160 = arith.constant dense<0.000000e+00> : vector<2x128xf32>
    %654 = tpu.matmul %653, %11, %cst_160 {dimension_numbers = #tpu.dot_dimension_numbers<[1], [0], [0], [1], [0, 0, 1, 1], [], []>} : vector<2x32xf32>, vector<32x128xf32>, vector<2x128xf32> -> vector<2x128xf32>
    %655 = arith.addf %654, %14 : vector<2x128xf32>
    %c7_161 = arith.constant 7 : index
    %c0_162 = arith.constant 0 : index
    %c0_163 = arith.constant 0 : index
    %656 = vector.load %arg10[%c7_161, %c0_162, %c0_163] : memref<8x2x128xf32, #tpu.memory_space<vmem>>, vector<1x2x128xf32>
    %657 = vector.shape_cast %656 : vector<1x2x128xf32> to vector<2x128xf32>
    %658 = vector.shape_cast %655 : vector<2x128xf32> to vector<1x2x128xf32>
    tpu.vector_store %arg10[%c7_161, %c0_162, %c0_163], %658 {strides = array<i32>} : memref<8x2x128xf32, #tpu.memory_space<vmem>>, vector<1x2x128xf32>,
    %c0_164 = arith.constant 0 : index
    %c0_165 = arith.constant 0 : index
    %c0_166 = arith.constant 0 : index
    %659 = vector.load %arg11[%c0_164, %c0_165, %c0_166] : memref<3x2x32xf32, #tpu.memory_space<vmem>>, vector<1x2x32xf32>
    %660 = vector.shape_cast %659 : vector<1x2x32xf32> to vector<2x32xf32>
    %661 = vector.shape_cast %615 : vector<2x32xf32> to vector<1x2x32xf32>
    tpu.vector_store %arg11[%c0_164, %c0_165, %c0_166], %661 {strides = array<i32>} : memref<3x2x32xf32, #tpu.memory_space<vmem>>, vector<1x2x32xf32>,
    %c0_167 = arith.constant 0 : index
    %c0_168 = arith.constant 0 : index
    %c0_169 = arith.constant 0 : index
    %662 = vector.load %arg12[%c0_167, %c0_168, %c0_169] : memref<3x2x32xf32, #tpu.memory_space<vmem>>, vector<1x2x32xf32>
    %663 = vector.shape_cast %662 : vector<1x2x32xf32> to vector<2x32xf32>
    %664 = vector.shape_cast %613 : vector<2x32xf32> to vector<1x2x32xf32>
    tpu.vector_store %arg12[%c0_167, %c0_168, %c0_169], %664 {strides = array<i32>} : memref<3x2x32xf32, #tpu.memory_space<vmem>>, vector<1x2x32xf32>,
    %c1_170 = arith.constant 1 : index
    %c0_171 = arith.constant 0 : index
    %c0_172 = arith.constant 0 : index
    %665 = vector.load %arg11[%c1_170, %c0_171, %c0_172] : memref<3x2x32xf32, #tpu.memory_space<vmem>>, vector<1x2x32xf32>
    %666 = vector.shape_cast %665 : vector<1x2x32xf32> to vector<2x32xf32>
    %667 = vector.shape_cast %634 : vector<2x32xf32> to vector<1x2x32xf32>
    tpu.vector_store %arg11[%c1_170, %c0_171, %c0_172], %667 {strides = array<i32>} : memref<3x2x32xf32, #tpu.memory_space<vmem>>, vector<1x2x32xf32>,
    %c1_173 = arith.constant 1 : index
    %c0_174 = arith.constant 0 : index
    %c0_175 = arith.constant 0 : index
    %668 = vector.load %arg12[%c1_173, %c0_174, %c0_175] : memref<3x2x32xf32, #tpu.memory_space<vmem>>, vector<1x2x32xf32>
    %669 = vector.shape_cast %668 : vector<1x2x32xf32> to vector<2x32xf32>
    %670 = vector.shape_cast %632 : vector<2x32xf32> to vector<1x2x32xf32>
    tpu.vector_store %arg12[%c1_173, %c0_174, %c0_175], %670 {strides = array<i32>} : memref<3x2x32xf32, #tpu.memory_space<vmem>>, vector<1x2x32xf32>,
    %c2_176 = arith.constant 2 : index
    %c0_177 = arith.constant 0 : index
    %c0_178 = arith.constant 0 : index
    %671 = vector.load %arg11[%c2_176, %c0_177, %c0_178] : memref<3x2x32xf32, #tpu.memory_space<vmem>>, vector<1x2x32xf32>
    %672 = vector.shape_cast %671 : vector<1x2x32xf32> to vector<2x32xf32>
    %673 = vector.shape_cast %653 : vector<2x32xf32> to vector<1x2x32xf32>
    tpu.vector_store %arg11[%c2_176, %c0_177, %c0_178], %673 {strides = array<i32>} : memref<3x2x32xf32, #tpu.memory_space<vmem>>, vector<1x2x32xf32>,
    %c2_179 = arith.constant 2 : index
    %c0_180 = arith.constant 0 : index
    %c0_181 = arith.constant 0 : index
    %674 = vector.load %arg12[%c2_179, %c0_180, %c0_181] : memref<3x2x32xf32, #tpu.memory_space<vmem>>, vector<1x2x32xf32>
    %675 = vector.shape_cast %674 : vector<1x2x32xf32> to vector<2x32xf32>
    %676 = vector.shape_cast %651 : vector<2x32xf32> to vector<1x2x32xf32>
    tpu.vector_store %arg12[%c2_179, %c0_180, %c0_181], %676 {strides = array<i32>} : memref<3x2x32xf32, #tpu.memory_space<vmem>>, vector<1x2x32xf32>,
    return
  }
}

</mosaic_0001>

<llo_original>
// kernel: tpu_custom_call.1
$region0: #{tpu_custom_call.1}
  #allocation0 [shape = 'u32[]', space=smem, size = 0x4, offset = 0x4, fixed_abs, tag = 'smem constant byte address 0x4 - core index']
  #allocation1 [shape = 'u32[144,128]{1,0:T(1,128)}', space=vmem, size = 0x12000, scoped, tag = 'internal scratch']
  %s0 = inlined_call_operand.vmem [shape: s32[8], index: 0, kind: input, shape index: {}]
  %s1 = inlined_call_operand.vmem [shape: f32[8,2,128], index: 1, kind: input, shape index: {}]
  %s2 = inlined_call_operand.vmem [shape: f32[3,2,32], index: 2, kind: input, shape index: {}]
  %s3 = inlined_call_operand.vmem [shape: f32[3,2,32], index: 3, kind: input, shape index: {}]
  %s4 = inlined_call_operand.vmem [shape: f32[128,32], index: 4, kind: input, shape index: {}]
  %s5 = inlined_call_operand.vmem [shape: f32[3,32,128], index: 5, kind: input, shape index: {}]
  %s6 = inlined_call_operand.hbm [shape: f32[96,384], index: 6, kind: input, shape index: {}]
  %s7 = inlined_call_operand.vmem [shape: f32[1,384], index: 7, kind: input, shape index: {}]
  %s8 = inlined_call_operand.vmem [shape: f32[32,128], index: 8, kind: input, shape index: {}]
  %s9 = inlined_call_operand.vmem [shape: f32[1,128], index: 9, kind: input, shape index: {}]
  %s10 = inlined_call_operand.hbm [shape: f32[8,2,128], index: 10, kind: output, shape index: {0}]
  %s11 = inlined_call_operand.hbm [shape: f32[3,2,32], index: 11, kind: output, shape index: {1}]
  %s12 = inlined_call_operand.hbm [shape: f32[3,2,32], index: 12, kind: output, shape index: {2}]
  %13 = xla_tuple %s10, %s11, %s12
  %s14 = sld [smem:[#allocation0]]
  $region74: #{tpu_custom_call.1} parent=0
    _
  %s16 = ssub.s32 1, %s14
  %s17 = scalar_select 0, %s16, %s14
  $region1: #{tpu_custom_call.1} parent=0
    #allocation2 [shape = 'u8[512]{0}', space=smem, size = 0x200, scoped, tag = 'input window, operand 0, single buffered']
    #allocation3 [shape = 's32[1]{0}', space=sflag, size = 0x4, scoped, tag = 'scoped memory for tpu_custom_call.1']
    #allocation4 [shape = 's32[1]{0}', space=sflag, size = 0x4, scoped, tag = 'scoped memory for tpu_custom_call.1']
    #allocation5 [shape = 's32[1]{0}', space=sflag, size = 0x4, scoped, tag = 'scoped memory for tpu_custom_call.1']
    #allocation6 [shape = 'u8[147456]{0}', space=vmem, size = 0x24000, scoped, tag = 'input window, operand 6, single buffered']
    #allocation7 [shape = 'u8[8192]{0}', space=vmem, size = 0x2000, scoped, tag = 'output window, operand 0, single buffered']
    #allocation8 [shape = 'u8[3072]{0}', space=vmem, size = 0xc00, scoped, tag = 'output window, operand 1, single buffered']
    #allocation9 [shape = 's32[1]{0}', space=sflag, size = 0x4, scoped, tag = 'scoped memory for tpu_custom_call.1']
    #allocation10 [shape = 'u8[3072]{0}', space=vmem, size = 0xc00, scoped, tag = 'output window, operand 2, single buffered']
    %18 = vsyncpa [#allocation5], 0
    %19 = vsyncpa [#allocation3], 0
    %20 = vsyncpa [#allocation4], 0
    %21 = vsyncpa [#allocation9], 0
    // Predicated region
    $region2: #{tpu_custom_call.1} parent=1 // pred_check
      _
    $region3: #{tpu_custom_call.1} parent=1 // pred_check_branch
      %23 = sbr.rel (0) target = $region5
    $region4: #{tpu_custom_call.1} parent=1 // pred_region
      %s25 = ssub.s32 16, 16
      %26 = vsyncadd [#allocation5], %s25
      %s28 = sshll.u32 %s0, 4
      %s29 = int_to_ptr.vmem [resolvable:$true] %s28
      %31 = dma.vmem_to_smem %s29, 16, [#allocation2], [#allocation5]
    $region5: #{tpu_custom_call.1} parent=1 // pred_fallthru
      _
    // Predicated region
    $region6: #{tpu_custom_call.1} parent=1 // pred_check
      _
    $region7: #{tpu_custom_call.1} parent=1 // pred_check_branch
      %33 = sbr.rel (0) target = $region9
    $region8: #{tpu_custom_call.1} parent=1 // pred_region
      _
    $region9: #{tpu_custom_call.1} parent=1 // pred_fallthru
      _
    // Predicated region
    $region10: #{tpu_custom_call.1} parent=1 // pred_check
      _
    $region11: #{tpu_custom_call.1} parent=1 // pred_check_branch
      %35 = sbr.rel (0) target = $region13
    $region12: #{tpu_custom_call.1} parent=1 // pred_region
      _
    $region13: #{tpu_custom_call.1} parent=1 // pred_fallthru
      _
    // Predicated region
    $region14: #{tpu_custom_call.1} parent=1 // pred_check
      _
    $region15: #{tpu_custom_call.1} parent=1 // pred_check_branch
      %37 = sbr.rel (0) target = $region17
    $region16: #{tpu_custom_call.1} parent=1 // pred_region
      _
    $region17: #{tpu_custom_call.1} parent=1 // pred_fallthru
      _
    // Predicated region
    $region18: #{tpu_custom_call.1} parent=1 // pred_check
      _
    $region19: #{tpu_custom_call.1} parent=1 // pred_check_branch
      %39 = sbr.rel (0) target = $region21
    $region20: #{tpu_custom_call.1} parent=1 // pred_region
      _
    $region21: #{tpu_custom_call.1} parent=1 // pred_fallthru
      _
    // Predicated region
    $region22: #{tpu_custom_call.1} parent=1 // pred_check
      _
    $region23: #{tpu_custom_call.1} parent=1 // pred_check_branch
      %41 = sbr.rel (0) target = $region25
    $region24: #{tpu_custom_call.1} parent=1 // pred_region
      _
    $region25: #{tpu_custom_call.1} parent=1 // pred_fallthru
      _
    // Predicated region
    $region26: #{tpu_custom_call.1} parent=1 // pred_check
      _
    $region27: #{tpu_custom_call.1} parent=1 // pred_check_branch
      %43 = sbr.rel (0) target = $region29
    $region28: #{tpu_custom_call.1} parent=1 // pred_region
      %s45 = ssub.s32 4608, 4608
      %46 = vsyncadd [#allocation3], %s45
      %s47 = sshll.u32 [#allocation6], 4
      %s48 = int_to_ptr.vmem [resolvable:$true] %s47
      %53 = dma.hbm_to_vmem [thread:$0]  %s6, 4608, %s48, [#allocation3], 384, 384, 24
    $region29: #{tpu_custom_call.1} parent=1 // pred_fallthru
      _
    // Predicated region
    $region30: #{tpu_custom_call.1} parent=1 // pred_check
      _
    $region31: #{tpu_custom_call.1} parent=1 // pred_check_branch
      %55 = sbr.rel (0) target = $region33
    $region32: #{tpu_custom_call.1} parent=1 // pred_region
      _
    $region33: #{tpu_custom_call.1} parent=1 // pred_fallthru
      _
    // Predicated region
    $region34: #{tpu_custom_call.1} parent=1 // pred_check
      _
    $region35: #{tpu_custom_call.1} parent=1 // pred_check_branch
      %57 = sbr.rel (0) target = $region37
    $region36: #{tpu_custom_call.1} parent=1 // pred_region
      _
    $region37: #{tpu_custom_call.1} parent=1 // pred_fallthru
      _
    // Predicated region
    $region38: #{tpu_custom_call.1} parent=1 // pred_check
      _
    $region39: #{tpu_custom_call.1} parent=1 // pred_check_branch
      %59 = sbr.rel (0) target = $region41
    $region40: #{tpu_custom_call.1} parent=1 // pred_region
      _
    $region41: #{tpu_custom_call.1} parent=1 // pred_fallthru
      _
    // Predicated region
    $region42: #{tpu_custom_call.1} parent=1 // pred_check
      _
    $region43: #{tpu_custom_call.1} parent=1 // pred_check_branch
      %61 = sbr.rel (0) target = $region45
    $region44: #{tpu_custom_call.1} parent=1 // pred_region
      %62 = dma.done [#allocation5], 16
    $region45: #{tpu_custom_call.1} parent=1 // pred_fallthru
      _
    // Predicated region
    $region46: #{tpu_custom_call.1} parent=1 // pred_check
      _
    $region47: #{tpu_custom_call.1} parent=1 // pred_check_branch
      %64 = sbr.rel (0) target = $region49
    $region48: #{tpu_custom_call.1} parent=1 // pred_region
      %65 = dma.done [#allocation3], 4608
    $region49: #{tpu_custom_call.1} parent=1 // pred_fallthru
      _
    %66 = sfence
    %v67 = vld [vmem:[%s4] sm:$0xff]
    %v68 = vld [vmem:[%s4 + $0x8] sm:$0xff]
    %v69 = vld [vmem:[%s4 + $0x10] sm:$0xff]
    %v70 = vld [vmem:[%s4 + $0x18] sm:$0xff]
    %v71 = vld [vmem:[%s4 + $0x20] sm:$0xff]
    %v72 = vld [vmem:[%s4 + $0x28] sm:$0xff]
    %v73 = vld [vmem:[%s4 + $0x30] sm:$0xff]
    %v74 = vld [vmem:[%s4 + $0x38] sm:$0xff]
    %v75 = vld [vmem:[%s4 + $0x40] sm:$0xff]
    %v76 = vld [vmem:[%s4 + $0x48] sm:$0xff]
    %v77 = vld [vmem:[%s4 + $0x50] sm:$0xff]
    %v78 = vld [vmem:[%s4 + $0x58] sm:$0xff]
    %v79 = vld [vmem:[%s4 + $0x60] sm:$0xff]
    %v80 = vld [vmem:[%s4 + $0x68] sm:$0xff]
    %v81 = vld [vmem:[%s4 + $0x70] sm:$0xff]
    %v82 = vld [vmem:[%s4 + $0x78] sm:$0xff]
    %v83 = vld [vmem:[%s5] sm:$0xff]
    %v84 = vld [vmem:[%s5 + $0x8] sm:$0xff]
    %v85 = vld [vmem:[%s5 + $0x10] sm:$0xff]
    %v86 = vld [vmem:[%s5 + $0x18] sm:$0xff]
    %s87 = scalar_lea.vmem %s5, 32
    %v88 = vld [vmem:[%s87] sm:$0xff]
    %v89 = vld [vmem:[%s87 + $0x8] sm:$0xff]
    %v90 = vld [vmem:[%s87 + $0x10] sm:$0xff]
    %v91 = vld [vmem:[%s87 + $0x18] sm:$0xff]
    %s92 = scalar_lea.vmem %s5, 64
    %v93 = vld [vmem:[%s92] sm:$0xff]
    %v94 = vld [vmem:[%s92 + $0x8] sm:$0xff]
    %v95 = vld [vmem:[%s92 + $0x10] sm:$0xff]
    %v96 = vld [vmem:[%s92 + $0x18] sm:$0xff]
    %v97 = vld [vmem:[#allocation6] sm:$0xff]
    %v98 = vld [vmem:[#allocation6 + $0x8] sm:$0xff]
    %v99 = vld [vmem:[#allocation6 + $0x10] sm:$0xff]
    %v100 = vld [vmem:[#allocation6 + $0x18] sm:$0xff]
    %v101 = vld [vmem:[#allocation6 + $0x20] sm:$0xff]
    %v102 = vld [vmem:[#allocation6 + $0x28] sm:$0xff]
    %v103 = vld [vmem:[#allocation6 + $0x30] sm:$0xff]
    %v104 = vld [vmem:[#allocation6 + $0x38] sm:$0xff]
    %v105 = vld [vmem:[#allocation6 + $0x40] sm:$0xff]
    %v106 = vld [vmem:[#allocation6 + $0x48] sm:$0xff]
    %v107 = vld [vmem:[#allocation6 + $0x50] sm:$0xff]
    %v108 = vld [vmem:[#allocation6 + $0x58] sm:$0xff]
    %v109 = vld [vmem:[#allocation6 + $0x60] sm:$0xff]
    %v110 = vld [vmem:[#allocation6 + $0x68] sm:$0xff]
    %v111 = vld [vmem:[#allocation6 + $0x70] sm:$0xff]
    %v112 = vld [vmem:[#allocation6 + $0x78] sm:$0xff]
    %v113 = vld [vmem:[#allocation6 + $0x80] sm:$0xff]
    %v114 = vld [vmem:[#allocation6 + $0x88] sm:$0xff]
    %v115 = vld [vmem:[#allocation6 + $0x90] sm:$0xff]
    %v116 = vld [vmem:[#allocation6 + $0x98] sm:$0xff]
    %v117 = vld [vmem:[#allocation6 + $0xa0] sm:$0xff]
    %v118 = vld [vmem:[#allocation6 + $0xa8] sm:$0xff]
    %v119 = vld [vmem:[#allocation6 + $0xb0] sm:$0xff]
    %v120 = vld [vmem:[#allocation6 + $0xb8] sm:$0xff]
    %v121 = vld [vmem:[#allocation6 + $0xc0] sm:$0xff]
    %v122 = vld [vmem:[#allocation6 + $0xc8] sm:$0xff]
    %v123 = vld [vmem:[#allocation6 + $0xd0] sm:$0xff]
    %v124 = vld [vmem:[#allocation6 + $0xd8] sm:$0xff]
    %v125 = vld [vmem:[#allocation6 + $0xe0] sm:$0xff]
    %v126 = vld [vmem:[#allocation6 + $0xe8] sm:$0xff]
    %v127 = vld [vmem:[#allocation6 + $0xf0] sm:$0xff]
    %v128 = vld [vmem:[#allocation6 + $0xf8] sm:$0xff]
    %v129 = vld [vmem:[#allocation6 + $0x100] sm:$0xff]
    %v130 = vld [vmem:[#allocation6 + $0x108] sm:$0xff]
    %v131 = vld [vmem:[#allocation6 + $0x110] sm:$0xff]
    %v132 = vld [vmem:[#allocation6 + $0x118] sm:$0xff]
    %v133 = vld [vmem:[%s7] sm:$0x7]
    %v135 = vlaneseq
    %v136 = vshrl.u32 %v135, 7
    %v137 = vsub.s32 0, %v136
    %v138 = vrot.slane %v133, %v137
    %v139 = vlaneseq
    %v140 = vshrl.u32 %v139, 7
    %v141 = vsub.s32 1, %v140
    %v142 = vrot.slane %v133, %v141
    %v143 = vlaneseq
    %v144 = vshrl.u32 %v143, 7
    %v145 = vsub.s32 2, %v144
    %v146 = vrot.slane %v133, %v145
    %v150 = vld [vmem:[%s8] sm:$0xff]
    %v151 = vld [vmem:[%s8 + $0x8] sm:$0xff]
    %v152 = vld [vmem:[%s8 + $0x10] sm:$0xff]
    %v153 = vld [vmem:[%s8 + $0x18] sm:$0xff]
    %v154 = vld [vmem:[%s9] sm:$0x1]
    %v156 = vlaneseq
    %v157 = vshrl.u32 %v156, 7
    %v158 = vsub.s32 0, %v157
    %v159 = vrot.slane %v154, %v158
    %v161 = vlaneseq
    %v162 = vand.u32 %v161, 127
    %v163 = vld [vmem:[%s2] sm:$0x3]
    %s164 = scalar_lea.vmem %s2, 2
    %v165 = vld [vmem:[%s164] sm:$0x3]
    %s166 = scalar_lea.vmem %s2, 4
    %v167 = vld [vmem:[%s166] sm:$0x3]
    %v168 = vld [vmem:[%s3] sm:$0x3]
    %s169 = scalar_lea.vmem %s3, 2
    %v170 = vld [vmem:[%s169] sm:$0x3]
    %s171 = scalar_lea.vmem %s3, 4
    %v172 = vld [vmem:[%s171] sm:$0x3]
    %s173 = sld [smem:[#allocation2]]
    %p174 = scmp.gt.s32.totalorder %s173, 0
    %v175 = vld [vmem:[%s1] sm:$0x3]
    %vm176 = vcmask 1041408
    %v177 = vsel %vm176, %v175, -inf
    %178 = vmax.index.xlane.f32.xlu0 %v177
    %v179 = vpop.xlane.xlu0 %178
    %s180 = scalar_select %p174, 1, 0
    %v181 = vstv %s180
    %vm182 = vcmp.eq.s32.totalorder %v181, 1
    %v183 = vsel %vm182, %v179, 0
    %vm184 = vcmp.eq.s32.totalorder %v183, %v162
    %v185 = vsel %vm184, 1, 0
    %v186 = vcvt.s32.f32 %v185
    %187 = vmatprep.subr.mxu0 0.0
    %188 = vmatpush1.msra.mxu0 %v67
    %189 = vmatprep.subr.mxu0 0.0
    %190 = vmatpush1.msra.mxu0 %v68
    %191 = vmatprep.subr.mxu0 0.0
    %192 = vmatpush1.msra.mxu0 %v69
    %193 = vmatprep.subr.mxu0 0.0
    %194 = vmatpush1.msra.mxu0 %v70
    %195 = vmatprep.subr.mxu0 0.0
    %196 = vmatpush1.msra.mxu0 %v71
    %197 = vmatprep.subr.mxu0 0.0
    %198 = vmatpush1.msra.mxu0 %v72
    %199 = vmatprep.subr.mxu0 0.0
    %200 = vmatpush1.msra.mxu0 %v73
    %201 = vmatprep.subr.mxu0 0.0
    %202 = vmatpush1.msra.mxu0 %v74
    %203 = vmatprep.subr.mxu0 0.0
    %204 = vmatpush1.msra.mxu0 %v75
    %205 = vmatprep.subr.mxu0 0.0
    %206 = vmatpush1.msra.mxu0 %v76
    %207 = vmatprep.subr.mxu0 0.0
    %208 = vmatpush1.msra.mxu0 %v77
    %209 = vmatprep.subr.mxu0 0.0
    %210 = vmatpush1.msra.mxu0 %v78
    %211 = vmatprep.subr.mxu0 0.0
    %212 = vmatpush1.msra.mxu0 %v79
    %213 = vmatprep.subr.mxu0 0.0
    %214 = vmatpush1.msra.mxu0 %v80
    %215 = vmatprep.subr.mxu0 0.0
    %216 = vmatpush1.msra.mxu0 %v81
    %217 = vmatprep.subr.mxu0 0.0
    %218 = vmatpush1.msra.mxu0 %v82
    %219 = vmatprep.subr.mxu0 0.0
    %220 = vmatpush1.msra.mxu0 0.0
    %221 = vmatprep.subr.mxu0 0.0
    %222 = vmatpush1.msra.mxu0 0.0
    %223 = vmatprep.subr.mxu0 0.0
    %224 = vmatpush1.msra.mxu0 0.0
    %225 = vmatprep.subr.mxu0 0.0
    %226 = vmatpush1.msra.mxu0 0.0
    %227 = vmatprep.subr.mxu0 0.0
    %228 = vmatpush1.msra.mxu0 0.0
    %229 = vmatprep.subr.mxu0 0.0
    %230 = vmatpush1.msra.mxu0 0.0
    %231 = vmatprep.subr.mxu0 0.0
    %232 = vmatpush1.msra.mxu0 0.0
    %233 = vmatprep.subr.mxu0 0.0
    %234 = vmatpush1.msra.mxu0 0.0
    %235 = vmatprep.subr.mxu0 0.0
    %236 = vmatpush1.msra.mxu0 0.0
    %237 = vmatprep.subr.mxu0 0.0
    %238 = vmatpush1.msra.mxu0 0.0
    %239 = vmatprep.subr.mxu0 0.0
    %240 = vmatpush1.msra.mxu0 0.0
    %241 = vmatprep.subr.mxu0 0.0
    %242 = vmatpush1.msra.mxu0 0.0
    %243 = vmatprep.subr.mxu0 0.0
    %244 = vmatpush1.msra.mxu0 0.0
    %245 = vmatprep.subr.mxu0 0.0
    %246 = vmatpush1.msra.mxu0 0.0
    %247 = vmatprep.subr.mxu0 0.0
    %248 = vmatpush1.msra.mxu0 0.0
    %249 = vmatprep.subr.mxu0 0.0
    %250 = vmatpush1.msra.mxu0 0.0
    %251 = vmatprep.mubr.f32.mxu0 0.0
    %252 = vmatmul.mubr.f32.gmra.mrb[0].mxu0 %v186
    %v253 = vpop.f32.mrb[0].mxu0
    %v254 = vadd.f32 0.0, %v253
    %v255 = vpop.f32.mrb[0].mxu0
    %256 = vdwg.mxu0
    %258 = vrot.lane.b32.xlu0 %v165, 32
    %v259 = vpop.permute.xlu0 %258
    %262 = vrot.lane.b32.xlu0 %v167, 64
    %v263 = vpop.permute.xlu0 %262
    %vm265 = vcmask 261120
    %v266 = vsel %vm265, %v163, %v259
    %vm267 = vcmask 523264
    %v268 = vsel %vm267, %v266, %v263
    %vm269 = vcmask 785408
    %v271 = vsel %vm269, %v268, 0
    %273 = vmatprep.subr.mxu0 %v98
    %274 = vmatpush1.msra.mxu0 %v97
    %275 = vmatprep.subr.mxu0 %v101
    %276 = vmatpush1.msra.mxu0 %v100
    %277 = vmatprep.subr.mxu0 %v104
    %278 = vmatpush1.msra.mxu0 %v103
    %279 = vmatprep.subr.mxu0 %v107
    %280 = vmatpush1.msra.mxu0 %v106
    %281 = vmatprep.subr.mxu0 %v110
    %282 = vmatpush1.msra.mxu0 %v109
    %283 = vmatprep.subr.mxu0 %v113
    %284 = vmatpush1.msra.mxu0 %v112
    %285 = vmatprep.subr.mxu0 %v116
    %286 = vmatpush1.msra.mxu0 %v115
    %287 = vmatprep.subr.mxu0 %v119
    %288 = vmatpush1.msra.mxu0 %v118
    %289 = vmatprep.subr.mxu0 %v122
    %290 = vmatpush1.msra.mxu0 %v121
    %291 = vmatprep.subr.mxu0 %v125
    %292 = vmatpush1.msra.mxu0 %v124
    %293 = vmatprep.subr.mxu0 %v128
    %294 = vmatpush1.msra.mxu0 %v127
    %295 = vmatprep.subr.mxu0 %v131
    %296 = vmatpush1.msra.mxu0 %v130
    %297 = vmatprep.subr.mxu0 0.0
    %298 = vmatpush1.msra.mxu0 0.0
    %299 = vmatprep.subr.mxu0 0.0
    %300 = vmatpush1.msra.mxu0 0.0
    %301 = vmatprep.subr.mxu0 0.0
    %302 = vmatpush1.msra.mxu0 0.0
    %303 = vmatprep.subr.mxu0 0.0
    %304 = vmatpush1.msra.mxu0 0.0
    %305 = vmatprep.subr.mxu0 0.0
    %306 = vmatpush1.msra.mxu0 0.0
    %307 = vmatprep.subr.mxu0 0.0
    %308 = vmatpush1.msra.mxu0 0.0
    %309 = vmatprep.subr.mxu0 0.0
    %310 = vmatpush1.msra.mxu0 0.0
    %311 = vmatprep.subr.mxu0 0.0
    %312 = vmatpush1.msra.mxu0 0.0
    %313 = vmatprep.subr.mxu0 0.0
    %314 = vmatpush1.msra.mxu0 0.0
    %315 = vmatprep.subr.mxu0 0.0
    %316 = vmatpush1.msra.mxu0 0.0
    %317 = vmatprep.subr.mxu0 0.0
    %318 = vmatpush1.msra.mxu0 0.0
    %319 = vmatprep.subr.mxu0 0.0
    %320 = vmatpush1.msra.mxu0 0.0
    %321 = vmatprep.subr.mxu0 0.0
    %322 = vmatpush1.msra.mxu0 0.0
    %323 = vmatprep.subr.mxu0 0.0
    %324 = vmatpush1.msra.mxu0 0.0
    %325 = vmatprep.subr.mxu0 0.0
    %326 = vmatpush1.msra.mxu0 0.0
    %327 = vmatprep.subr.mxu0 0.0
    %328 = vmatpush1.msra.mxu0 0.0
    %329 = vmatprep.subr.mxu0 0.0
    %330 = vmatpush1.msra.mxu0 0.0
    %331 = vmatprep.subr.mxu0 0.0
    %332 = vmatpush1.msra.mxu0 0.0
    %333 = vmatprep.subr.mxu0 0.0
    %334 = vmatpush1.msra.mxu0 0.0
    %335 = vmatprep.subr.mxu0 0.0
    %336 = vmatpush1.msra.mxu0 0.0
    %337 = vmatprep.mubr.f32.mxu0 0.0
    %338 = vmatmul.mubr.f32.gmra.mrb[0].mxu0 %v271
    %v339 = vpop.f32.mrb[0].mxu0
    %v340 = vadd.f32 %v138, %v339
    %v341 = vpop.f32.mrb[0].mxu0
    %v342 = vadd.f32 %v142, %v341
    %343 = vdwg.mxu0
    %344 = vmatprep.subr.mxu0 0.0
    %345 = vmatpush1.msra.mxu0 %v99
    %346 = vmatprep.subr.mxu0 0.0
    %347 = vmatpush1.msra.mxu0 %v102
    %348 = vmatprep.subr.mxu0 0.0
    %349 = vmatpush1.msra.mxu0 %v105
    %350 = vmatprep.subr.mxu0 0.0
    %351 = vmatpush1.msra.mxu0 %v108
    %352 = vmatprep.subr.mxu0 0.0
    %353 = vmatpush1.msra.mxu0 %v111
    %354 = vmatprep.subr.mxu0 0.0
    %355 = vmatpush1.msra.mxu0 %v114
    %356 = vmatprep.subr.mxu0 0.0
    %357 = vmatpush1.msra.mxu0 %v117
    %358 = vmatprep.subr.mxu0 0.0
    %359 = vmatpush1.msra.mxu0 %v120
    %360 = vmatprep.subr.mxu0 0.0
    %361 = vmatpush1.msra.mxu0 %v123
    %362 = vmatprep.subr.mxu0 0.0
    %363 = vmatpush1.msra.mxu0 %v126
    %364 = vmatprep.subr.mxu0 0.0
    %365 = vmatpush1.msra.mxu0 %v129
    %366 = vmatprep.subr.mxu0 0.0
    %367 = vmatpush1.msra.mxu0 %v132
    %368 = vmatprep.subr.mxu0 0.0
    %369 = vmatpush1.msra.mxu0 0.0
    %370 = vmatprep.subr.mxu0 0.0
    %371 = vmatpush1.msra.mxu0 0.0
    %372 = vmatprep.subr.mxu0 0.0
    %373 = vmatpush1.msra.mxu0 0.0
    %374 = vmatprep.subr.mxu0 0.0
    %375 = vmatpush1.msra.mxu0 0.0
    %376 = vmatprep.subr.mxu0 0.0
    %377 = vmatpush1.msra.mxu0 0.0
    %378 = vmatprep.subr.mxu0 0.0
    %379 = vmatpush1.msra.mxu0 0.0
    %380 = vmatprep.subr.mxu0 0.0
    %381 = vmatpush1.msra.mxu0 0.0
    %382 = vmatprep.subr.mxu0 0.0
    %383 = vmatpush1.msra.mxu0 0.0
    %384 = vmatprep.subr.mxu0 0.0
    %385 = vmatpush1.msra.mxu0 0.0
    %386 = vmatprep.subr.mxu0 0.0
    %387 = vmatpush1.msra.mxu0 0.0
    %388 = vmatprep.subr.mxu0 0.0
    %389 = vmatpush1.msra.mxu0 0.0
    %390 = vmatprep.subr.mxu0 0.0
    %391 = vmatpush1.msra.mxu0 0.0
    %392 = vmatprep.subr.mxu0 0.0
    %393 = vmatpush1.msra.mxu0 0.0
    %394 = vmatprep.subr.mxu0 0.0
    %395 = vmatpush1.msra.mxu0 0.0
    %396 = vmatprep.subr.mxu0 0.0
    %397 = vmatpush1.msra.mxu0 0.0
    %398 = vmatprep.subr.mxu0 0.0
    %399 = vmatpush1.msra.mxu0 0.0
    %400 = vmatprep.subr.mxu0 0.0
    %401 = vmatpush1.msra.mxu0 0.0
    %402 = vmatprep.subr.mxu0 0.0
    %403 = vmatpush1.msra.mxu0 0.0
    %404 = vmatprep.subr.mxu0 0.0
    %405 = vmatpush1.msra.mxu0 0.0
    %406 = vmatprep.subr.mxu0 0.0
    %407 = vmatpush1.msra.mxu0 0.0
    %408 = vmatprep.mubr.f32.mxu0 0.0
    %409 = vmatmul.mubr.f32.gmra.mrb[0].mxu0 %v271
    %v410 = vpop.f32.mrb[0].mxu0
    %v411 = vadd.f32 %v146, %v410
    %v412 = vpop.f32.mrb[0].mxu0
    %413 = vdwg.mxu0
    %v415 = vsel %vm265, %v254, 0
    %417 = vmatprep.subr.mxu0 0.0
    %418 = vmatpush1.msra.mxu0 %v83
    %419 = vmatprep.subr.mxu0 0.0
    %420 = vmatpush1.msra.mxu0 %v84
    %421 = vmatprep.subr.mxu0 0.0
    %422 = vmatpush1.msra.mxu0 %v85
    %423 = vmatprep.subr.mxu0 0.0
    %424 = vmatpush1.msra.mxu0 %v86
    %425 = vmatprep.subr.mxu0 0.0
    %426 = vmatpush1.msra.mxu0 0.0
    %427 = vmatprep.subr.mxu0 0.0
    %428 = vmatpush1.msra.mxu0 0.0
    %429 = vmatprep.subr.mxu0 0.0
    %430 = vmatpush1.msra.mxu0 0.0
    %431 = vmatprep.subr.mxu0 0.0
    %432 = vmatpush1.msra.mxu0 0.0
    %433 = vmatprep.subr.mxu0 0.0
    %434 = vmatpush1.msra.mxu0 0.0
    %435 = vmatprep.subr.mxu0 0.0
    %436 = vmatpush1.msra.mxu0 0.0
    %437 = vmatprep.subr.mxu0 0.0
    %438 = vmatpush1.msra.mxu0 0.0
    %439 = vmatprep.subr.mxu0 0.0
    %440 = vmatpush1.msra.mxu0 0.0
    %441 = vmatprep.subr.mxu0 0.0
    %442 = vmatpush1.msra.mxu0 0.0
    %443 = vmatprep.subr.mxu0 0.0
    %444 = vmatpush1.msra.mxu0 0.0
    %445 = vmatprep.subr.mxu0 0.0
    %446 = vmatpush1.msra.mxu0 0.0
    %447 = vmatprep.subr.mxu0 0.0
    %448 = vmatpush1.msra.mxu0 0.0
    %449 = vmatprep.subr.mxu0 0.0
    %450 = vmatpush1.msra.mxu0 0.0
    %451 = vmatprep.subr.mxu0 0.0
    %452 = vmatpush1.msra.mxu0 0.0
    %453 = vmatprep.subr.mxu0 0.0
    %454 = vmatpush1.msra.mxu0 0.0
    %455 = vmatprep.subr.mxu0 0.0
    %456 = vmatpush1.msra.mxu0 0.0
    %457 = vmatprep.subr.mxu0 0.0
    %458 = vmatpush1.msra.mxu0 0.0
    %459 = vmatprep.subr.mxu0 0.0
    %460 = vmatpush1.msra.mxu0 0.0
    %461 = vmatprep.subr.mxu0 0.0
    %462 = vmatpush1.msra.mxu0 0.0
    %463 = vmatprep.subr.mxu0 0.0
    %464 = vmatpush1.msra.mxu0 0.0
    %465 = vmatprep.subr.mxu0 0.0
    %466 = vmatpush1.msra.mxu0 0.0
    %467 = vmatprep.subr.mxu0 0.0
    %468 = vmatpush1.msra.mxu0 0.0
    %469 = vmatprep.subr.mxu0 0.0
    %470 = vmatpush1.msra.mxu0 0.0
    %471 = vmatprep.subr.mxu0 0.0
    %472 = vmatpush1.msra.mxu0 0.0
    %473 = vmatprep.subr.mxu0 0.0
    %474 = vmatpush1.msra.mxu0 0.0
    %475 = vmatprep.subr.mxu0 0.0
    %476 = vmatpush1.msra.mxu0 0.0
    %477 = vmatprep.subr.mxu0 0.0
    %478 = vmatpush1.msra.mxu0 0.0
    %479 = vmatprep.subr.mxu0 0.0
    %480 = vmatpush1.msra.mxu0 0.0
    %481 = vmatprep.mubr.f32.mxu0 0.0
    %482 = vmatmul.mubr.f32.gmra.mrb[0].mxu0 %v415
    %v483 = vpop.f32.mrb[0].mxu0
    %v484 = vadd.f32 %v340, %v483
    %v485 = vpop.f32.mrb[0].mxu0
    %486 = vdwg.mxu0
    %v487 = vxor.u32 %v484, 2147483648
    %v488 = vmul.f32 %v487, 1.442695
    %v489 = vpow.pop %v488
    %v490 = vadd.f32 %v489, 1.0
    %v491 = vrcp.pop %v490
    %v492 = vmul.f32 1.0, %v491
    %v493 = vtanh.pop %v484
    %495 = vrot.lane.b32.xlu0 %v168, 32
    %v496 = vpop.permute.xlu0 %495
    %v498 = vmul.f32 %v492, %v496
    %500 = vrot.lane.b32.xlu0 %v493, 32
    %v501 = vpop.permute.xlu0 %500
    %v503 = vmul.f32 %v492, %v501
    %505 = vrot.lane.b32.xlu0 %v503, 32
    %v506 = vpop.permute.xlu0 %505
    %v508 = vadd.f32 %v498, %v506
    %v509 = vtanh.pop %v508
    %511 = vrot.lane.b32.xlu0 %v509, 32
    %v512 = vpop.permute.xlu0 %511
    %v514 = vmul.f32 %v492, %v512
    %516 = vrot.lane.b32.xlu0 %v514, 64
    %v517 = vpop.permute.xlu0 %516
    %v518 = vsel %vm265, %v517, 0
    %520 = vmatprep.subr.mxu0 0.0
    %521 = vmatpush1.msra.mxu0 %v88
    %522 = vmatprep.subr.mxu0 0.0
    %523 = vmatpush1.msra.mxu0 %v89
    %524 = vmatprep.subr.mxu0 0.0
    %525 = vmatpush1.msra.mxu0 %v90
    %526 = vmatprep.subr.mxu0 0.0
    %527 = vmatpush1.msra.mxu0 %v91
    %528 = vmatprep.subr.mxu0 0.0
    %529 = vmatpush1.msra.mxu0 0.0
    %530 = vmatprep.subr.mxu0 0.0
    %531 = vmatpush1.msra.mxu0 0.0
    %532 = vmatprep.subr.mxu0 0.0
    %533 = vmatpush1.msra.mxu0 0.0
    %534 = vmatprep.subr.mxu0 0.0
    %535 = vmatpush1.msra.mxu0 0.0
    %536 = vmatprep.subr.mxu0 0.0
    %537 = vmatpush1.msra.mxu0 0.0
    %538 = vmatprep.subr.mxu0 0.0
    %539 = vmatpush1.msra.mxu0 0.0
    %540 = vmatprep.subr.mxu0 0.0
    %541 = vmatpush1.msra.mxu0 0.0
    %542 = vmatprep.subr.mxu0 0.0
    %543 = vmatpush1.msra.mxu0 0.0
    %544 = vmatprep.subr.mxu0 0.0
    %545 = vmatpush1.msra.mxu0 0.0
    %546 = vmatprep.subr.mxu0 0.0
    %547 = vmatpush1.msra.mxu0 0.0
    %548 = vmatprep.subr.mxu0 0.0
    %549 = vmatpush1.msra.mxu0 0.0
    %550 = vmatprep.subr.mxu0 0.0
    %551 = vmatpush1.msra.mxu0 0.0
    %552 = vmatprep.subr.mxu0 0.0
    %553 = vmatpush1.msra.mxu0 0.0
    %554 = vmatprep.subr.mxu0 0.0
    %555 = vmatpush1.msra.mxu0 0.0
    %556 = vmatprep.subr.mxu0 0.0
    %557 = vmatpush1.msra.mxu0 0.0
    %558 = vmatprep.subr.mxu0 0.0
    %559 = vmatpush1.msra.mxu0 0.0
    %560 = vmatprep.subr.mxu0 0.0
    %561 = vmatpush1.msra.mxu0 0.0
    %562 = vmatprep.subr.mxu0 0.0
    %563 = vmatpush1.msra.mxu0 0.0
    %564 = vmatprep.subr.mxu0 0.0
    %565 = vmatpush1.msra.mxu0 0.0
    %566 = vmatprep.subr.mxu0 0.0
    %567 = vmatpush1.msra.mxu0 0.0
    %568 = vmatprep.subr.mxu0 0.0
    %569 = vmatpush1.msra.mxu0 0.0
    %570 = vmatprep.subr.mxu0 0.0
    %571 = vmatpush1.msra.mxu0 0.0
    %572 = vmatprep.subr.mxu0 0.0
    %573 = vmatpush1.msra.mxu0 0.0
    %574 = vmatprep.subr.mxu0 0.0
    %575 = vmatpush1.msra.mxu0 0.0
    %576 = vmatprep.subr.mxu0 0.0
    %577 = vmatpush1.msra.mxu0 0.0
    %578 = vmatprep.subr.mxu0 0.0
    %579 = vmatpush1.msra.mxu0 0.0
    %580 = vmatprep.subr.mxu0 0.0
    %581 = vmatpush1.msra.mxu0 0.0
    %582 = vmatprep.subr.mxu0 0.0
    %583 = vmatpush1.msra.mxu0 0.0
    %584 = vmatprep.mubr.f32.mxu0 0.0
    %585 = vmatmul.mubr.f32.gmra.mrb[0].mxu0 %v518
    %v586 = vpop.f32.mrb[0].mxu0
    %v587 = vadd.f32 %v342, %v586
    %v588 = vpop.f32.mrb[0].mxu0
    %589 = vdwg.mxu0
    %v590 = vxor.u32 %v587, 2147483648
    %v591 = vmul.f32 %v590, 1.442695
    %v592 = vpow.pop %v591
    %v593 = vadd.f32 %v592, 1.0
    %v594 = vrcp.pop %v593
    %v595 = vmul.f32 1.0, %v594
    %v596 = vtanh.pop %v587
    %598 = vrot.lane.b32.xlu0 %v170, 32
    %v599 = vpop.permute.xlu0 %598
    %v601 = vmul.f32 %v595, %v599
    %603 = vrot.lane.b32.xlu0 %v596, 32
    %v604 = vpop.permute.xlu0 %603
    %v606 = vmul.f32 %v595, %v604
    %608 = vrot.lane.b32.xlu0 %v606, 32
    %v609 = vpop.permute.xlu0 %608
    %v611 = vadd.f32 %v601, %v609
    %v612 = vtanh.pop %v611
    %614 = vrot.lane.b32.xlu0 %v612, 32
    %v615 = vpop.permute.xlu0 %614
    %v617 = vmul.f32 %v595, %v615
    %619 = vrot.lane.b32.xlu0 %v617, 64
    %v620 = vpop.permute.xlu0 %619
    %v621 = vsel %vm265, %v620, 0
    %623 = vmatprep.subr.mxu0 0.0
    %624 = vmatpush1.msra.mxu0 %v93
    %625 = vmatprep.subr.mxu0 0.0
    %626 = vmatpush1.msra.mxu0 %v94
    %627 = vmatprep.subr.mxu0 0.0
    %628 = vmatpush1.msra.mxu0 %v95
    %629 = vmatprep.subr.mxu0 0.0
    %630 = vmatpush1.msra.mxu0 %v96
    %631 = vmatprep.subr.mxu0 0.0
    %632 = vmatpush1.msra.mxu0 0.0
    %633 = vmatprep.subr.mxu0 0.0
    %634 = vmatpush1.msra.mxu0 0.0
    %635 = vmatprep.subr.mxu0 0.0
    %636 = vmatpush1.msra.mxu0 0.0
    %637 = vmatprep.subr.mxu0 0.0
    %638 = vmatpush1.msra.mxu0 0.0
    %639 = vmatprep.subr.mxu0 0.0
    %640 = vmatpush1.msra.mxu0 0.0
    %641 = vmatprep.subr.mxu0 0.0
    %642 = vmatpush1.msra.mxu0 0.0
    %643 = vmatprep.subr.mxu0 0.0
    %644 = vmatpush1.msra.mxu0 0.0
    %645 = vmatprep.subr.mxu0 0.0
    %646 = vmatpush1.msra.mxu0 0.0
    %647 = vmatprep.subr.mxu0 0.0
    %648 = vmatpush1.msra.mxu0 0.0
    %649 = vmatprep.subr.mxu0 0.0
    %650 = vmatpush1.msra.mxu0 0.0
    %651 = vmatprep.subr.mxu0 0.0
    %652 = vmatpush1.msra.mxu0 0.0
    %653 = vmatprep.subr.mxu0 0.0
    %654 = vmatpush1.msra.mxu0 0.0
    %655 = vmatprep.subr.mxu0 0.0
    %656 = vmatpush1.msra.mxu0 0.0
    %657 = vmatprep.subr.mxu0 0.0
    %658 = vmatpush1.msra.mxu0 0.0
    %659 = vmatprep.subr.mxu0 0.0
    %660 = vmatpush1.msra.mxu0 0.0
    %661 = vmatprep.subr.mxu0 0.0
    %662 = vmatpush1.msra.mxu0 0.0
    %663 = vmatprep.subr.mxu0 0.0
    %664 = vmatpush1.msra.mxu0 0.0
    %665 = vmatprep.subr.mxu0 0.0
    %666 = vmatpush1.msra.mxu0 0.0
    %667 = vmatprep.subr.mxu0 0.0
    %668 = vmatpush1.msra.mxu0 0.0
    %669 = vmatprep.subr.mxu0 0.0
    %670 = vmatpush1.msra.mxu0 0.0
    %671 = vmatprep.subr.mxu0 0.0
    %672 = vmatpush1.msra.mxu0 0.0
    %673 = vmatprep.subr.mxu0 0.0
    %674 = vmatpush1.msra.mxu0 0.0
    %675 = vmatprep.subr.mxu0 0.0
    %676 = vmatpush1.msra.mxu0 0.0
    %677 = vmatprep.subr.mxu0 0.0
    %678 = vmatpush1.msra.mxu0 0.0
    %679 = vmatprep.subr.mxu0 0.0
    %680 = vmatpush1.msra.mxu0 0.0
    %681 = vmatprep.subr.mxu0 0.0
    %682 = vmatpush1.msra.mxu0 0.0
    %683 = vmatprep.subr.mxu0 0.0
    %684 = vmatpush1.msra.mxu0 0.0
    %685 = vmatprep.subr.mxu0 0.0
    %686 = vmatpush1.msra.mxu0 0.0
    %687 = vmatprep.mubr.f32.mxu0 0.0
    %688 = vmatmul.mubr.f32.gmra.mrb[0].mxu0 %v621
    %v689 = vpop.f32.mrb[0].mxu0
    %v690 = vadd.f32 %v411, %v689
    %v691 = vpop.f32.mrb[0].mxu0
    %692 = vdwg.mxu0
    %v693 = vxor.u32 %v690, 2147483648
    %v694 = vmul.f32 %v693, 1.442695
    %v695 = vpow.pop %v694
    %v696 = vadd.f32 %v695, 1.0
    %v697 = vrcp.pop %v696
    %v698 = vmul.f32 1.0, %v697
    %v699 = vtanh.pop %v690
    %701 = vrot.lane.b32.xlu0 %v172, 32
    %v702 = vpop.permute.xlu0 %701
    %v704 = vmul.f32 %v698, %v702
    %706 = vrot.lane.b32.xlu0 %v699, 32
    %v707 = vpop.permute.xlu0 %706
    %v709 = vmul.f32 %v698, %v707
    %711 = vrot.lane.b32.xlu0 %v709, 32
    %v712 = vpop.permute.xlu0 %711
    %v714 = vadd.f32 %v704, %v712
    %v715 = vtanh.pop %v714
    %717 = vrot.lane.b32.xlu0 %v715, 32
    %v718 = vpop.permute.xlu0 %717
    %v720 = vmul.f32 %v698, %v718
    %722 = vrot.lane.b32.xlu0 %v720, 64
    %v723 = vpop.permute.xlu0 %722
    %v724 = vsel %vm265, %v723, 0
    %726 = vmatprep.subr.mxu0 0.0
    %727 = vmatpush1.msra.mxu0 %v150
    %728 = vmatprep.subr.mxu0 0.0
    %729 = vmatpush1.msra.mxu0 %v151
    %730 = vmatprep.subr.mxu0 0.0
    %731 = vmatpush1.msra.mxu0 %v152
    %732 = vmatprep.subr.mxu0 0.0
    %733 = vmatpush1.msra.mxu0 %v153
    %734 = vmatprep.subr.mxu0 0.0
    %735 = vmatpush1.msra.mxu0 0.0
    %736 = vmatprep.subr.mxu0 0.0
    %737 = vmatpush1.msra.mxu0 0.0
    %738 = vmatprep.subr.mxu0 0.0
    %739 = vmatpush1.msra.mxu0 0.0
    %740 = vmatprep.subr.mxu0 0.0
    %741 = vmatpush1.msra.mxu0 0.0
    %742 = vmatprep.subr.mxu0 0.0
    %743 = vmatpush1.msra.mxu0 0.0
    %744 = vmatprep.subr.mxu0 0.0
    %745 = vmatpush1.msra.mxu0 0.0
    %746 = vmatprep.subr.mxu0 0.0
    %747 = vmatpush1.msra.mxu0 0.0
    %748 = vmatprep.subr.mxu0 0.0
    %749 = vmatpush1.msra.mxu0 0.0
    %750 = vmatprep.subr.mxu0 0.0
    %751 = vmatpush1.msra.mxu0 0.0
    %752 = vmatprep.subr.mxu0 0.0
    %753 = vmatpush1.msra.mxu0 0.0
    %754 = vmatprep.subr.mxu0 0.0
    %755 = vmatpush1.msra.mxu0 0.0
    %756 = vmatprep.subr.mxu0 0.0
    %757 = vmatpush1.msra.mxu0 0.0
    %758 = vmatprep.subr.mxu0 0.0
    %759 = vmatpush1.msra.mxu0 0.0
    %760 = vmatprep.subr.mxu0 0.0
    %761 = vmatpush1.msra.mxu0 0.0
    %762 = vmatprep.subr.mxu0 0.0
    %763 = vmatpush1.msra.mxu0 0.0
    %764 = vmatprep.subr.mxu0 0.0
    %765 = vmatpush1.msra.mxu0 0.0
    %766 = vmatprep.subr.mxu0 0.0
    %767 = vmatpush1.msra.mxu0 0.0
    %768 = vmatprep.subr.mxu0 0.0
    %769 = vmatpush1.msra.mxu0 0.0
    %770 = vmatprep.subr.mxu0 0.0
    %771 = vmatpush1.msra.mxu0 0.0
    %772 = vmatprep.subr.mxu0 0.0
    %773 = vmatpush1.msra.mxu0 0.0
    %774 = vmatprep.subr.mxu0 0.0
    %775 = vmatpush1.msra.mxu0 0.0
    %776 = vmatprep.subr.mxu0 0.0
    %777 = vmatpush1.msra.mxu0 0.0
    %778 = vmatprep.subr.mxu0 0.0
    %779 = vmatpush1.msra.mxu0 0.0
    %780 = vmatprep.subr.mxu0 0.0
    %781 = vmatpush1.msra.mxu0 0.0
    %782 = vmatprep.subr.mxu0 0.0
    %783 = vmatpush1.msra.mxu0 0.0
    %784 = vmatprep.subr.mxu0 0.0
    %785 = vmatpush1.msra.mxu0 0.0
    %786 = vmatprep.subr.mxu0 0.0
    %787 = vmatpush1.msra.mxu0 0.0
    %788 = vmatprep.subr.mxu0 0.0
    %789 = vmatpush1.msra.mxu0 0.0
    %790 = vmatprep.mubr.f32.mxu0 0.0
    %791 = vmatmul.mubr.f32.gmra.mrb[0].mxu0 %v724
    %v792 = vpop.f32.mrb[0].mxu0
    %v793 = vadd.f32 %v159, %v792
    %v794 = vpop.f32.mrb[0].mxu0
    %795 = vdwg.mxu0
    %796 = vst [vmem:[#allocation7] sm:$0x3] %v793
    %v797 = vsel %vm176, %v793, -inf
    %798 = vmax.index.xlane.f32.xlu0 %v797
    %v799 = vpop.xlane.xlu0 %798
    %s800 = sld [smem:[#allocation2 + $0x1]]
    %p801 = scmp.gt.s32.totalorder %s800, 0
    %s802 = scalar_lea.vmem %s1, 2
    %v803 = vld [vmem:[%s802] sm:$0x3]
    %v804 = vsel %vm176, %v803, -inf
    %805 = vmax.index.xlane.f32.xlu0 %v804
    %v806 = vpop.xlane.xlu0 %805
    %s807 = scalar_select %p801, 1, 0
    %v808 = vstv %s807
    %vm809 = vcmp.eq.s32.totalorder %v808, 1
    %v810 = vsel %vm809, %v806, %v799
    %vm811 = vcmp.eq.s32.totalorder %v810, %v162
    %v812 = vsel %vm811, 1, 0
    %v813 = vcvt.s32.f32 %v812
    %814 = vmatprep.subr.mxu0 0.0
    %815 = vmatpush1.msra.mxu0 %v67
    %816 = vmatprep.subr.mxu0 0.0
    %817 = vmatpush1.msra.mxu0 %v68
    %818 = vmatprep.subr.mxu0 0.0
    %819 = vmatpush1.msra.mxu0 %v69
    %820 = vmatprep.subr.mxu0 0.0
    %821 = vmatpush1.msra.mxu0 %v70
    %822 = vmatprep.subr.mxu0 0.0
    %823 = vmatpush1.msra.mxu0 %v71
    %824 = vmatprep.subr.mxu0 0.0
    %825 = vmatpush1.msra.mxu0 %v72
    %826 = vmatprep.subr.mxu0 0.0
    %827 = vmatpush1.msra.mxu0 %v73
    %828 = vmatprep.subr.mxu0 0.0
    %829 = vmatpush1.msra.mxu0 %v74
    %830 = vmatprep.subr.mxu0 0.0
    %831 = vmatpush1.msra.mxu0 %v75
    %832 = vmatprep.subr.mxu0 0.0
    %833 = vmatpush1.msra.mxu0 %v76
    %834 = vmatprep.subr.mxu0 0.0
    %835 = vmatpush1.msra.mxu0 %v77
    %836 = vmatprep.subr.mxu0 0.0
    %837 = vmatpush1.msra.mxu0 %v78
    %838 = vmatprep.subr.mxu0 0.0
    %839 = vmatpush1.msra.mxu0 %v79
    %840 = vmatprep.subr.mxu0 0.0
    %841 = vmatpush1.msra.mxu0 %v80
    %842 = vmatprep.subr.mxu0 0.0
    %843 = vmatpush1.msra.mxu0 %v81
    %844 = vmatprep.subr.mxu0 0.0
    %845 = vmatpush1.msra.mxu0 %v82
    %846 = vmatprep.subr.mxu0 0.0
    %847 = vmatpush1.msra.mxu0 0.0
    %848 = vmatprep.subr.mxu0 0.0
    %849 = vmatpush1.msra.mxu0 0.0
    %850 = vmatprep.subr.mxu0 0.0
    %851 = vmatpush1.msra.mxu0 0.0
    %852 = vmatprep.subr.mxu0 0.0
    %853 = vmatpush1.msra.mxu0 0.0
    %854 = vmatprep.subr.mxu0 0.0
    %855 = vmatpush1.msra.mxu0 0.0
    %856 = vmatprep.subr.mxu0 0.0
    %857 = vmatpush1.msra.mxu0 0.0
    %858 = vmatprep.subr.mxu0 0.0
    %859 = vmatpush1.msra.mxu0 0.0
    %860 = vmatprep.subr.mxu0 0.0
    %861 = vmatpush1.msra.mxu0 0.0
    %862 = vmatprep.subr.mxu0 0.0
    %863 = vmatpush1.msra.mxu0 0.0
    %864 = vmatprep.subr.mxu0 0.0
    %865 = vmatpush1.msra.mxu0 0.0
    %866 = vmatprep.subr.mxu0 0.0
    %867 = vmatpush1.msra.mxu0 0.0
    %868 = vmatprep.subr.mxu0 0.0
    %869 = vmatpush1.msra.mxu0 0.0
    %870 = vmatprep.subr.mxu0 0.0
    %871 = vmatpush1.msra.mxu0 0.0
    %872 = vmatprep.subr.mxu0 0.0
    %873 = vmatpush1.msra.mxu0 0.0
    %874 = vmatprep.subr.mxu0 0.0
    %875 = vmatpush1.msra.mxu0 0.0
    %876 = vmatprep.subr.mxu0 0.0
    %877 = vmatpush1.msra.mxu0 0.0
    %878 = vmatprep.mubr.f32.mxu0 0.0
    %879 = vmatmul.mubr.f32.gmra.mrb[0].mxu0 %v813
    %v880 = vpop.f32.mrb[0].mxu0
    %v881 = vadd.f32 0.0, %v880
    %v882 = vpop.f32.mrb[0].mxu0
    %883 = vdwg.mxu0
    %885 = vrot.lane.b32.xlu0 %v617, 96
    %v886 = vpop.permute.xlu0 %885
    %v888 = vsel %vm265, %v517, %v886
    %v889 = vsel %vm267, %v888, %v720
    %v891 = vsel %vm269, %v889, 0
    %893 = vmatprep.subr.mxu0 %v98
    %894 = vmatpush1.msra.mxu0 %v97
    %895 = vmatprep.subr.mxu0 %v101
    %896 = vmatpush1.msra.mxu0 %v100
    %897 = vmatprep.subr.mxu0 %v104
    %898 = vmatpush1.msra.mxu0 %v103
    %899 = vmatprep.subr.mxu0 %v107
    %900 = vmatpush1.msra.mxu0 %v106
    %901 = vmatprep.subr.mxu0 %v110
    %902 = vmatpush1.msra.mxu0 %v109
    %903 = vmatprep.subr.mxu0 %v113
    %904 = vmatpush1.msra.mxu0 %v112
    %905 = vmatprep.subr.mxu0 %v116
    %906 = vmatpush1.msra.mxu0 %v115
    %907 = vmatprep.subr.mxu0 %v119
    %908 = vmatpush1.msra.mxu0 %v118
    %909 = vmatprep.subr.mxu0 %v122
    %910 = vmatpush1.msra.mxu0 %v121
    %911 = vmatprep.subr.mxu0 %v125
    %912 = vmatpush1.msra.mxu0 %v124
    %913 = vmatprep.subr.mxu0 %v128
    %914 = vmatpush1.msra.mxu0 %v127
    %915 = vmatprep.subr.mxu0 %v131
    %916 = vmatpush1.msra.mxu0 %v130
    %917 = vmatprep.subr.mxu0 0.0
    %918 = vmatpush1.msra.mxu0 0.0
    %919 = vmatprep.subr.mxu0 0.0
    %920 = vmatpush1.msra.mxu0 0.0
    %921 = vmatprep.subr.mxu0 0.0
    %922 = vmatpush1.msra.mxu0 0.0
    %923 = vmatprep.subr.mxu0 0.0
    %924 = vmatpush1.msra.mxu0 0.0
    %925 = vmatprep.subr.mxu0 0.0
    %926 = vmatpush1.msra.mxu0 0.0
    %927 = vmatprep.subr.mxu0 0.0
    %928 = vmatpush1.msra.mxu0 0.0
    %929 = vmatprep.subr.mxu0 0.0
    %930 = vmatpush1.msra.mxu0 0.0
    %931 = vmatprep.subr.mxu0 0.0
    %932 = vmatpush1.msra.mxu0 0.0
    %933 = vmatprep.subr.mxu0 0.0
    %934 = vmatpush1.msra.mxu0 0.0
    %935 = vmatprep.subr.mxu0 0.0
    %936 = vmatpush1.msra.mxu0 0.0
    %937 = vmatprep.subr.mxu0 0.0
    %938 = vmatpush1.msra.mxu0 0.0
    %939 = vmatprep.subr.mxu0 0.0
    %940 = vmatpush1.msra.mxu0 0.0
    %941 = vmatprep.subr.mxu0 0.0
    %942 = vmatpush1.msra.mxu0 0.0
    %943 = vmatprep.subr.mxu0 0.0
    %944 = vmatpush1.msra.mxu0 0.0
    %945 = vmatprep.subr.mxu0 0.0
    %946 = vmatpush1.msra.mxu0 0.0
    %947 = vmatprep.subr.mxu0 0.0
    %948 = vmatpush1.msra.mxu0 0.0
    %949 = vmatprep.subr.mxu0 0.0
    %950 = vmatpush1.msra.mxu0 0.0
    %951 = vmatprep.subr.mxu0 0.0
    %952 = vmatpush1.msra.mxu0 0.0
    %953 = vmatprep.subr.mxu0 0.0
    %954 = vmatpush1.msra.mxu0 0.0
    %955 = vmatprep.subr.mxu0 0.0
    %956 = vmatpush1.msra.mxu0 0.0
    %957 = vmatprep.mubr.f32.mxu0 0.0
    %958 = vmatmul.mubr.f32.gmra.mrb[0].mxu0 %v891
    %v959 = vpop.f32.mrb[0].mxu0
    %v960 = vadd.f32 %v138, %v959
    %v961 = vpop.f32.mrb[0].mxu0
    %v962 = vadd.f32 %v142, %v961
    %963 = vdwg.mxu0
    %964 = vmatprep.subr.mxu0 0.0
    %965 = vmatpush1.msra.mxu0 %v99
    %966 = vmatprep.subr.mxu0 0.0
    %967 = vmatpush1.msra.mxu0 %v102
    %968 = vmatprep.subr.mxu0 0.0
    %969 = vmatpush1.msra.mxu0 %v105
    %970 = vmatprep.subr.mxu0 0.0
    %971 = vmatpush1.msra.mxu0 %v108
    %972 = vmatprep.subr.mxu0 0.0
    %973 = vmatpush1.msra.mxu0 %v111
    %974 = vmatprep.subr.mxu0 0.0
    %975 = vmatpush1.msra.mxu0 %v114
    %976 = vmatprep.subr.mxu0 0.0
    %977 = vmatpush1.msra.mxu0 %v117
    %978 = vmatprep.subr.mxu0 0.0
    %979 = vmatpush1.msra.mxu0 %v120
    %980 = vmatprep.subr.mxu0 0.0
    %981 = vmatpush1.msra.mxu0 %v123
    %982 = vmatprep.subr.mxu0 0.0
    %983 = vmatpush1.msra.mxu0 %v126
    %984 = vmatprep.subr.mxu0 0.0
    %985 = vmatpush1.msra.mxu0 %v129
    %986 = vmatprep.subr.mxu0 0.0
    %987 = vmatpush1.msra.mxu0 %v132
    %988 = vmatprep.subr.mxu0 0.0
    %989 = vmatpush1.msra.mxu0 0.0
    %990 = vmatprep.subr.mxu0 0.0
    %991 = vmatpush1.msra.mxu0 0.0
    %992 = vmatprep.subr.mxu0 0.0
    %993 = vmatpush1.msra.mxu0 0.0
    %994 = vmatprep.subr.mxu0 0.0
    %995 = vmatpush1.msra.mxu0 0.0
    %996 = vmatprep.subr.mxu0 0.0
    %997 = vmatpush1.msra.mxu0 0.0
    %998 = vmatprep.subr.mxu0 0.0
    %999 = vmatpush1.msra.mxu0 0.0
    %1000 = vmatprep.subr.mxu0 0.0
    %1001 = vmatpush1.msra.mxu0 0.0
    %1002 = vmatprep.subr.mxu0 0.0
    %1003 = vmatpush1.msra.mxu0 0.0
    %1004 = vmatprep.subr.mxu0 0.0
    %1005 = vmatpush1.msra.mxu0 0.0
    %1006 = vmatprep.subr.mxu0 0.0
    %1007 = vmatpush1.msra.mxu0 0.0
    %1008 = vmatprep.subr.mxu0 0.0
    %1009 = vmatpush1.msra.mxu0 0.0
    %1010 = vmatprep.subr.mxu0 0.0
    %1011 = vmatpush1.msra.mxu0 0.0
    %1012 = vmatprep.subr.mxu0 0.0
    %1013 = vmatpush1.msra.mxu0 0.0
    %1014 = vmatprep.subr.mxu0 0.0
    %1015 = vmatpush1.msra.mxu0 0.0
    %1016 = vmatprep.subr.mxu0 0.0
    %1017 = vmatpush1.msra.mxu0 0.0
    %1018 = vmatprep.subr.mxu0 0.0
    %1019 = vmatpush1.msra.mxu0 0.0
    %1020 = vmatprep.subr.mxu0 0.0
    %1021 = vmatpush1.msra.mxu0 0.0
    %1022 = vmatprep.subr.mxu0 0.0
    %1023 = vmatpush1.msra.mxu0 0.0
    %1024 = vmatprep.subr.mxu0 0.0
    %1025 = vmatpush1.msra.mxu0 0.0
    %1026 = vmatprep.subr.mxu0 0.0
    %1027 = vmatpush1.msra.mxu0 0.0
    %1028 = vmatprep.mubr.f32.mxu0 0.0
    %1029 = vmatmul.mubr.f32.gmra.mrb[0].mxu0 %v891
    %v1030 = vpop.f32.mrb[0].mxu0
    %v1031 = vadd.f32 %v146, %v1030
    %v1032 = vpop.f32.mrb[0].mxu0
    %1033 = vdwg.mxu0
    %v1035 = vsel %vm265, %v881, 0
    %1037 = vmatprep.subr.mxu0 0.0
    %1038 = vmatpush1.msra.mxu0 %v83
    %1039 = vmatprep.subr.mxu0 0.0
    %1040 = vmatpush1.msra.mxu0 %v84
    %1041 = vmatprep.subr.mxu0 0.0
    %1042 = vmatpush1.msra.mxu0 %v85
    %1043 = vmatprep.subr.mxu0 0.0
    %1044 = vmatpush1.msra.mxu0 %v86
    %1045 = vmatprep.subr.mxu0 0.0
    %1046 = vmatpush1.msra.mxu0 0.0
    %1047 = vmatprep.subr.mxu0 0.0
    %1048 = vmatpush1.msra.mxu0 0.0
    %1049 = vmatprep.subr.mxu0 0.0
    %1050 = vmatpush1.msra.mxu0 0.0
    %1051 = vmatprep.subr.mxu0 0.0
    %1052 = vmatpush1.msra.mxu0 0.0
    %1053 = vmatprep.subr.mxu0 0.0
    %1054 = vmatpush1.msra.mxu0 0.0
    %1055 = vmatprep.subr.mxu0 0.0
    %1056 = vmatpush1.msra.mxu0 0.0
    %1057 = vmatprep.subr.mxu0 0.0
    %1058 = vmatpush1.msra.mxu0 0.0
    %1059 = vmatprep.subr.mxu0 0.0
    %1060 = vmatpush1.msra.mxu0 0.0
    %1061 = vmatprep.subr.mxu0 0.0
    %1062 = vmatpush1.msra.mxu0 0.0
    %1063 = vmatprep.subr.mxu0 0.0
    %1064 = vmatpush1.msra.mxu0 0.0
    %1065 = vmatprep.subr.mxu0 0.0
    %1066 = vmatpush1.msra.mxu0 0.0
    %1067 = vmatprep.subr.mxu0 0.0
    %1068 = vmatpush1.msra.mxu0 0.0
    %1069 = vmatprep.subr.mxu0 0.0
    %1070 = vmatpush1.msra.mxu0 0.0
    %1071 = vmatprep.subr.mxu0 0.0
    %1072 = vmatpush1.msra.mxu0 0.0
    %1073 = vmatprep.subr.mxu0 0.0
    %1074 = vmatpush1.msra.mxu0 0.0
    %1075 = vmatprep.subr.mxu0 0.0
    %1076 = vmatpush1.msra.mxu0 0.0
    %1077 = vmatprep.subr.mxu0 0.0
    %1078 = vmatpush1.msra.mxu0 0.0
    %1079 = vmatprep.subr.mxu0 0.0
    %1080 = vmatpush1.msra.mxu0 0.0
    %1081 = vmatprep.subr.mxu0 0.0
    %1082 = vmatpush1.msra.mxu0 0.0
    %1083 = vmatprep.subr.mxu0 0.0
    %1084 = vmatpush1.msra.mxu0 0.0
    %1085 = vmatprep.subr.mxu0 0.0
    %1086 = vmatpush1.msra.mxu0 0.0
    %1087 = vmatprep.subr.mxu0 0.0
    %1088 = vmatpush1.msra.mxu0 0.0
    %1089 = vmatprep.subr.mxu0 0.0
    %1090 = vmatpush1.msra.mxu0 0.0
    %1091 = vmatprep.subr.mxu0 0.0
    %1092 = vmatpush1.msra.mxu0 0.0
    %1093 = vmatprep.subr.mxu0 0.0
    %1094 = vmatpush1.msra.mxu0 0.0
    %1095 = vmatprep.subr.mxu0 0.0
    %1096 = vmatpush1.msra.mxu0 0.0
    %1097 = vmatprep.subr.mxu0 0.0
    %1098 = vmatpush1.msra.mxu0 0.0
    %1099 = vmatprep.subr.mxu0 0.0
    %1100 = vmatpush1.msra.mxu0 0.0
    %1101 = vmatprep.mubr.f32.mxu0 0.0
    %1102 = vmatmul.mubr.f32.gmra.mrb[0].mxu0 %v1035
    %v1103 = vpop.f32.mrb[0].mxu0
    %v1104 = vadd.f32 %v960, %v1103
    %v1105 = vpop.f32.mrb[0].mxu0
    %1106 = vdwg.mxu0
    %v1107 = vxor.u32 %v1104, 2147483648
    %v1108 = vmul.f32 %v1107, 1.442695
    %v1109 = vpow.pop %v1108
    %v1110 = vadd.f32 %v1109, 1.0
    %v1111 = vrcp.pop %v1110
    %v1112 = vmul.f32 1.0, %v1111
    %v1113 = vtanh.pop %v1104
    %v1114 = vmul.f32 %v1112, %v508
    %1116 = vrot.lane.b32.xlu0 %v1113, 32
    %v1117 = vpop.permute.xlu0 %1116
    %v1119 = vmul.f32 %v1112, %v1117
    %1121 = vrot.lane.b32.xlu0 %v1119, 32
    %v1122 = vpop.permute.xlu0 %1121
    %v1124 = vadd.f32 %v1114, %v1122
    %v1125 = vtanh.pop %v1124
    %1127 = vrot.lane.b32.xlu0 %v1125, 32
    %v1128 = vpop.permute.xlu0 %1127
    %v1130 = vmul.f32 %v1112, %v1128
    %1132 = vrot.lane.b32.xlu0 %v1130, 64
    %v1133 = vpop.permute.xlu0 %1132
    %v1134 = vsel %vm265, %v1133, 0
    %1136 = vmatprep.subr.mxu0 0.0
    %1137 = vmatpush1.msra.mxu0 %v88
    %1138 = vmatprep.subr.mxu0 0.0
    %1139 = vmatpush1.msra.mxu0 %v89
    %1140 = vmatprep.subr.mxu0 0.0
    %1141 = vmatpush1.msra.mxu0 %v90
    %1142 = vmatprep.subr.mxu0 0.0
    %1143 = vmatpush1.msra.mxu0 %v91
    %1144 = vmatprep.subr.mxu0 0.0
    %1145 = vmatpush1.msra.mxu0 0.0
    %1146 = vmatprep.subr.mxu0 0.0
    %1147 = vmatpush1.msra.mxu0 0.0
    %1148 = vmatprep.subr.mxu0 0.0
    %1149 = vmatpush1.msra.mxu0 0.0
    %1150 = vmatprep.subr.mxu0 0.0
    %1151 = vmatpush1.msra.mxu0 0.0
    %1152 = vmatprep.subr.mxu0 0.0
    %1153 = vmatpush1.msra.mxu0 0.0
    %1154 = vmatprep.subr.mxu0 0.0
    %1155 = vmatpush1.msra.mxu0 0.0
    %1156 = vmatprep.subr.mxu0 0.0
    %1157 = vmatpush1.msra.mxu0 0.0
    %1158 = vmatprep.subr.mxu0 0.0
    %1159 = vmatpush1.msra.mxu0 0.0
    %1160 = vmatprep.subr.mxu0 0.0
    %1161 = vmatpush1.msra.mxu0 0.0
    %1162 = vmatprep.subr.mxu0 0.0
    %1163 = vmatpush1.msra.mxu0 0.0
    %1164 = vmatprep.subr.mxu0 0.0
    %1165 = vmatpush1.msra.mxu0 0.0
    %1166 = vmatprep.subr.mxu0 0.0
    %1167 = vmatpush1.msra.mxu0 0.0
    %1168 = vmatprep.subr.mxu0 0.0
    %1169 = vmatpush1.msra.mxu0 0.0
    %1170 = vmatprep.subr.mxu0 0.0
    %1171 = vmatpush1.msra.mxu0 0.0
    %1172 = vmatprep.subr.mxu0 0.0
    %1173 = vmatpush1.msra.mxu0 0.0
    %1174 = vmatprep.subr.mxu0 0.0
    %1175 = vmatpush1.msra.mxu0 0.0
    %1176 = vmatprep.subr.mxu0 0.0
    %1177 = vmatpush1.msra.mxu0 0.0
    %1178 = vmatprep.subr.mxu0 0.0
    %1179 = vmatpush1.msra.mxu0 0.0
    %1180 = vmatprep.subr.mxu0 0.0
    %1181 = vmatpush1.msra.mxu0 0.0
    %1182 = vmatprep.subr.mxu0 0.0
    %1183 = vmatpush1.msra.mxu0 0.0
    %1184 = vmatprep.subr.mxu0 0.0
    %1185 = vmatpush1.msra.mxu0 0.0
    %1186 = vmatprep.subr.mxu0 0.0
    %1187 = vmatpush1.msra.mxu0 0.0
    %1188 = vmatprep.subr.mxu0 0.0
    %1189 = vmatpush1.msra.mxu0 0.0
    %1190 = vmatprep.subr.mxu0 0.0
    %1191 = vmatpush1.msra.mxu0 0.0
    %1192 = vmatprep.subr.mxu0 0.0
    %1193 = vmatpush1.msra.mxu0 0.0
    %1194 = vmatprep.subr.mxu0 0.0
    %1195 = vmatpush1.msra.mxu0 0.0
    %1196 = vmatprep.subr.mxu0 0.0
    %1197 = vmatpush1.msra.mxu0 0.0
    %1198 = vmatprep.subr.mxu0 0.0
    %1199 = vmatpush1.msra.mxu0 0.0
    %1200 = vmatprep.mubr.f32.mxu0 0.0
    %1201 = vmatmul.mubr.f32.gmra.mrb[0].mxu0 %v1134
    %v1202 = vpop.f32.mrb[0].mxu0
    %v1203 = vadd.f32 %v962, %v1202
    %v1204 = vpop.f32.mrb[0].mxu0
    %1205 = vdwg.mxu0
    %v1206 = vxor.u32 %v1203, 2147483648
    %v1207 = vmul.f32 %v1206, 1.442695
    %v1208 = vpow.pop %v1207
    %v1209 = vadd.f32 %v1208, 1.0
    %v1210 = vrcp.pop %v1209
    %v1211 = vmul.f32 1.0, %v1210
    %v1212 = vtanh.pop %v1203
    %v1213 = vmul.f32 %v1211, %v611
    %1215 = vrot.lane.b32.xlu0 %v1212, 32
    %v1216 = vpop.permute.xlu0 %1215
    %v1218 = vmul.f32 %v1211, %v1216
    %1220 = vrot.lane.b32.xlu0 %v1218, 32
    %v1221 = vpop.permute.xlu0 %1220
    %v1223 = vadd.f32 %v1213, %v1221
    %v1224 = vtanh.pop %v1223
    %1226 = vrot.lane.b32.xlu0 %v1224, 32
    %v1227 = vpop.permute.xlu0 %1226
    %v1229 = vmul.f32 %v1211, %v1227
    %1231 = vrot.lane.b32.xlu0 %v1229, 64
    %v1232 = vpop.permute.xlu0 %1231
    %v1233 = vsel %vm265, %v1232, 0
    %1235 = vmatprep.subr.mxu0 0.0
    %1236 = vmatpush1.msra.mxu0 %v93
    %1237 = vmatprep.subr.mxu0 0.0
    %1238 = vmatpush1.msra.mxu0 %v94
    %1239 = vmatprep.subr.mxu0 0.0
    %1240 = vmatpush1.msra.mxu0 %v95
    %1241 = vmatprep.subr.mxu0 0.0
    %1242 = vmatpush1.msra.mxu0 %v96
    %1243 = vmatprep.subr.mxu0 0.0
    %1244 = vmatpush1.msra.mxu0 0.0
    %1245 = vmatprep.subr.mxu0 0.0
    %1246 = vmatpush1.msra.mxu0 0.0
    %1247 = vmatprep.subr.mxu0 0.0
    %1248 = vmatpush1.msra.mxu0 0.0
    %1249 = vmatprep.subr.mxu0 0.0
    %1250 = vmatpush1.msra.mxu0 0.0
    %1251 = vmatprep.subr.mxu0 0.0
    %1252 = vmatpush1.msra.mxu0 0.0
    %1253 = vmatprep.subr.mxu0 0.0
    %1254 = vmatpush1.msra.mxu0 0.0
    %1255 = vmatprep.subr.mxu0 0.0
    %1256 = vmatpush1.msra.mxu0 0.0
    %1257 = vmatprep.subr.mxu0 0.0
    %1258 = vmatpush1.msra.mxu0 0.0
    %1259 = vmatprep.subr.mxu0 0.0
    %1260 = vmatpush1.msra.mxu0 0.0
    %1261 = vmatprep.subr.mxu0 0.0
    %1262 = vmatpush1.msra.mxu0 0.0
    %1263 = vmatprep.subr.mxu0 0.0
    %1264 = vmatpush1.msra.mxu0 0.0
    %1265 = vmatprep.subr.mxu0 0.0
    %1266 = vmatpush1.msra.mxu0 0.0
    %1267 = vmatprep.subr.mxu0 0.0
    %1268 = vmatpush1.msra.mxu0 0.0
    %1269 = vmatprep.subr.mxu0 0.0
    %1270 = vmatpush1.msra.mxu0 0.0
    %1271 = vmatprep.subr.mxu0 0.0
    %1272 = vmatpush1.msra.mxu0 0.0
    %1273 = vmatprep.subr.mxu0 0.0
    %1274 = vmatpush1.msra.mxu0 0.0
    %1275 = vmatprep.subr.mxu0 0.0
    %1276 = vmatpush1.msra.mxu0 0.0
    %1277 = vmatprep.subr.mxu0 0.0
    %1278 = vmatpush1.msra.mxu0 0.0
    %1279 = vmatprep.subr.mxu0 0.0
    %1280 = vmatpush1.msra.mxu0 0.0
    %1281 = vmatprep.subr.mxu0 0.0
    %1282 = vmatpush1.msra.mxu0 0.0
    %1283 = vmatprep.subr.mxu0 0.0
    %1284 = vmatpush1.msra.mxu0 0.0
    %1285 = vmatprep.subr.mxu0 0.0
    %1286 = vmatpush1.msra.mxu0 0.0
    %1287 = vmatprep.subr.mxu0 0.0
    %1288 = vmatpush1.msra.mxu0 0.0
    %1289 = vmatprep.subr.mxu0 0.0
    %1290 = vmatpush1.msra.mxu0 0.0
    %1291 = vmatprep.subr.mxu0 0.0
    %1292 = vmatpush1.msra.mxu0 0.0
    %1293 = vmatprep.subr.mxu0 0.0
    %1294 = vmatpush1.msra.mxu0 0.0
    %1295 = vmatprep.subr.mxu0 0.0
    %1296 = vmatpush1.msra.mxu0 0.0
    %1297 = vmatprep.subr.mxu0 0.0
    %1298 = vmatpush1.msra.mxu0 0.0
    %1299 = vmatprep.mubr.f32.mxu0 0.0
    %1300 = vmatmul.mubr.f32.gmra.mrb[0].mxu0 %v1233
    %v1301 = vpop.f32.mrb[0].mxu0
    %v1302 = vadd.f32 %v1031, %v1301
    %v1303 = vpop.f32.mrb[0].mxu0
    %1304 = vdwg.mxu0
    %v1305 = vxor.u32 %v1302, 2147483648
    %v1306 = vmul.f32 %v1305, 1.442695
    %v1307 = vpow.pop %v1306
    %v1308 = vadd.f32 %v1307, 1.0
    %v1309 = vrcp.pop %v1308
    %v1310 = vmul.f32 1.0, %v1309
    %v1311 = vtanh.pop %v1302
    %v1312 = vmul.f32 %v1310, %v714
    %1314 = vrot.lane.b32.xlu0 %v1311, 32
    %v1315 = vpop.permute.xlu0 %1314
    %v1317 = vmul.f32 %v1310, %v1315
    %1319 = vrot.lane.b32.xlu0 %v1317, 32
    %v1320 = vpop.permute.xlu0 %1319
    %v1322 = vadd.f32 %v1312, %v1320
    %v1323 = vtanh.pop %v1322
    %1325 = vrot.lane.b32.xlu0 %v1323, 32
    %v1326 = vpop.permute.xlu0 %1325
    %v1328 = vmul.f32 %v1310, %v1326
    %1330 = vrot.lane.b32.xlu0 %v1328, 64
    %v1331 = vpop.permute.xlu0 %1330
    %v1332 = vsel %vm265, %v1331, 0
    %1334 = vmatprep.subr.mxu0 0.0
    %1335 = vmatpush1.msra.mxu0 %v150
    %1336 = vmatprep.subr.mxu0 0.0
    %1337 = vmatpush1.msra.mxu0 %v151
    %1338 = vmatprep.subr.mxu0 0.0
    %1339 = vmatpush1.msra.mxu0 %v152
    %1340 = vmatprep.subr.mxu0 0.0
    %1341 = vmatpush1.msra.mxu0 %v153
    %1342 = vmatprep.subr.mxu0 0.0
    %1343 = vmatpush1.msra.mxu0 0.0
    %1344 = vmatprep.subr.mxu0 0.0
    %1345 = vmatpush1.msra.mxu0 0.0
    %1346 = vmatprep.subr.mxu0 0.0
    %1347 = vmatpush1.msra.mxu0 0.0
    %1348 = vmatprep.subr.mxu0 0.0
    %1349 = vmatpush1.msra.mxu0 0.0
    %1350 = vmatprep.subr.mxu0 0.0
    %1351 = vmatpush1.msra.mxu0 0.0
    %1352 = vmatprep.subr.mxu0 0.0
    %1353 = vmatpush1.msra.mxu0 0.0
    %1354 = vmatprep.subr.mxu0 0.0
    %1355 = vmatpush1.msra.mxu0 0.0
    %1356 = vmatprep.subr.mxu0 0.0
    %1357 = vmatpush1.msra.mxu0 0.0
    %1358 = vmatprep.subr.mxu0 0.0
    %1359 = vmatpush1.msra.mxu0 0.0
    %1360 = vmatprep.subr.mxu0 0.0
    %1361 = vmatpush1.msra.mxu0 0.0
    %1362 = vmatprep.subr.mxu0 0.0
    %1363 = vmatpush1.msra.mxu0 0.0
    %1364 = vmatprep.subr.mxu0 0.0
    %1365 = vmatpush1.msra.mxu0 0.0
    %1366 = vmatprep.subr.mxu0 0.0
    %1367 = vmatpush1.msra.mxu0 0.0
    %1368 = vmatprep.subr.mxu0 0.0
    %1369 = vmatpush1.msra.mxu0 0.0
    %1370 = vmatprep.subr.mxu0 0.0
    %1371 = vmatpush1.msra.mxu0 0.0
    %1372 = vmatprep.subr.mxu0 0.0
    %1373 = vmatpush1.msra.mxu0 0.0
    %1374 = vmatprep.subr.mxu0 0.0
    %1375 = vmatpush1.msra.mxu0 0.0
    %1376 = vmatprep.subr.mxu0 0.0
    %1377 = vmatpush1.msra.mxu0 0.0
    %1378 = vmatprep.subr.mxu0 0.0
    %1379 = vmatpush1.msra.mxu0 0.0
    %1380 = vmatprep.subr.mxu0 0.0
    %1381 = vmatpush1.msra.mxu0 0.0
    %1382 = vmatprep.subr.mxu0 0.0
    %1383 = vmatpush1.msra.mxu0 0.0
    %1384 = vmatprep.subr.mxu0 0.0
    %1385 = vmatpush1.msra.mxu0 0.0
    %1386 = vmatprep.subr.mxu0 0.0
    %1387 = vmatpush1.msra.mxu0 0.0
    %1388 = vmatprep.subr.mxu0 0.0
    %1389 = vmatpush1.msra.mxu0 0.0
    %1390 = vmatprep.subr.mxu0 0.0
    %1391 = vmatpush1.msra.mxu0 0.0
    %1392 = vmatprep.subr.mxu0 0.0
    %1393 = vmatpush1.msra.mxu0 0.0
    %1394 = vmatprep.subr.mxu0 0.0
    %1395 = vmatpush1.msra.mxu0 0.0
    %1396 = vmatprep.subr.mxu0 0.0
    %1397 = vmatpush1.msra.mxu0 0.0
    %1398 = vmatprep.mubr.f32.mxu0 0.0
    %1399 = vmatmul.mubr.f32.gmra.mrb[0].mxu0 %v1332
    %v1400 = vpop.f32.mrb[0].mxu0
    %v1401 = vadd.f32 %v159, %v1400
    %v1402 = vpop.f32.mrb[0].mxu0
    %1403 = vdwg.mxu0
    %s1404 = scalar_lea.vmem [#allocation7], 2
    %1405 = vst [vmem:[%s1404] sm:$0x3] %v1401
    %v1406 = vsel %vm176, %v1401, -inf
    %1407 = vmax.index.xlane.f32.xlu0 %v1406
    %v1408 = vpop.xlane.xlu0 %1407
    %s1409 = sld [smem:[#allocation2 + $0x2]]
    %p1410 = scmp.gt.s32.totalorder %s1409, 0
    %s1411 = scalar_lea.vmem %s1, 4
    %v1412 = vld [vmem:[%s1411] sm:$0x3]
    %v1413 = vsel %vm176, %v1412, -inf
    %1414 = vmax.index.xlane.f32.xlu0 %v1413
    %v1415 = vpop.xlane.xlu0 %1414
    %s1416 = scalar_select %p1410, 1, 0
    %v1417 = vstv %s1416
    %vm1418 = vcmp.eq.s32.totalorder %v1417, 1
    %v1419 = vsel %vm1418, %v1415, %v1408
    %vm1420 = vcmp.eq.s32.totalorder %v1419, %v162
    %v1421 = vsel %vm1420, 1, 0
    %v1422 = vcvt.s32.f32 %v1421
    %1423 = vmatprep.subr.mxu0 0.0
    %1424 = vmatpush1.msra.mxu0 %v67
    %1425 = vmatprep.subr.mxu0 0.0
    %1426 = vmatpush1.msra.mxu0 %v68
    %1427 = vmatprep.subr.mxu0 0.0
    %1428 = vmatpush1.msra.mxu0 %v69
    %1429 = vmatprep.subr.mxu0 0.0
    %1430 = vmatpush1.msra.mxu0 %v70
    %1431 = vmatprep.subr.mxu0 0.0
    %1432 = vmatpush1.msra.mxu0 %v71
    %1433 = vmatprep.subr.mxu0 0.0
    %1434 = vmatpush1.msra.mxu0 %v72
    %1435 = vmatprep.subr.mxu0 0.0
    %1436 = vmatpush1.msra.mxu0 %v73
    %1437 = vmatprep.subr.mxu0 0.0
    %1438 = vmatpush1.msra.mxu0 %v74
    %1439 = vmatprep.subr.mxu0 0.0
    %1440 = vmatpush1.msra.mxu0 %v75
    %1441 = vmatprep.subr.mxu0 0.0
    %1442 = vmatpush1.msra.mxu0 %v76
    %1443 = vmatprep.subr.mxu0 0.0
    %1444 = vmatpush1.msra.mxu0 %v77
    %1445 = vmatprep.subr.mxu0 0.0
    %1446 = vmatpush1.msra.mxu0 %v78
    %1447 = vmatprep.subr.mxu0 0.0
    %1448 = vmatpush1.msra.mxu0 %v79
    %1449 = vmatprep.subr.mxu0 0.0
    %1450 = vmatpush1.msra.mxu0 %v80
    %1451 = vmatprep.subr.mxu0 0.0
    %1452 = vmatpush1.msra.mxu0 %v81
    %1453 = vmatprep.subr.mxu0 0.0
    %1454 = vmatpush1.msra.mxu0 %v82
    %1455 = vmatprep.subr.mxu0 0.0
    %1456 = vmatpush1.msra.mxu0 0.0
    %1457 = vmatprep.subr.mxu0 0.0
    %1458 = vmatpush1.msra.mxu0 0.0
    %1459 = vmatprep.subr.mxu0 0.0
    %1460 = vmatpush1.msra.mxu0 0.0
    %1461 = vmatprep.subr.mxu0 0.0
    %1462 = vmatpush1.msra.mxu0 0.0
    %1463 = vmatprep.subr.mxu0 0.0
    %1464 = vmatpush1.msra.mxu0 0.0
    %1465 = vmatprep.subr.mxu0 0.0
    %1466 = vmatpush1.msra.mxu0 0.0
    %1467 = vmatprep.subr.mxu0 0.0
    %1468 = vmatpush1.msra.mxu0 0.0
    %1469 = vmatprep.subr.mxu0 0.0
    %1470 = vmatpush1.msra.mxu0 0.0
    %1471 = vmatprep.subr.mxu0 0.0
    %1472 = vmatpush1.msra.mxu0 0.0
    %1473 = vmatprep.subr.mxu0 0.0
    %1474 = vmatpush1.msra.mxu0 0.0
    %1475 = vmatprep.subr.mxu0 0.0
    %1476 = vmatpush1.msra.mxu0 0.0
    %1477 = vmatprep.subr.mxu0 0.0
    %1478 = vmatpush1.msra.mxu0 0.0
    %1479 = vmatprep.subr.mxu0 0.0
    %1480 = vmatpush1.msra.mxu0 0.0
    %1481 = vmatprep.subr.mxu0 0.0
    %1482 = vmatpush1.msra.mxu0 0.0
    %1483 = vmatprep.subr.mxu0 0.0
    %1484 = vmatpush1.msra.mxu0 0.0
    %1485 = vmatprep.subr.mxu0 0.0
    %1486 = vmatpush1.msra.mxu0 0.0
    %1487 = vmatprep.mubr.f32.mxu0 0.0
    %1488 = vmatmul.mubr.f32.gmra.mrb[0].mxu0 %v1422
    %v1489 = vpop.f32.mrb[0].mxu0
    %v1490 = vadd.f32 0.0, %v1489
    %v1491 = vpop.f32.mrb[0].mxu0
    %1492 = vdwg.mxu0
    %1494 = vrot.lane.b32.xlu0 %v1229, 96
    %v1495 = vpop.permute.xlu0 %1494
    %v1497 = vsel %vm265, %v1133, %v1495
    %v1498 = vsel %vm267, %v1497, %v1328
    %v1500 = vsel %vm269, %v1498, 0
    %1502 = vmatprep.subr.mxu0 %v98
    %1503 = vmatpush1.msra.mxu0 %v97
    %1504 = vmatprep.subr.mxu0 %v101
    %1505 = vmatpush1.msra.mxu0 %v100
    %1506 = vmatprep.subr.mxu0 %v104
    %1507 = vmatpush1.msra.mxu0 %v103
    %1508 = vmatprep.subr.mxu0 %v107
    %1509 = vmatpush1.msra.mxu0 %v106
    %1510 = vmatprep.subr.mxu0 %v110
    %1511 = vmatpush1.msra.mxu0 %v109
    %1512 = vmatprep.subr.mxu0 %v113
    %1513 = vmatpush1.msra.mxu0 %v112
    %1514 = vmatprep.subr.mxu0 %v116
    %1515 = vmatpush1.msra.mxu0 %v115
    %1516 = vmatprep.subr.mxu0 %v119
    %1517 = vmatpush1.msra.mxu0 %v118
    %1518 = vmatprep.subr.mxu0 %v122
    %1519 = vmatpush1.msra.mxu0 %v121
    %1520 = vmatprep.subr.mxu0 %v125
    %1521 = vmatpush1.msra.mxu0 %v124
    %1522 = vmatprep.subr.mxu0 %v128
    %1523 = vmatpush1.msra.mxu0 %v127
    %1524 = vmatprep.subr.mxu0 %v131
    %1525 = vmatpush1.msra.mxu0 %v130
    %1526 = vmatprep.subr.mxu0 0.0
    %1527 = vmatpush1.msra.mxu0 0.0
    %1528 = vmatprep.subr.mxu0 0.0
    %1529 = vmatpush1.msra.mxu0 0.0
    %1530 = vmatprep.subr.mxu0 0.0
    %1531 = vmatpush1.msra.mxu0 0.0
    %1532 = vmatprep.subr.mxu0 0.0
    %1533 = vmatpush1.msra.mxu0 0.0
    %1534 = vmatprep.subr.mxu0 0.0
    %1535 = vmatpush1.msra.mxu0 0.0
    %1536 = vmatprep.subr.mxu0 0.0
    %1537 = vmatpush1.msra.mxu0 0.0
    %1538 = vmatprep.subr.mxu0 0.0
    %1539 = vmatpush1.msra.mxu0 0.0
    %1540 = vmatprep.subr.mxu0 0.0
    %1541 = vmatpush1.msra.mxu0 0.0
    %1542 = vmatprep.subr.mxu0 0.0
    %1543 = vmatpush1.msra.mxu0 0.0
    %1544 = vmatprep.subr.mxu0 0.0
    %1545 = vmatpush1.msra.mxu0 0.0
    %1546 = vmatprep.subr.mxu0 0.0
    %1547 = vmatpush1.msra.mxu0 0.0
    %1548 = vmatprep.subr.mxu0 0.0
    %1549 = vmatpush1.msra.mxu0 0.0
    %1550 = vmatprep.subr.mxu0 0.0
    %1551 = vmatpush1.msra.mxu0 0.0
    %1552 = vmatprep.subr.mxu0 0.0
    %1553 = vmatpush1.msra.mxu0 0.0
    %1554 = vmatprep.subr.mxu0 0.0
    %1555 = vmatpush1.msra.mxu0 0.0
    %1556 = vmatprep.subr.mxu0 0.0
    %1557 = vmatpush1.msra.mxu0 0.0
    %1558 = vmatprep.subr.mxu0 0.0
    %1559 = vmatpush1.msra.mxu0 0.0
    %1560 = vmatprep.subr.mxu0 0.0
    %1561 = vmatpush1.msra.mxu0 0.0
    %1562 = vmatprep.subr.mxu0 0.0
    %1563 = vmatpush1.msra.mxu0 0.0
    %1564 = vmatprep.subr.mxu0 0.0
    %1565 = vmatpush1.msra.mxu0 0.0
    %1566 = vmatprep.mubr.f32.mxu0 0.0
    %1567 = vmatmul.mubr.f32.gmra.mrb[0].mxu0 %v1500
    %v1568 = vpop.f32.mrb[0].mxu0
    %v1569 = vadd.f32 %v138, %v1568
    %v1570 = vpop.f32.mrb[0].mxu0
    %v1571 = vadd.f32 %v142, %v1570
    %1572 = vdwg.mxu0
    %1573 = vmatprep.subr.mxu0 0.0
    %1574 = vmatpush1.msra.mxu0 %v99
    %1575 = vmatprep.subr.mxu0 0.0
    %1576 = vmatpush1.msra.mxu0 %v102
    %1577 = vmatprep.subr.mxu0 0.0
    %1578 = vmatpush1.msra.mxu0 %v105
    %1579 = vmatprep.subr.mxu0 0.0
    %1580 = vmatpush1.msra.mxu0 %v108
    %1581 = vmatprep.subr.mxu0 0.0
    %1582 = vmatpush1.msra.mxu0 %v111
    %1583 = vmatprep.subr.mxu0 0.0
    %1584 = vmatpush1.msra.mxu0 %v114
    %1585 = vmatprep.subr.mxu0 0.0
    %1586 = vmatpush1.msra.mxu0 %v117
    %1587 = vmatprep.subr.mxu0 0.0
    %1588 = vmatpush1.msra.mxu0 %v120
    %1589 = vmatprep.subr.mxu0 0.0
    %1590 = vmatpush1.msra.mxu0 %v123
    %1591 = vmatprep.subr.mxu0 0.0
    %1592 = vmatpush1.msra.mxu0 %v126
    %1593 = vmatprep.subr.mxu0 0.0
    %1594 = vmatpush1.msra.mxu0 %v129
    %1595 = vmatprep.subr.mxu0 0.0
    %1596 = vmatpush1.msra.mxu0 %v132
    %1597 = vmatprep.subr.mxu0 0.0
    %1598 = vmatpush1.msra.mxu0 0.0
    %1599 = vmatprep.subr.mxu0 0.0
    %1600 = vmatpush1.msra.mxu0 0.0
    %1601 = vmatprep.subr.mxu0 0.0
    %1602 = vmatpush1.msra.mxu0 0.0
    %1603 = vmatprep.subr.mxu0 0.0
    %1604 = vmatpush1.msra.mxu0 0.0
    %1605 = vmatprep.subr.mxu0 0.0
    %1606 = vmatpush1.msra.mxu0 0.0
    %1607 = vmatprep.subr.mxu0 0.0
    %1608 = vmatpush1.msra.mxu0 0.0
    %1609 = vmatprep.subr.mxu0 0.0
    %1610 = vmatpush1.msra.mxu0 0.0
    %1611 = vmatprep.subr.mxu0 0.0
    %1612 = vmatpush1.msra.mxu0 0.0
    %1613 = vmatprep.subr.mxu0 0.0
    %1614 = vmatpush1.msra.mxu0 0.0
    %1615 = vmatprep.subr.mxu0 0.0
    %1616 = vmatpush1.msra.mxu0 0.0
    %1617 = vmatprep.subr.mxu0 0.0
    %1618 = vmatpush1.msra.mxu0 0.0
    %1619 = vmatprep.subr.mxu0 0.0
    %1620 = vmatpush1.msra.mxu0 0.0
    %1621 = vmatprep.subr.mxu0 0.0
    %1622 = vmatpush1.msra.mxu0 0.0
    %1623 = vmatprep.subr.mxu0 0.0
    %1624 = vmatpush1.msra.mxu0 0.0
    %1625 = vmatprep.subr.mxu0 0.0
    %1626 = vmatpush1.msra.mxu0 0.0
    %1627 = vmatprep.subr.mxu0 0.0
    %1628 = vmatpush1.msra.mxu0 0.0
    %1629 = vmatprep.subr.mxu0 0.0
    %1630 = vmatpush1.msra.mxu0 0.0
    %1631 = vmatprep.subr.mxu0 0.0
    %1632 = vmatpush1.msra.mxu0 0.0
    %1633 = vmatprep.subr.mxu0 0.0
    %1634 = vmatpush1.msra.mxu0 0.0
    %1635 = vmatprep.subr.mxu0 0.0
    %1636 = vmatpush1.msra.mxu0 0.0
    %1637 = vmatprep.mubr.f32.mxu0 0.0
    %1638 = vmatmul.mubr.f32.gmra.mrb[0].mxu0 %v1500
    %v1639 = vpop.f32.mrb[0].mxu0
    %v1640 = vadd.f32 %v146, %v1639
    %v1641 = vpop.f32.mrb[0].mxu0
    %1642 = vdwg.mxu0
    %v1644 = vsel %vm265, %v1490, 0
    %1646 = vmatprep.subr.mxu0 0.0
    %1647 = vmatpush1.msra.mxu0 %v83
    %1648 = vmatprep.subr.mxu0 0.0
    %1649 = vmatpush1.msra.mxu0 %v84
    %1650 = vmatprep.subr.mxu0 0.0
    %1651 = vmatpush1.msra.mxu0 %v85
    %1652 = vmatprep.subr.mxu0 0.0
    %1653 = vmatpush1.msra.mxu0 %v86
    %1654 = vmatprep.subr.mxu0 0.0
    %1655 = vmatpush1.msra.mxu0 0.0
    %1656 = vmatprep.subr.mxu0 0.0
    %1657 = vmatpush1.msra.mxu0 0.0
    %1658 = vmatprep.subr.mxu0 0.0
    %1659 = vmatpush1.msra.mxu0 0.0
    %1660 = vmatprep.subr.mxu0 0.0
    %1661 = vmatpush1.msra.mxu0 0.0
    %1662 = vmatprep.subr.mxu0 0.0
    %1663 = vmatpush1.msra.mxu0 0.0
    %1664 = vmatprep.subr.mxu0 0.0
    %1665 = vmatpush1.msra.mxu0 0.0
    %1666 = vmatprep.subr.mxu0 0.0
    %1667 = vmatpush1.msra.mxu0 0.0
    %1668 = vmatprep.subr.mxu0 0.0
    %1669 = vmatpush1.msra.mxu0 0.0
    %1670 = vmatprep.subr.mxu0 0.0
    %1671 = vmatpush1.msra.mxu0 0.0
    %1672 = vmatprep.subr.mxu0 0.0
    %1673 = vmatpush1.msra.mxu0 0.0
    %1674 = vmatprep.subr.mxu0 0.0
    %1675 = vmatpush1.msra.mxu0 0.0
    %1676 = vmatprep.subr.mxu0 0.0
    %1677 = vmatpush1.msra.mxu0 0.0
    %1678 = vmatprep.subr.mxu0 0.0
    %1679 = vmatpush1.msra.mxu0 0.0
    %1680 = vmatprep.subr.mxu0 0.0
    %1681 = vmatpush1.msra.mxu0 0.0
    %1682 = vmatprep.subr.mxu0 0.0
    %1683 = vmatpush1.msra.mxu0 0.0
    %1684 = vmatprep.subr.mxu0 0.0
    %1685 = vmatpush1.msra.mxu0 0.0
    %1686 = vmatprep.subr.mxu0 0.0
    %1687 = vmatpush1.msra.mxu0 0.0
    %1688 = vmatprep.subr.mxu0 0.0
    %1689 = vmatpush1.msra.mxu0 0.0
    %1690 = vmatprep.subr.mxu0 0.0
    %1691 = vmatpush1.msra.mxu0 0.0
    %1692 = vmatprep.subr.mxu0 0.0
    %1693 = vmatpush1.msra.mxu0 0.0
    %1694 = vmatprep.subr.mxu0 0.0
    %1695 = vmatpush1.msra.mxu0 0.0
    %1696 = vmatprep.subr.mxu0 0.0
    %1697 = vmatpush1.msra.mxu0 0.0
    %1698 = vmatprep.subr.mxu0 0.0
    %1699 = vmatpush1.msra.mxu0 0.0
    %1700 = vmatprep.subr.mxu0 0.0
    %1701 = vmatpush1.msra.mxu0 0.0
    %1702 = vmatprep.subr.mxu0 0.0
    %1703 = vmatpush1.msra.mxu0 0.0
    %1704 = vmatprep.subr.mxu0 0.0
    %1705 = vmatpush1.msra.mxu0 0.0
    %1706 = vmatprep.subr.mxu0 0.0
    %1707 = vmatpush1.msra.mxu0 0.0
    %1708 = vmatprep.subr.mxu0 0.0
    %1709 = vmatpush1.msra.mxu0 0.0
    %1710 = vmatprep.mubr.f32.mxu0 0.0
    %1711 = vmatmul.mubr.f32.gmra.mrb[0].mxu0 %v1644
    %v1712 = vpop.f32.mrb[0].mxu0
    %v1713 = vadd.f32 %v1569, %v1712
    %v1714 = vpop.f32.mrb[0].mxu0
    %1715 = vdwg.mxu0
    %v1716 = vxor.u32 %v1713, 2147483648
    %v1717 = vmul.f32 %v1716, 1.442695
    %v1718 = vpow.pop %v1717
    %v1719 = vadd.f32 %v1718, 1.0
    %v1720 = vrcp.pop %v1719
    %v1721 = vmul.f32 1.0, %v1720
    %v1722 = vtanh.pop %v1713
    %v1723 = vmul.f32 %v1721, %v1124
    %1725 = vrot.lane.b32.xlu0 %v1722, 32
    %v1726 = vpop.permute.xlu0 %1725
    %v1728 = vmul.f32 %v1721, %v1726
    %1730 = vrot.lane.b32.xlu0 %v1728, 32
    %v1731 = vpop.permute.xlu0 %1730
    %v1733 = vadd.f32 %v1723, %v1731
    %v1734 = vtanh.pop %v1733
    %1736 = vrot.lane.b32.xlu0 %v1734, 32
    %v1737 = vpop.permute.xlu0 %1736
    %v1739 = vmul.f32 %v1721, %v1737
    %1741 = vrot.lane.b32.xlu0 %v1739, 64
    %v1742 = vpop.permute.xlu0 %1741
    %v1743 = vsel %vm265, %v1742, 0
    %1745 = vmatprep.subr.mxu0 0.0
    %1746 = vmatpush1.msra.mxu0 %v88
    %1747 = vmatprep.subr.mxu0 0.0
    %1748 = vmatpush1.msra.mxu0 %v89
    %1749 = vmatprep.subr.mxu0 0.0
    %1750 = vmatpush1.msra.mxu0 %v90
    %1751 = vmatprep.subr.mxu0 0.0
    %1752 = vmatpush1.msra.mxu0 %v91
    %1753 = vmatprep.subr.mxu0 0.0
    %1754 = vmatpush1.msra.mxu0 0.0
    %1755 = vmatprep.subr.mxu0 0.0
    %1756 = vmatpush1.msra.mxu0 0.0
    %1757 = vmatprep.subr.mxu0 0.0
    %1758 = vmatpush1.msra.mxu0 0.0
    %1759 = vmatprep.subr.mxu0 0.0
    %1760 = vmatpush1.msra.mxu0 0.0
    %1761 = vmatprep.subr.mxu0 0.0
    %1762 = vmatpush1.msra.mxu0 0.0
    %1763 = vmatprep.subr.mxu0 0.0
    %1764 = vmatpush1.msra.mxu0 0.0
    %1765 = vmatprep.subr.mxu0 0.0
    %1766 = vmatpush1.msra.mxu0 0.0
    %1767 = vmatprep.subr.mxu0 0.0
    %1768 = vmatpush1.msra.mxu0 0.0
    %1769 = vmatprep.subr.mxu0 0.0
    %1770 = vmatpush1.msra.mxu0 0.0
    %1771 = vmatprep.subr.mxu0 0.0
    %1772 = vmatpush1.msra.mxu0 0.0
    %1773 = vmatprep.subr.mxu0 0.0
    %1774 = vmatpush1.msra.mxu0 0.0
    %1775 = vmatprep.subr.mxu0 0.0
    %1776 = vmatpush1.msra.mxu0 0.0
    %1777 = vmatprep.subr.mxu0 0.0
    %1778 = vmatpush1.msra.mxu0 0.0
    %1779 = vmatprep.subr.mxu0 0.0
    %1780 = vmatpush1.msra.mxu0 0.0
    %1781 = vmatprep.subr.mxu0 0.0
    %1782 = vmatpush1.msra.mxu0 0.0
    %1783 = vmatprep.subr.mxu0 0.0
    %1784 = vmatpush1.msra.mxu0 0.0
    %1785 = vmatprep.subr.mxu0 0.0
    %1786 = vmatpush1.msra.mxu0 0.0
    %1787 = vmatprep.subr.mxu0 0.0
    %1788 = vmatpush1.msra.mxu0 0.0
    %1789 = vmatprep.subr.mxu0 0.0
    %1790 = vmatpush1.msra.mxu0 0.0
    %1791 = vmatprep.subr.mxu0 0.0
    %1792 = vmatpush1.msra.mxu0 0.0
    %1793 = vmatprep.subr.mxu0 0.0
    %1794 = vmatpush1.msra.mxu0 0.0
    %1795 = vmatprep.subr.mxu0 0.0
    %1796 = vmatpush1.msra.mxu0 0.0
    %1797 = vmatprep.subr.mxu0 0.0
    %1798 = vmatpush1.msra.mxu0 0.0
    %1799 = vmatprep.subr.mxu0 0.0
    %1800 = vmatpush1.msra.mxu0 0.0
    %1801 = vmatprep.subr.mxu0 0.0
    %1802 = vmatpush1.msra.mxu0 0.0
    %1803 = vmatprep.subr.mxu0 0.0
    %1804 = vmatpush1.msra.mxu0 0.0
    %1805 = vmatprep.subr.mxu0 0.0
    %1806 = vmatpush1.msra.mxu0 0.0
    %1807 = vmatprep.subr.mxu0 0.0
    %1808 = vmatpush1.msra.mxu0 0.0
    %1809 = vmatprep.mubr.f32.mxu0 0.0
    %1810 = vmatmul.mubr.f32.gmra.mrb[0].mxu0 %v1743
    %v1811 = vpop.f32.mrb[0].mxu0
    %v1812 = vadd.f32 %v1571, %v1811
    %v1813 = vpop.f32.mrb[0].mxu0
    %1814 = vdwg.mxu0
    %v1815 = vxor.u32 %v1812, 2147483648
    %v1816 = vmul.f32 %v1815, 1.442695
    %v1817 = vpow.pop %v1816
    %v1818 = vadd.f32 %v1817, 1.0
    %v1819 = vrcp.pop %v1818
    %v1820 = vmul.f32 1.0, %v1819
    %v1821 = vtanh.pop %v1812
    %v1822 = vmul.f32 %v1820, %v1223
    %1824 = vrot.lane.b32.xlu0 %v1821, 32
    %v1825 = vpop.permute.xlu0 %1824
    %v1827 = vmul.f32 %v1820, %v1825
    %1829 = vrot.lane.b32.xlu0 %v1827, 32
    %v1830 = vpop.permute.xlu0 %1829
    %v1832 = vadd.f32 %v1822, %v1830
    %v1833 = vtanh.pop %v1832
    %1835 = vrot.lane.b32.xlu0 %v1833, 32
    %v1836 = vpop.permute.xlu0 %1835
    %v1838 = vmul.f32 %v1820, %v1836
    %1840 = vrot.lane.b32.xlu0 %v1838, 64
    %v1841 = vpop.permute.xlu0 %1840
    %v1842 = vsel %vm265, %v1841, 0
    %1844 = vmatprep.subr.mxu0 0.0
    %1845 = vmatpush1.msra.mxu0 %v93
    %1846 = vmatprep.subr.mxu0 0.0
    %1847 = vmatpush1.msra.mxu0 %v94
    %1848 = vmatprep.subr.mxu0 0.0
    %1849 = vmatpush1.msra.mxu0 %v95
    %1850 = vmatprep.subr.mxu0 0.0
    %1851 = vmatpush1.msra.mxu0 %v96
    %1852 = vmatprep.subr.mxu0 0.0
    %1853 = vmatpush1.msra.mxu0 0.0
    %1854 = vmatprep.subr.mxu0 0.0
    %1855 = vmatpush1.msra.mxu0 0.0
    %1856 = vmatprep.subr.mxu0 0.0
    %1857 = vmatpush1.msra.mxu0 0.0
    %1858 = vmatprep.subr.mxu0 0.0
    %1859 = vmatpush1.msra.mxu0 0.0
    %1860 = vmatprep.subr.mxu0 0.0
    %1861 = vmatpush1.msra.mxu0 0.0
    %1862 = vmatprep.subr.mxu0 0.0
    %1863 = vmatpush1.msra.mxu0 0.0
    %1864 = vmatprep.subr.mxu0 0.0
    %1865 = vmatpush1.msra.mxu0 0.0
    %1866 = vmatprep.subr.mxu0 0.0
    %1867 = vmatpush1.msra.mxu0 0.0
    %1868 = vmatprep.subr.mxu0 0.0
    %1869 = vmatpush1.msra.mxu0 0.0
    %1870 = vmatprep.subr.mxu0 0.0
    %1871 = vmatpush1.msra.mxu0 0.0
    %1872 = vmatprep.subr.mxu0 0.0
    %1873 = vmatpush1.msra.mxu0 0.0
    %1874 = vmatprep.subr.mxu0 0.0
    %1875 = vmatpush1.msra.mxu0 0.0
    %1876 = vmatprep.subr.mxu0 0.0
    %1877 = vmatpush1.msra.mxu0 0.0
    %1878 = vmatprep.subr.mxu0 0.0
    %1879 = vmatpush1.msra.mxu0 0.0
    %1880 = vmatprep.subr.mxu0 0.0
    %1881 = vmatpush1.msra.mxu0 0.0
    %1882 = vmatprep.subr.mxu0 0.0
    %1883 = vmatpush1.msra.mxu0 0.0
    %1884 = vmatprep.subr.mxu0 0.0
    %1885 = vmatpush1.msra.mxu0 0.0
    %1886 = vmatprep.subr.mxu0 0.0
    %1887 = vmatpush1.msra.mxu0 0.0
    %1888 = vmatprep.subr.mxu0 0.0
    %1889 = vmatpush1.msra.mxu0 0.0
    %1890 = vmatprep.subr.mxu0 0.0
    %1891 = vmatpush1.msra.mxu0 0.0
    %1892 = vmatprep.subr.mxu0 0.0
    %1893 = vmatpush1.msra.mxu0 0.0
    %1894 = vmatprep.subr.mxu0 0.0
    %1895 = vmatpush1.msra.mxu0 0.0
    %1896 = vmatprep.subr.mxu0 0.0
    %1897 = vmatpush1.msra.mxu0 0.0
    %1898 = vmatprep.subr.mxu0 0.0
    %1899 = vmatpush1.msra.mxu0 0.0
    %1900 = vmatprep.subr.mxu0 0.0
    %1901 = vmatpush1.msra.mxu0 0.0
    %1902 = vmatprep.subr.mxu0 0.0
    %1903 = vmatpush1.msra.mxu0 0.0
    %1904 = vmatprep.subr.mxu0 0.0
    %1905 = vmatpush1.msra.mxu0 0.0
    %1906 = vmatprep.subr.mxu0 0.0
    %1907 = vmatpush1.msra.mxu0 0.0
    %1908 = vmatprep.mubr.f32.mxu0 0.0
    %1909 = vmatmul.mubr.f32.gmra.mrb[0].mxu0 %v1842
    %v1910 = vpop.f32.mrb[0].mxu0
    %v1911 = vadd.f32 %v1640, %v1910
    %v1912 = vpop.f32.mrb[0].mxu0
    %1913 = vdwg.mxu0
    %v1914 = vxor.u32 %v1911, 2147483648
    %v1915 = vmul.f32 %v1914, 1.442695
    %v1916 = vpow.pop %v1915
    %v1917 = vadd.f32 %v1916, 1.0
    %v1918 = vrcp.pop %v1917
    %v1919 = vmul.f32 1.0, %v1918
    %v1920 = vtanh.pop %v1911
    %v1921 = vmul.f32 %v1919, %v1322
    %1923 = vrot.lane.b32.xlu0 %v1920, 32
    %v1924 = vpop.permute.xlu0 %1923
    %v1926 = vmul.f32 %v1919, %v1924
    %1928 = vrot.lane.b32.xlu0 %v1926, 32
    %v1929 = vpop.permute.xlu0 %1928
    %v1931 = vadd.f32 %v1921, %v1929
    %v1932 = vtanh.pop %v1931
    %1934 = vrot.lane.b32.xlu0 %v1932, 32
    %v1935 = vpop.permute.xlu0 %1934
    %v1937 = vmul.f32 %v1919, %v1935
    %1939 = vrot.lane.b32.xlu0 %v1937, 64
    %v1940 = vpop.permute.xlu0 %1939
    %v1941 = vsel %vm265, %v1940, 0
    %1943 = vmatprep.subr.mxu0 0.0
    %1944 = vmatpush1.msra.mxu0 %v150
    %1945 = vmatprep.subr.mxu0 0.0
    %1946 = vmatpush1.msra.mxu0 %v151
    %1947 = vmatprep.subr.mxu0 0.0
    %1948 = vmatpush1.msra.mxu0 %v152
    %1949 = vmatprep.subr.mxu0 0.0
    %1950 = vmatpush1.msra.mxu0 %v153
    %1951 = vmatprep.subr.mxu0 0.0
    %1952 = vmatpush1.msra.mxu0 0.0
    %1953 = vmatprep.subr.mxu0 0.0
    %1954 = vmatpush1.msra.mxu0 0.0
    %1955 = vmatprep.subr.mxu0 0.0
    %1956 = vmatpush1.msra.mxu0 0.0
    %1957 = vmatprep.subr.mxu0 0.0
    %1958 = vmatpush1.msra.mxu0 0.0
    %1959 = vmatprep.subr.mxu0 0.0
    %1960 = vmatpush1.msra.mxu0 0.0
    %1961 = vmatprep.subr.mxu0 0.0
    %1962 = vmatpush1.msra.mxu0 0.0
    %1963 = vmatprep.subr.mxu0 0.0
    %1964 = vmatpush1.msra.mxu0 0.0
    %1965 = vmatprep.subr.mxu0 0.0
    %1966 = vmatpush1.msra.mxu0 0.0
    %1967 = vmatprep.subr.mxu0 0.0
    %1968 = vmatpush1.msra.mxu0 0.0
    %1969 = vmatprep.subr.mxu0 0.0
    %1970 = vmatpush1.msra.mxu0 0.0
    %1971 = vmatprep.subr.mxu0 0.0
    %1972 = vmatpush1.msra.mxu0 0.0
    %1973 = vmatprep.subr.mxu0 0.0
    %1974 = vmatpush1.msra.mxu0 0.0
    %1975 = vmatprep.subr.mxu0 0.0
    %1976 = vmatpush1.msra.mxu0 0.0
    %1977 = vmatprep.subr.mxu0 0.0
    %1978 = vmatpush1.msra.mxu0 0.0
    %1979 = vmatprep.subr.mxu0 0.0
    %1980 = vmatpush1.msra.mxu0 0.0
    %1981 = vmatprep.subr.mxu0 0.0
    %1982 = vmatpush1.msra.mxu0 0.0
    %1983 = vmatprep.subr.mxu0 0.0
    %1984 = vmatpush1.msra.mxu0 0.0
    %1985 = vmatprep.subr.mxu0 0.0
    %1986 = vmatpush1.msra.mxu0 0.0
    %1987 = vmatprep.subr.mxu0 0.0
    %1988 = vmatpush1.msra.mxu0 0.0
    %1989 = vmatprep.subr.mxu0 0.0
    %1990 = vmatpush1.msra.mxu0 0.0
    %1991 = vmatprep.subr.mxu0 0.0
    %1992 = vmatpush1.msra.mxu0 0.0
    %1993 = vmatprep.subr.mxu0 0.0
    %1994 = vmatpush1.msra.mxu0 0.0
    %1995 = vmatprep.subr.mxu0 0.0
    %1996 = vmatpush1.msra.mxu0 0.0
    %1997 = vmatprep.subr.mxu0 0.0
    %1998 = vmatpush1.msra.mxu0 0.0
    %1999 = vmatprep.subr.mxu0 0.0
    %2000 = vmatpush1.msra.mxu0 0.0
    %2001 = vmatprep.subr.mxu0 0.0
    %2002 = vmatpush1.msra.mxu0 0.0
    %2003 = vmatprep.subr.mxu0 0.0
    %2004 = vmatpush1.msra.mxu0 0.0
    %2005 = vmatprep.subr.mxu0 0.0
    %2006 = vmatpush1.msra.mxu0 0.0
    %2007 = vmatprep.mubr.f32.mxu0 0.0
    %2008 = vmatmul.mubr.f32.gmra.mrb[0].mxu0 %v1941
    %v2009 = vpop.f32.mrb[0].mxu0
    %v2010 = vadd.f32 %v159, %v2009
    %v2011 = vpop.f32.mrb[0].mxu0
    %2012 = vdwg.mxu0
    %s2013 = scalar_lea.vmem [#allocation7], 4
    %2014 = vst [vmem:[%s2013] sm:$0x3] %v2010
    %v2015 = vsel %vm176, %v2010, -inf
    %2016 = vmax.index.xlane.f32.xlu0 %v2015
    %v2017 = vpop.xlane.xlu0 %2016
    %s2018 = sld [smem:[#allocation2 + $0x3]]
    %p2019 = scmp.gt.s32.totalorder %s2018, 0
    %s2020 = scalar_lea.vmem %s1, 6
    %v2021 = vld [vmem:[%s2020] sm:$0x3]
    %v2022 = vsel %vm176, %v2021, -inf
    %2023 = vmax.index.xlane.f32.xlu0 %v2022
    %v2024 = vpop.xlane.xlu0 %2023
    %s2025 = scalar_select %p2019, 1, 0
    %v2026 = vstv %s2025
    %vm2027 = vcmp.eq.s32.totalorder %v2026, 1
    %v2028 = vsel %vm2027, %v2024, %v2017
    %vm2029 = vcmp.eq.s32.totalorder %v2028, %v162
    %v2030 = vsel %vm2029, 1, 0
    %v2031 = vcvt.s32.f32 %v2030
    %2032 = vmatprep.subr.mxu0 0.0
    %2033 = vmatpush1.msra.mxu0 %v67
    %2034 = vmatprep.subr.mxu0 0.0
    %2035 = vmatpush1.msra.mxu0 %v68
    %2036 = vmatprep.subr.mxu0 0.0
    %2037 = vmatpush1.msra.mxu0 %v69
    %2038 = vmatprep.subr.mxu0 0.0
    %2039 = vmatpush1.msra.mxu0 %v70
    %2040 = vmatprep.subr.mxu0 0.0
    %2041 = vmatpush1.msra.mxu0 %v71
    %2042 = vmatprep.subr.mxu0 0.0
    %2043 = vmatpush1.msra.mxu0 %v72
    %2044 = vmatprep.subr.mxu0 0.0
    %2045 = vmatpush1.msra.mxu0 %v73
    %2046 = vmatprep.subr.mxu0 0.0
    %2047 = vmatpush1.msra.mxu0 %v74
    %2048 = vmatprep.subr.mxu0 0.0
    %2049 = vmatpush1.msra.mxu0 %v75
    %2050 = vmatprep.subr.mxu0 0.0
    %2051 = vmatpush1.msra.mxu0 %v76
    %2052 = vmatprep.subr.mxu0 0.0
    %2053 = vmatpush1.msra.mxu0 %v77
    %2054 = vmatprep.subr.mxu0 0.0
    %2055 = vmatpush1.msra.mxu0 %v78
    %2056 = vmatprep.subr.mxu0 0.0
    %2057 = vmatpush1.msra.mxu0 %v79
    %2058 = vmatprep.subr.mxu0 0.0
    %2059 = vmatpush1.msra.mxu0 %v80
    %2060 = vmatprep.subr.mxu0 0.0
    %2061 = vmatpush1.msra.mxu0 %v81
    %2062 = vmatprep.subr.mxu0 0.0
    %2063 = vmatpush1.msra.mxu0 %v82
    %2064 = vmatprep.subr.mxu0 0.0
    %2065 = vmatpush1.msra.mxu0 0.0
    %2066 = vmatprep.subr.mxu0 0.0
    %2067 = vmatpush1.msra.mxu0 0.0
    %2068 = vmatprep.subr.mxu0 0.0
    %2069 = vmatpush1.msra.mxu0 0.0
    %2070 = vmatprep.subr.mxu0 0.0
    %2071 = vmatpush1.msra.mxu0 0.0
    %2072 = vmatprep.subr.mxu0 0.0
    %2073 = vmatpush1.msra.mxu0 0.0
    %2074 = vmatprep.subr.mxu0 0.0
    %2075 = vmatpush1.msra.mxu0 0.0
    %2076 = vmatprep.subr.mxu0 0.0
    %2077 = vmatpush1.msra.mxu0 0.0
    %2078 = vmatprep.subr.mxu0 0.0
    %2079 = vmatpush1.msra.mxu0 0.0
    %2080 = vmatprep.subr.mxu0 0.0
    %2081 = vmatpush1.msra.mxu0 0.0
    %2082 = vmatprep.subr.mxu0 0.0
    %2083 = vmatpush1.msra.mxu0 0.0
    %2084 = vmatprep.subr.mxu0 0.0
    %2085 = vmatpush1.msra.mxu0 0.0
    %2086 = vmatprep.subr.mxu0 0.0
    %2087 = vmatpush1.msra.mxu0 0.0
    %2088 = vmatprep.subr.mxu0 0.0
    %2089 = vmatpush1.msra.mxu0 0.0
    %2090 = vmatprep.subr.mxu0 0.0
    %2091 = vmatpush1.msra.mxu0 0.0
    %2092 = vmatprep.subr.mxu0 0.0
    %2093 = vmatpush1.msra.mxu0 0.0
    %2094 = vmatprep.subr.mxu0 0.0
    %2095 = vmatpush1.msra.mxu0 0.0
    %2096 = vmatprep.mubr.f32.mxu0 0.0
    %2097 = vmatmul.mubr.f32.gmra.mrb[0].mxu0 %v2031
    %v2098 = vpop.f32.mrb[0].mxu0
    %v2099 = vadd.f32 0.0, %v2098
    %v2100 = vpop.f32.mrb[0].mxu0
    %2101 = vdwg.mxu0
    %2103 = vrot.lane.b32.xlu0 %v1838, 96
    %v2104 = vpop.permute.xlu0 %2103
    %v2106 = vsel %vm265, %v1742, %v2104
    %v2107 = vsel %vm267, %v2106, %v1937
    %v2109 = vsel %vm269, %v2107, 0
    %2111 = vmatprep.subr.mxu0 %v98
    %2112 = vmatpush1.msra.mxu0 %v97
    %2113 = vmatprep.subr.mxu0 %v101
    %2114 = vmatpush1.msra.mxu0 %v100
    %2115 = vmatprep.subr.mxu0 %v104
    %2116 = vmatpush1.msra.mxu0 %v103
    %2117 = vmatprep.subr.mxu0 %v107
    %2118 = vmatpush1.msra.mxu0 %v106
    %2119 = vmatprep.subr.mxu0 %v110
    %2120 = vmatpush1.msra.mxu0 %v109
    %2121 = vmatprep.subr.mxu0 %v113
    %2122 = vmatpush1.msra.mxu0 %v112
    %2123 = vmatprep.subr.mxu0 %v116
    %2124 = vmatpush1.msra.mxu0 %v115
    %2125 = vmatprep.subr.mxu0 %v119
    %2126 = vmatpush1.msra.mxu0 %v118
    %2127 = vmatprep.subr.mxu0 %v122
    %2128 = vmatpush1.msra.mxu0 %v121
    %2129 = vmatprep.subr.mxu0 %v125
    %2130 = vmatpush1.msra.mxu0 %v124
    %2131 = vmatprep.subr.mxu0 %v128
    %2132 = vmatpush1.msra.mxu0 %v127
    %2133 = vmatprep.subr.mxu0 %v131
    %2134 = vmatpush1.msra.mxu0 %v130
    %2135 = vmatprep.subr.mxu0 0.0
    %2136 = vmatpush1.msra.mxu0 0.0
    %2137 = vmatprep.subr.mxu0 0.0
    %2138 = vmatpush1.msra.mxu0 0.0
    %2139 = vmatprep.subr.mxu0 0.0
    %2140 = vmatpush1.msra.mxu0 0.0
    %2141 = vmatprep.subr.mxu0 0.0
    %2142 = vmatpush1.msra.mxu0 0.0
    %2143 = vmatprep.subr.mxu0 0.0
    %2144 = vmatpush1.msra.mxu0 0.0
    %2145 = vmatprep.subr.mxu0 0.0
    %2146 = vmatpush1.msra.mxu0 0.0
    %2147 = vmatprep.subr.mxu0 0.0
    %2148 = vmatpush1.msra.mxu0 0.0
    %2149 = vmatprep.subr.mxu0 0.0
    %2150 = vmatpush1.msra.mxu0 0.0
    %2151 = vmatprep.subr.mxu0 0.0
    %2152 = vmatpush1.msra.mxu0 0.0
    %2153 = vmatprep.subr.mxu0 0.0
    %2154 = vmatpush1.msra.mxu0 0.0
    %2155 = vmatprep.subr.mxu0 0.0
    %2156 = vmatpush1.msra.mxu0 0.0
    %2157 = vmatprep.subr.mxu0 0.0
    %2158 = vmatpush1.msra.mxu0 0.0
    %2159 = vmatprep.subr.mxu0 0.0
    %2160 = vmatpush1.msra.mxu0 0.0
    %2161 = vmatprep.subr.mxu0 0.0
    %2162 = vmatpush1.msra.mxu0 0.0
    %2163 = vmatprep.subr.mxu0 0.0
    %2164 = vmatpush1.msra.mxu0 0.0
    %2165 = vmatprep.subr.mxu0 0.0
    %2166 = vmatpush1.msra.mxu0 0.0
    %2167 = vmatprep.subr.mxu0 0.0
    %2168 = vmatpush1.msra.mxu0 0.0
    %2169 = vmatprep.subr.mxu0 0.0
    %2170 = vmatpush1.msra.mxu0 0.0
    %2171 = vmatprep.subr.mxu0 0.0
    %2172 = vmatpush1.msra.mxu0 0.0
    %2173 = vmatprep.subr.mxu0 0.0
    %2174 = vmatpush1.msra.mxu0 0.0
    %2175 = vmatprep.mubr.f32.mxu0 0.0
    %2176 = vmatmul.mubr.f32.gmra.mrb[0].mxu0 %v2109
    %v2177 = vpop.f32.mrb[0].mxu0
    %v2178 = vadd.f32 %v138, %v2177
    %v2179 = vpop.f32.mrb[0].mxu0
    %v2180 = vadd.f32 %v142, %v2179
    %2181 = vdwg.mxu0
    %2182 = vmatprep.subr.mxu0 0.0
    %2183 = vmatpush1.msra.mxu0 %v99
    %2184 = vmatprep.subr.mxu0 0.0
    %2185 = vmatpush1.msra.mxu0 %v102
    %2186 = vmatprep.subr.mxu0 0.0
    %2187 = vmatpush1.msra.mxu0 %v105
    %2188 = vmatprep.subr.mxu0 0.0
    %2189 = vmatpush1.msra.mxu0 %v108
    %2190 = vmatprep.subr.mxu0 0.0
    %2191 = vmatpush1.msra.mxu0 %v111
    %2192 = vmatprep.subr.mxu0 0.0
    %2193 = vmatpush1.msra.mxu0 %v114
    %2194 = vmatprep.subr.mxu0 0.0
    %2195 = vmatpush1.msra.mxu0 %v117
    %2196 = vmatprep.subr.mxu0 0.0
    %2197 = vmatpush1.msra.mxu0 %v120
    %2198 = vmatprep.subr.mxu0 0.0
    %2199 = vmatpush1.msra.mxu0 %v123
    %2200 = vmatprep.subr.mxu0 0.0
    %2201 = vmatpush1.msra.mxu0 %v126
    %2202 = vmatprep.subr.mxu0 0.0
    %2203 = vmatpush1.msra.mxu0 %v129
    %2204 = vmatprep.subr.mxu0 0.0
    %2205 = vmatpush1.msra.mxu0 %v132
    %2206 = vmatprep.subr.mxu0 0.0
    %2207 = vmatpush1.msra.mxu0 0.0
    %2208 = vmatprep.subr.mxu0 0.0
    %2209 = vmatpush1.msra.mxu0 0.0
    %2210 = vmatprep.subr.mxu0 0.0
    %2211 = vmatpush1.msra.mxu0 0.0
    %2212 = vmatprep.subr.mxu0 0.0
    %2213 = vmatpush1.msra.mxu0 0.0
    %2214 = vmatprep.subr.mxu0 0.0
    %2215 = vmatpush1.msra.mxu0 0.0
    %2216 = vmatprep.subr.mxu0 0.0
    %2217 = vmatpush1.msra.mxu0 0.0
    %2218 = vmatprep.subr.mxu0 0.0
    %2219 = vmatpush1.msra.mxu0 0.0
    %2220 = vmatprep.subr.mxu0 0.0
    %2221 = vmatpush1.msra.mxu0 0.0
    %2222 = vmatprep.subr.mxu0 0.0
    %2223 = vmatpush1.msra.mxu0 0.0
    %2224 = vmatprep.subr.mxu0 0.0
    %2225 = vmatpush1.msra.mxu0 0.0
    %2226 = vmatprep.subr.mxu0 0.0
    %2227 = vmatpush1.msra.mxu0 0.0
    %2228 = vmatprep.subr.mxu0 0.0
    %2229 = vmatpush1.msra.mxu0 0.0
    %2230 = vmatprep.subr.mxu0 0.0
    %2231 = vmatpush1.msra.mxu0 0.0
    %2232 = vmatprep.subr.mxu0 0.0
    %2233 = vmatpush1.msra.mxu0 0.0
    %2234 = vmatprep.subr.mxu0 0.0
    %2235 = vmatpush1.msra.mxu0 0.0
    %2236 = vmatprep.subr.mxu0 0.0
    %2237 = vmatpush1.msra.mxu0 0.0
    %2238 = vmatprep.subr.mxu0 0.0
    %2239 = vmatpush1.msra.mxu0 0.0
    %2240 = vmatprep.subr.mxu0 0.0
    %2241 = vmatpush1.msra.mxu0 0.0
    %2242 = vmatprep.subr.mxu0 0.0
    %2243 = vmatpush1.msra.mxu0 0.0
    %2244 = vmatprep.subr.mxu0 0.0
    %2245 = vmatpush1.msra.mxu0 0.0
    %2246 = vmatprep.mubr.f32.mxu0 0.0
    %2247 = vmatmul.mubr.f32.gmra.mrb[0].mxu0 %v2109
    %v2248 = vpop.f32.mrb[0].mxu0
    %v2249 = vadd.f32 %v146, %v2248
    %v2250 = vpop.f32.mrb[0].mxu0
    %2251 = vdwg.mxu0
    %v2253 = vsel %vm265, %v2099, 0
    %2255 = vmatprep.subr.mxu0 0.0
    %2256 = vmatpush1.msra.mxu0 %v83
    %2257 = vmatprep.subr.mxu0 0.0
    %2258 = vmatpush1.msra.mxu0 %v84
    %2259 = vmatprep.subr.mxu0 0.0
    %2260 = vmatpush1.msra.mxu0 %v85
    %2261 = vmatprep.subr.mxu0 0.0
    %2262 = vmatpush1.msra.mxu0 %v86
    %2263 = vmatprep.subr.mxu0 0.0
    %2264 = vmatpush1.msra.mxu0 0.0
    %2265 = vmatprep.subr.mxu0 0.0
    %2266 = vmatpush1.msra.mxu0 0.0
    %2267 = vmatprep.subr.mxu0 0.0
    %2268 = vmatpush1.msra.mxu0 0.0
    %2269 = vmatprep.subr.mxu0 0.0
    %2270 = vmatpush1.msra.mxu0 0.0
    %2271 = vmatprep.subr.mxu0 0.0
    %2272 = vmatpush1.msra.mxu0 0.0
    %2273 = vmatprep.subr.mxu0 0.0
    %2274 = vmatpush1.msra.mxu0 0.0
    %2275 = vmatprep.subr.mxu0 0.0
    %2276 = vmatpush1.msra.mxu0 0.0
    %2277 = vmatprep.subr.mxu0 0.0
    %2278 = vmatpush1.msra.mxu0 0.0
    %2279 = vmatprep.subr.mxu0 0.0
    %2280 = vmatpush1.msra.mxu0 0.0
    %2281 = vmatprep.subr.mxu0 0.0
    %2282 = vmatpush1.msra.mxu0 0.0
    %2283 = vmatprep.subr.mxu0 0.0
    %2284 = vmatpush1.msra.mxu0 0.0
    %2285 = vmatprep.subr.mxu0 0.0
    %2286 = vmatpush1.msra.mxu0 0.0
    %2287 = vmatprep.subr.mxu0 0.0
    %2288 = vmatpush1.msra.mxu0 0.0
    %2289 = vmatprep.subr.mxu0 0.0
    %2290 = vmatpush1.msra.mxu0 0.0
    %2291 = vmatprep.subr.mxu0 0.0
    %2292 = vmatpush1.msra.mxu0 0.0
    %2293 = vmatprep.subr.mxu0 0.0
    %2294 = vmatpush1.msra.mxu0 0.0
    %2295 = vmatprep.subr.mxu0 0.0
    %2296 = vmatpush1.msra.mxu0 0.0
    %2297 = vmatprep.subr.mxu0 0.0
    %2298 = vmatpush1.msra.mxu0 0.0
    %2299 = vmatprep.subr.mxu0 0.0
    %2300 = vmatpush1.msra.mxu0 0.0
    %2301 = vmatprep.subr.mxu0 0.0
    %2302 = vmatpush1.msra.mxu0 0.0
    %2303 = vmatprep.subr.mxu0 0.0
    %2304 = vmatpush1.msra.mxu0 0.0
    %2305 = vmatprep.subr.mxu0 0.0
    %2306 = vmatpush1.msra.mxu0 0.0
    %2307 = vmatprep.subr.mxu0 0.0
    %2308 = vmatpush1.msra.mxu0 0.0
    %2309 = vmatprep.subr.mxu0 0.0
    %2310 = vmatpush1.msra.mxu0 0.0
    %2311 = vmatprep.subr.mxu0 0.0
    %2312 = vmatpush1.msra.mxu0 0.0
    %2313 = vmatprep.subr.mxu0 0.0
    %2314 = vmatpush1.msra.mxu0 0.0
    %2315 = vmatprep.subr.mxu0 0.0
    %2316 = vmatpush1.msra.mxu0 0.0
    %2317 = vmatprep.subr.mxu0 0.0
    %2318 = vmatpush1.msra.mxu0 0.0
    %2319 = vmatprep.mubr.f32.mxu0 0.0
    %2320 = vmatmul.mubr.f32.gmra.mrb[0].mxu0 %v2253
    %v2321 = vpop.f32.mrb[0].mxu0
    %v2322 = vadd.f32 %v2178, %v2321
    %v2323 = vpop.f32.mrb[0].mxu0
    %2324 = vdwg.mxu0
    %v2325 = vxor.u32 %v2322, 2147483648
    %v2326 = vmul.f32 %v2325, 1.442695
    %v2327 = vpow.pop %v2326
    %v2328 = vadd.f32 %v2327, 1.0
    %v2329 = vrcp.pop %v2328
    %v2330 = vmul.f32 1.0, %v2329
    %v2331 = vtanh.pop %v2322
    %v2332 = vmul.f32 %v2330, %v1733
    %2334 = vrot.lane.b32.xlu0 %v2331, 32
    %v2335 = vpop.permute.xlu0 %2334
    %v2337 = vmul.f32 %v2330, %v2335
    %2339 = vrot.lane.b32.xlu0 %v2337, 32
    %v2340 = vpop.permute.xlu0 %2339
    %v2342 = vadd.f32 %v2332, %v2340
    %v2343 = vtanh.pop %v2342
    %2345 = vrot.lane.b32.xlu0 %v2343, 32
    %v2346 = vpop.permute.xlu0 %2345
    %v2348 = vmul.f32 %v2330, %v2346
    %2350 = vrot.lane.b32.xlu0 %v2348, 64
    %v2351 = vpop.permute.xlu0 %2350
    %v2352 = vsel %vm265, %v2351, 0
    %2354 = vmatprep.subr.mxu0 0.0
    %2355 = vmatpush1.msra.mxu0 %v88
    %2356 = vmatprep.subr.mxu0 0.0
    %2357 = vmatpush1.msra.mxu0 %v89
    %2358 = vmatprep.subr.mxu0 0.0
    %2359 = vmatpush1.msra.mxu0 %v90
    %2360 = vmatprep.subr.mxu0 0.0
    %2361 = vmatpush1.msra.mxu0 %v91
    %2362 = vmatprep.subr.mxu0 0.0
    %2363 = vmatpush1.msra.mxu0 0.0
    %2364 = vmatprep.subr.mxu0 0.0
    %2365 = vmatpush1.msra.mxu0 0.0
    %2366 = vmatprep.subr.mxu0 0.0
    %2367 = vmatpush1.msra.mxu0 0.0
    %2368 = vmatprep.subr.mxu0 0.0
    %2369 = vmatpush1.msra.mxu0 0.0
    %2370 = vmatprep.subr.mxu0 0.0
    %2371 = vmatpush1.msra.mxu0 0.0
    %2372 = vmatprep.subr.mxu0 0.0
    %2373 = vmatpush1.msra.mxu0 0.0
    %2374 = vmatprep.subr.mxu0 0.0
    %2375 = vmatpush1.msra.mxu0 0.0
    %2376 = vmatprep.subr.mxu0 0.0
    %2377 = vmatpush1.msra.mxu0 0.0
    %2378 = vmatprep.subr.mxu0 0.0
    %2379 = vmatpush1.msra.mxu0 0.0
    %2380 = vmatprep.subr.mxu0 0.0
    %2381 = vmatpush1.msra.mxu0 0.0
    %2382 = vmatprep.subr.mxu0 0.0
    %2383 = vmatpush1.msra.mxu0 0.0
    %2384 = vmatprep.subr.mxu0 0.0
    %2385 = vmatpush1.msra.mxu0 0.0
    %2386 = vmatprep.subr.mxu0 0.0
    %2387 = vmatpush1.msra.mxu0 0.0
    %2388 = vmatprep.subr.mxu0 0.0
    %2389 = vmatpush1.msra.mxu0 0.0
    %2390 = vmatprep.subr.mxu0 0.0
    %2391 = vmatpush1.msra.mxu0 0.0
    %2392 = vmatprep.subr.mxu0 0.0
    %2393 = vmatpush1.msra.mxu0 0.0
    %2394 = vmatprep.subr.mxu0 0.0
    %2395 = vmatpush1.msra.mxu0 0.0
    %2396 = vmatprep.subr.mxu0 0.0
    %2397 = vmatpush1.msra.mxu0 0.0
    %2398 = vmatprep.subr.mxu0 0.0
    %2399 = vmatpush1.msra.mxu0 0.0
    %2400 = vmatprep.subr.mxu0 0.0
    %2401 = vmatpush1.msra.mxu0 0.0
    %2402 = vmatprep.subr.mxu0 0.0
    %2403 = vmatpush1.msra.mxu0 0.0
    %2404 = vmatprep.subr.mxu0 0.0
    %2405 = vmatpush1.msra.mxu0 0.0
    %2406 = vmatprep.subr.mxu0 0.0
    %2407 = vmatpush1.msra.mxu0 0.0
    %2408 = vmatprep.subr.mxu0 0.0
    %2409 = vmatpush1.msra.mxu0 0.0
    %2410 = vmatprep.subr.mxu0 0.0
    %2411 = vmatpush1.msra.mxu0 0.0
    %2412 = vmatprep.subr.mxu0 0.0
    %2413 = vmatpush1.msra.mxu0 0.0
    %2414 = vmatprep.subr.mxu0 0.0
    %2415 = vmatpush1.msra.mxu0 0.0
    %2416 = vmatprep.subr.mxu0 0.0
    %2417 = vmatpush1.msra.mxu0 0.0
    %2418 = vmatprep.mubr.f32.mxu0 0.0
    %2419 = vmatmul.mubr.f32.gmra.mrb[0].mxu0 %v2352
    %v2420 = vpop.f32.mrb[0].mxu0
    %v2421 = vadd.f32 %v2180, %v2420
    %v2422 = vpop.f32.mrb[0].mxu0
    %2423 = vdwg.mxu0
    %v2424 = vxor.u32 %v2421, 2147483648
    %v2425 = vmul.f32 %v2424, 1.442695
    %v2426 = vpow.pop %v2425
    %v2427 = vadd.f32 %v2426, 1.0
    %v2428 = vrcp.pop %v2427
    %v2429 = vmul.f32 1.0, %v2428
    %v2430 = vtanh.pop %v2421
    %v2431 = vmul.f32 %v2429, %v1832
    %2433 = vrot.lane.b32.xlu0 %v2430, 32
    %v2434 = vpop.permute.xlu0 %2433
    %v2436 = vmul.f32 %v2429, %v2434
    %2438 = vrot.lane.b32.xlu0 %v2436, 32
    %v2439 = vpop.permute.xlu0 %2438
    %v2441 = vadd.f32 %v2431, %v2439
    %v2442 = vtanh.pop %v2441
    %2444 = vrot.lane.b32.xlu0 %v2442, 32
    %v2445 = vpop.permute.xlu0 %2444
    %v2447 = vmul.f32 %v2429, %v2445
    %2449 = vrot.lane.b32.xlu0 %v2447, 64
    %v2450 = vpop.permute.xlu0 %2449
    %v2451 = vsel %vm265, %v2450, 0
    %2453 = vmatprep.subr.mxu0 0.0
    %2454 = vmatpush1.msra.mxu0 %v93
    %2455 = vmatprep.subr.mxu0 0.0
    %2456 = vmatpush1.msra.mxu0 %v94
    %2457 = vmatprep.subr.mxu0 0.0
    %2458 = vmatpush1.msra.mxu0 %v95
    %2459 = vmatprep.subr.mxu0 0.0
    %2460 = vmatpush1.msra.mxu0 %v96
    %2461 = vmatprep.subr.mxu0 0.0
    %2462 = vmatpush1.msra.mxu0 0.0
    %2463 = vmatprep.subr.mxu0 0.0
    %2464 = vmatpush1.msra.mxu0 0.0
    %2465 = vmatprep.subr.mxu0 0.0
    %2466 = vmatpush1.msra.mxu0 0.0
    %2467 = vmatprep.subr.mxu0 0.0
    %2468 = vmatpush1.msra.mxu0 0.0
    %2469 = vmatprep.subr.mxu0 0.0
    %2470 = vmatpush1.msra.mxu0 0.0
    %2471 = vmatprep.subr.mxu0 0.0
    %2472 = vmatpush1.msra.mxu0 0.0
    %2473 = vmatprep.subr.mxu0 0.0
    %2474 = vmatpush1.msra.mxu0 0.0
    %2475 = vmatprep.subr.mxu0 0.0
    %2476 = vmatpush1.msra.mxu0 0.0
    %2477 = vmatprep.subr.mxu0 0.0
    %2478 = vmatpush1.msra.mxu0 0.0
    %2479 = vmatprep.subr.mxu0 0.0
    %2480 = vmatpush1.msra.mxu0 0.0
    %2481 = vmatprep.subr.mxu0 0.0
    %2482 = vmatpush1.msra.mxu0 0.0
    %2483 = vmatprep.subr.mxu0 0.0
    %2484 = vmatpush1.msra.mxu0 0.0
    %2485 = vmatprep.subr.mxu0 0.0
    %2486 = vmatpush1.msra.mxu0 0.0
    %2487 = vmatprep.subr.mxu0 0.0
    %2488 = vmatpush1.msra.mxu0 0.0
    %2489 = vmatprep.subr.mxu0 0.0
    %2490 = vmatpush1.msra.mxu0 0.0
    %2491 = vmatprep.subr.mxu0 0.0
    %2492 = vmatpush1.msra.mxu0 0.0
    %2493 = vmatprep.subr.mxu0 0.0
    %2494 = vmatpush1.msra.mxu0 0.0
    %2495 = vmatprep.subr.mxu0 0.0
    %2496 = vmatpush1.msra.mxu0 0.0
    %2497 = vmatprep.subr.mxu0 0.0
    %2498 = vmatpush1.msra.mxu0 0.0
    %2499 = vmatprep.subr.mxu0 0.0
    %2500 = vmatpush1.msra.mxu0 0.0
    %2501 = vmatprep.subr.mxu0 0.0
    %2502 = vmatpush1.msra.mxu0 0.0
    %2503 = vmatprep.subr.mxu0 0.0
    %2504 = vmatpush1.msra.mxu0 0.0
    %2505 = vmatprep.subr.mxu0 0.0
    %2506 = vmatpush1.msra.mxu0 0.0
    %2507 = vmatprep.subr.mxu0 0.0
    %2508 = vmatpush1.msra.mxu0 0.0
    %2509 = vmatprep.subr.mxu0 0.0
    %2510 = vmatpush1.msra.mxu0 0.0
    %2511 = vmatprep.subr.mxu0 0.0
    %2512 = vmatpush1.msra.mxu0 0.0
    %2513 = vmatprep.subr.mxu0 0.0
    %2514 = vmatpush1.msra.mxu0 0.0
    %2515 = vmatprep.subr.mxu0 0.0
    %2516 = vmatpush1.msra.mxu0 0.0
    %2517 = vmatprep.mubr.f32.mxu0 0.0
    %2518 = vmatmul.mubr.f32.gmra.mrb[0].mxu0 %v2451
    %v2519 = vpop.f32.mrb[0].mxu0
    %v2520 = vadd.f32 %v2249, %v2519
    %v2521 = vpop.f32.mrb[0].mxu0
    %2522 = vdwg.mxu0
    %v2523 = vxor.u32 %v2520, 2147483648
    %v2524 = vmul.f32 %v2523, 1.442695
    %v2525 = vpow.pop %v2524
    %v2526 = vadd.f32 %v2525, 1.0
    %v2527 = vrcp.pop %v2526
    %v2528 = vmul.f32 1.0, %v2527
    %v2529 = vtanh.pop %v2520
    %v2530 = vmul.f32 %v2528, %v1931
    %2532 = vrot.lane.b32.xlu0 %v2529, 32
    %v2533 = vpop.permute.xlu0 %2532
    %v2535 = vmul.f32 %v2528, %v2533
    %2537 = vrot.lane.b32.xlu0 %v2535, 32
    %v2538 = vpop.permute.xlu0 %2537
    %v2540 = vadd.f32 %v2530, %v2538
    %v2541 = vtanh.pop %v2540
    %2543 = vrot.lane.b32.xlu0 %v2541, 32
    %v2544 = vpop.permute.xlu0 %2543
    %v2546 = vmul.f32 %v2528, %v2544
    %2548 = vrot.lane.b32.xlu0 %v2546, 64
    %v2549 = vpop.permute.xlu0 %2548
    %v2550 = vsel %vm265, %v2549, 0
    %2552 = vmatprep.subr.mxu0 0.0
    %2553 = vmatpush1.msra.mxu0 %v150
    %2554 = vmatprep.subr.mxu0 0.0
    %2555 = vmatpush1.msra.mxu0 %v151
    %2556 = vmatprep.subr.mxu0 0.0
    %2557 = vmatpush1.msra.mxu0 %v152
    %2558 = vmatprep.subr.mxu0 0.0
    %2559 = vmatpush1.msra.mxu0 %v153
    %2560 = vmatprep.subr.mxu0 0.0
    %2561 = vmatpush1.msra.mxu0 0.0
    %2562 = vmatprep.subr.mxu0 0.0
    %2563 = vmatpush1.msra.mxu0 0.0
    %2564 = vmatprep.subr.mxu0 0.0
    %2565 = vmatpush1.msra.mxu0 0.0
    %2566 = vmatprep.subr.mxu0 0.0
    %2567 = vmatpush1.msra.mxu0 0.0
    %2568 = vmatprep.subr.mxu0 0.0
    %2569 = vmatpush1.msra.mxu0 0.0
    %2570 = vmatprep.subr.mxu0 0.0
    %2571 = vmatpush1.msra.mxu0 0.0
    %2572 = vmatprep.subr.mxu0 0.0
    %2573 = vmatpush1.msra.mxu0 0.0
    %2574 = vmatprep.subr.mxu0 0.0
    %2575 = vmatpush1.msra.mxu0 0.0
    %2576 = vmatprep.subr.mxu0 0.0
    %2577 = vmatpush1.msra.mxu0 0.0
    %2578 = vmatprep.subr.mxu0 0.0
    %2579 = vmatpush1.msra.mxu0 0.0
    %2580 = vmatprep.subr.mxu0 0.0
    %2581 = vmatpush1.msra.mxu0 0.0
    %2582 = vmatprep.subr.mxu0 0.0
    %2583 = vmatpush1.msra.mxu0 0.0
    %2584 = vmatprep.subr.mxu0 0.0
    %2585 = vmatpush1.msra.mxu0 0.0
    %2586 = vmatprep.subr.mxu0 0.0
    %2587 = vmatpush1.msra.mxu0 0.0
    %2588 = vmatprep.subr.mxu0 0.0
    %2589 = vmatpush1.msra.mxu0 0.0
    %2590 = vmatprep.subr.mxu0 0.0
    %2591 = vmatpush1.msra.mxu0 0.0
    %2592 = vmatprep.subr.mxu0 0.0
    %2593 = vmatpush1.msra.mxu0 0.0
    %2594 = vmatprep.subr.mxu0 0.0
    %2595 = vmatpush1.msra.mxu0 0.0
    %2596 = vmatprep.subr.mxu0 0.0
    %2597 = vmatpush1.msra.mxu0 0.0
    %2598 = vmatprep.subr.mxu0 0.0
    %2599 = vmatpush1.msra.mxu0 0.0
    %2600 = vmatprep.subr.mxu0 0.0
    %2601 = vmatpush1.msra.mxu0 0.0
    %2602 = vmatprep.subr.mxu0 0.0
    %2603 = vmatpush1.msra.mxu0 0.0
    %2604 = vmatprep.subr.mxu0 0.0
    %2605 = vmatpush1.msra.mxu0 0.0
    %2606 = vmatprep.subr.mxu0 0.0
    %2607 = vmatpush1.msra.mxu0 0.0
    %2608 = vmatprep.subr.mxu0 0.0
    %2609 = vmatpush1.msra.mxu0 0.0
    %2610 = vmatprep.subr.mxu0 0.0
    %2611 = vmatpush1.msra.mxu0 0.0
    %2612 = vmatprep.subr.mxu0 0.0
    %2613 = vmatpush1.msra.mxu0 0.0
    %2614 = vmatprep.subr.mxu0 0.0
    %2615 = vmatpush1.msra.mxu0 0.0
    %2616 = vmatprep.mubr.f32.mxu0 0.0
    %2617 = vmatmul.mubr.f32.gmra.mrb[0].mxu0 %v2550
    %v2618 = vpop.f32.mrb[0].mxu0
    %v2619 = vadd.f32 %v159, %v2618
    %v2620 = vpop.f32.mrb[0].mxu0
    %2621 = vdwg.mxu0
    %s2622 = scalar_lea.vmem [#allocation7], 6
    %2623 = vst [vmem:[%s2622] sm:$0x3] %v2619
    %v2624 = vsel %vm176, %v2619, -inf
    %2625 = vmax.index.xlane.f32.xlu0 %v2624
    %v2626 = vpop.xlane.xlu0 %2625
    %s2627 = sld [smem:[#allocation2 + $0x4]]
    %p2628 = scmp.gt.s32.totalorder %s2627, 0
    %s2629 = scalar_lea.vmem %s1, 8
    %v2630 = vld [vmem:[%s2629] sm:$0x3]
    %v2631 = vsel %vm176, %v2630, -inf
    %2632 = vmax.index.xlane.f32.xlu0 %v2631
    %v2633 = vpop.xlane.xlu0 %2632
    %s2634 = scalar_select %p2628, 1, 0
    %v2635 = vstv %s2634
    %vm2636 = vcmp.eq.s32.totalorder %v2635, 1
    %v2637 = vsel %vm2636, %v2633, %v2626
    %vm2638 = vcmp.eq.s32.totalorder %v2637, %v162
    %v2639 = vsel %vm2638, 1, 0
    %v2640 = vcvt.s32.f32 %v2639
    %2641 = vmatprep.subr.mxu0 0.0
    %2642 = vmatpush1.msra.mxu0 %v67
    %2643 = vmatprep.subr.mxu0 0.0
    %2644 = vmatpush1.msra.mxu0 %v68
    %2645 = vmatprep.subr.mxu0 0.0
    %2646 = vmatpush1.msra.mxu0 %v69
    %2647 = vmatprep.subr.mxu0 0.0
    %2648 = vmatpush1.msra.mxu0 %v70
    %2649 = vmatprep.subr.mxu0 0.0
    %2650 = vmatpush1.msra.mxu0 %v71
    %2651 = vmatprep.subr.mxu0 0.0
    %2652 = vmatpush1.msra.mxu0 %v72
    %2653 = vmatprep.subr.mxu0 0.0
    %2654 = vmatpush1.msra.mxu0 %v73
    %2655 = vmatprep.subr.mxu0 0.0
    %2656 = vmatpush1.msra.mxu0 %v74
    %2657 = vmatprep.subr.mxu0 0.0
    %2658 = vmatpush1.msra.mxu0 %v75
    %2659 = vmatprep.subr.mxu0 0.0
    %2660 = vmatpush1.msra.mxu0 %v76
    %2661 = vmatprep.subr.mxu0 0.0
    %2662 = vmatpush1.msra.mxu0 %v77
    %2663 = vmatprep.subr.mxu0 0.0
    %2664 = vmatpush1.msra.mxu0 %v78
    %2665 = vmatprep.subr.mxu0 0.0
    %2666 = vmatpush1.msra.mxu0 %v79
    %2667 = vmatprep.subr.mxu0 0.0
    %2668 = vmatpush1.msra.mxu0 %v80
    %2669 = vmatprep.subr.mxu0 0.0
    %2670 = vmatpush1.msra.mxu0 %v81
    %2671 = vmatprep.subr.mxu0 0.0
    %2672 = vmatpush1.msra.mxu0 %v82
    %2673 = vmatprep.subr.mxu0 0.0
    %2674 = vmatpush1.msra.mxu0 0.0
    %2675 = vmatprep.subr.mxu0 0.0
    %2676 = vmatpush1.msra.mxu0 0.0
    %2677 = vmatprep.subr.mxu0 0.0
    %2678 = vmatpush1.msra.mxu0 0.0
    %2679 = vmatprep.subr.mxu0 0.0
    %2680 = vmatpush1.msra.mxu0 0.0
    %2681 = vmatprep.subr.mxu0 0.0
    %2682 = vmatpush1.msra.mxu0 0.0
    %2683 = vmatprep.subr.mxu0 0.0
    %2684 = vmatpush1.msra.mxu0 0.0
    %2685 = vmatprep.subr.mxu0 0.0
    %2686 = vmatpush1.msra.mxu0 0.0
    %2687 = vmatprep.subr.mxu0 0.0
    %2688 = vmatpush1.msra.mxu0 0.0
    %2689 = vmatprep.subr.mxu0 0.0
    %2690 = vmatpush1.msra.mxu0 0.0
    %2691 = vmatprep.subr.mxu0 0.0
    %2692 = vmatpush1.msra.mxu0 0.0
    %2693 = vmatprep.subr.mxu0 0.0
    %2694 = vmatpush1.msra.mxu0 0.0
    %2695 = vmatprep.subr.mxu0 0.0
    %2696 = vmatpush1.msra.mxu0 0.0
    %2697 = vmatprep.subr.mxu0 0.0
    %2698 = vmatpush1.msra.mxu0 0.0
    %2699 = vmatprep.subr.mxu0 0.0
    %2700 = vmatpush1.msra.mxu0 0.0
    %2701 = vmatprep.subr.mxu0 0.0
    %2702 = vmatpush1.msra.mxu0 0.0
    %2703 = vmatprep.subr.mxu0 0.0
    %2704 = vmatpush1.msra.mxu0 0.0
    %2705 = vmatprep.mubr.f32.mxu0 0.0
    %2706 = vmatmul.mubr.f32.gmra.mrb[0].mxu0 %v2640
    %v2707 = vpop.f32.mrb[0].mxu0
    %v2708 = vadd.f32 0.0, %v2707
    %v2709 = vpop.f32.mrb[0].mxu0
    %2710 = vdwg.mxu0
    %2712 = vrot.lane.b32.xlu0 %v2447, 96
    %v2713 = vpop.permute.xlu0 %2712
    %v2715 = vsel %vm265, %v2351, %v2713
    %v2716 = vsel %vm267, %v2715, %v2546
    %v2718 = vsel %vm269, %v2716, 0
    %2720 = vmatprep.subr.mxu0 %v98
    %2721 = vmatpush1.msra.mxu0 %v97
    %2722 = vmatprep.subr.mxu0 %v101
    %2723 = vmatpush1.msra.mxu0 %v100
    %2724 = vmatprep.subr.mxu0 %v104
    %2725 = vmatpush1.msra.mxu0 %v103
    %2726 = vmatprep.subr.mxu0 %v107
    %2727 = vmatpush1.msra.mxu0 %v106
    %2728 = vmatprep.subr.mxu0 %v110
    %2729 = vmatpush1.msra.mxu0 %v109
    %2730 = vmatprep.subr.mxu0 %v113
    %2731 = vmatpush1.msra.mxu0 %v112
    %2732 = vmatprep.subr.mxu0 %v116
    %2733 = vmatpush1.msra.mxu0 %v115
    %2734 = vmatprep.subr.mxu0 %v119
    %2735 = vmatpush1.msra.mxu0 %v118
    %2736 = vmatprep.subr.mxu0 %v122
    %2737 = vmatpush1.msra.mxu0 %v121
    %2738 = vmatprep.subr.mxu0 %v125
    %2739 = vmatpush1.msra.mxu0 %v124
    %2740 = vmatprep.subr.mxu0 %v128
    %2741 = vmatpush1.msra.mxu0 %v127
    %2742 = vmatprep.subr.mxu0 %v131
    %2743 = vmatpush1.msra.mxu0 %v130
    %2744 = vmatprep.subr.mxu0 0.0
    %2745 = vmatpush1.msra.mxu0 0.0
    %2746 = vmatprep.subr.mxu0 0.0
    %2747 = vmatpush1.msra.mxu0 0.0
    %2748 = vmatprep.subr.mxu0 0.0
    %2749 = vmatpush1.msra.mxu0 0.0
    %2750 = vmatprep.subr.mxu0 0.0
    %2751 = vmatpush1.msra.mxu0 0.0
    %2752 = vmatprep.subr.mxu0 0.0
    %2753 = vmatpush1.msra.mxu0 0.0
    %2754 = vmatprep.subr.mxu0 0.0
    %2755 = vmatpush1.msra.mxu0 0.0
    %2756 = vmatprep.subr.mxu0 0.0
    %2757 = vmatpush1.msra.mxu0 0.0
    %2758 = vmatprep.subr.mxu0 0.0
    %2759 = vmatpush1.msra.mxu0 0.0
    %2760 = vmatprep.subr.mxu0 0.0
    %2761 = vmatpush1.msra.mxu0 0.0
    %2762 = vmatprep.subr.mxu0 0.0
    %2763 = vmatpush1.msra.mxu0 0.0
    %2764 = vmatprep.subr.mxu0 0.0
    %2765 = vmatpush1.msra.mxu0 0.0
    %2766 = vmatprep.subr.mxu0 0.0
    %2767 = vmatpush1.msra.mxu0 0.0
    %2768 = vmatprep.subr.mxu0 0.0
    %2769 = vmatpush1.msra.mxu0 0.0
    %2770 = vmatprep.subr.mxu0 0.0
    %2771 = vmatpush1.msra.mxu0 0.0
    %2772 = vmatprep.subr.mxu0 0.0
    %2773 = vmatpush1.msra.mxu0 0.0
    %2774 = vmatprep.subr.mxu0 0.0
    %2775 = vmatpush1.msra.mxu0 0.0
    %2776 = vmatprep.subr.mxu0 0.0
    %2777 = vmatpush1.msra.mxu0 0.0
    %2778 = vmatprep.subr.mxu0 0.0
    %2779 = vmatpush1.msra.mxu0 0.0
    %2780 = vmatprep.subr.mxu0 0.0
    %2781 = vmatpush1.msra.mxu0 0.0
    %2782 = vmatprep.subr.mxu0 0.0
    %2783 = vmatpush1.msra.mxu0 0.0
    %2784 = vmatprep.mubr.f32.mxu0 0.0
    %2785 = vmatmul.mubr.f32.gmra.mrb[0].mxu0 %v2718
    %v2786 = vpop.f32.mrb[0].mxu0
    %v2787 = vadd.f32 %v138, %v2786
    %v2788 = vpop.f32.mrb[0].mxu0
    %v2789 = vadd.f32 %v142, %v2788
    %2790 = vdwg.mxu0
    %2791 = vmatprep.subr.mxu0 0.0
    %2792 = vmatpush1.msra.mxu0 %v99
    %2793 = vmatprep.subr.mxu0 0.0
    %2794 = vmatpush1.msra.mxu0 %v102
    %2795 = vmatprep.subr.mxu0 0.0
    %2796 = vmatpush1.msra.mxu0 %v105
    %2797 = vmatprep.subr.mxu0 0.0
    %2798 = vmatpush1.msra.mxu0 %v108
    %2799 = vmatprep.subr.mxu0 0.0
    %2800 = vmatpush1.msra.mxu0 %v111
    %2801 = vmatprep.subr.mxu0 0.0
    %2802 = vmatpush1.msra.mxu0 %v114
    %2803 = vmatprep.subr.mxu0 0.0
    %2804 = vmatpush1.msra.mxu0 %v117
    %2805 = vmatprep.subr.mxu0 0.0
    %2806 = vmatpush1.msra.mxu0 %v120
    %2807 = vmatprep.subr.mxu0 0.0
    %2808 = vmatpush1.msra.mxu0 %v123
    %2809 = vmatprep.subr.mxu0 0.0
    %2810 = vmatpush1.msra.mxu0 %v126
    %2811 = vmatprep.subr.mxu0 0.0
    %2812 = vmatpush1.msra.mxu0 %v129
    %2813 = vmatprep.subr.mxu0 0.0
    %2814 = vmatpush1.msra.mxu0 %v132
    %2815 = vmatprep.subr.mxu0 0.0
    %2816 = vmatpush1.msra.mxu0 0.0
    %2817 = vmatprep.subr.mxu0 0.0
    %2818 = vmatpush1.msra.mxu0 0.0
    %2819 = vmatprep.subr.mxu0 0.0
    %2820 = vmatpush1.msra.mxu0 0.0
    %2821 = vmatprep.subr.mxu0 0.0
    %2822 = vmatpush1.msra.mxu0 0.0
    %2823 = vmatprep.subr.mxu0 0.0
    %2824 = vmatpush1.msra.mxu0 0.0
    %2825 = vmatprep.subr.mxu0 0.0
    %2826 = vmatpush1.msra.mxu0 0.0
    %2827 = vmatprep.subr.mxu0 0.0
    %2828 = vmatpush1.msra.mxu0 0.0
    %2829 = vmatprep.subr.mxu0 0.0
    %2830 = vmatpush1.msra.mxu0 0.0
    %2831 = vmatprep.subr.mxu0 0.0
    %2832 = vmatpush1.msra.mxu0 0.0
    %2833 = vmatprep.subr.mxu0 0.0
    %2834 = vmatpush1.msra.mxu0 0.0
    %2835 = vmatprep.subr.mxu0 0.0
    %2836 = vmatpush1.msra.mxu0 0.0
    %2837 = vmatprep.subr.mxu0 0.0
    %2838 = vmatpush1.msra.mxu0 0.0
    %2839 = vmatprep.subr.mxu0 0.0
    %2840 = vmatpush1.msra.mxu0 0.0
    %2841 = vmatprep.subr.mxu0 0.0
    %2842 = vmatpush1.msra.mxu0 0.0
    %2843 = vmatprep.subr.mxu0 0.0
    %2844 = vmatpush1.msra.mxu0 0.0
    %2845 = vmatprep.subr.mxu0 0.0
    %2846 = vmatpush1.msra.mxu0 0.0
    %2847 = vmatprep.subr.mxu0 0.0
    %2848 = vmatpush1.msra.mxu0 0.0
    %2849 = vmatprep.subr.mxu0 0.0
    %2850 = vmatpush1.msra.mxu0 0.0
    %2851 = vmatprep.subr.mxu0 0.0
    %2852 = vmatpush1.msra.mxu0 0.0
    %2853 = vmatprep.subr.mxu0 0.0
    %2854 = vmatpush1.msra.mxu0 0.0
    %2855 = vmatprep.mubr.f32.mxu0 0.0
    %2856 = vmatmul.mubr.f32.gmra.mrb[0].mxu0 %v2718
    %v2857 = vpop.f32.mrb[0].mxu0
    %v2858 = vadd.f32 %v146, %v2857
    %v2859 = vpop.f32.mrb[0].mxu0
    %2860 = vdwg.mxu0
    %v2862 = vsel %vm265, %v2708, 0
    %2864 = vmatprep.subr.mxu0 0.0
    %2865 = vmatpush1.msra.mxu0 %v83
    %2866 = vmatprep.subr.mxu0 0.0
    %2867 = vmatpush1.msra.mxu0 %v84
    %2868 = vmatprep.subr.mxu0 0.0
    %2869 = vmatpush1.msra.mxu0 %v85
    %2870 = vmatprep.subr.mxu0 0.0
    %2871 = vmatpush1.msra.mxu0 %v86
    %2872 = vmatprep.subr.mxu0 0.0
    %2873 = vmatpush1.msra.mxu0 0.0
    %2874 = vmatprep.subr.mxu0 0.0
    %2875 = vmatpush1.msra.mxu0 0.0
    %2876 = vmatprep.subr.mxu0 0.0
    %2877 = vmatpush1.msra.mxu0 0.0
    %2878 = vmatprep.subr.mxu0 0.0
    %2879 = vmatpush1.msra.mxu0 0.0
    %2880 = vmatprep.subr.mxu0 0.0
    %2881 = vmatpush1.msra.mxu0 0.0
    %2882 = vmatprep.subr.mxu0 0.0
    %2883 = vmatpush1.msra.mxu0 0.0
    %2884 = vmatprep.subr.mxu0 0.0
    %2885 = vmatpush1.msra.mxu0 0.0
    %2886 = vmatprep.subr.mxu0 0.0
    %2887 = vmatpush1.msra.mxu0 0.0
    %2888 = vmatprep.subr.mxu0 0.0
    %2889 = vmatpush1.msra.mxu0 0.0
    %2890 = vmatprep.subr.mxu0 0.0
    %2891 = vmatpush1.msra.mxu0 0.0
    %2892 = vmatprep.subr.mxu0 0.0
    %2893 = vmatpush1.msra.mxu0 0.0
    %2894 = vmatprep.subr.mxu0 0.0
    %2895 = vmatpush1.msra.mxu0 0.0
    %2896 = vmatprep.subr.mxu0 0.0
    %2897 = vmatpush1.msra.mxu0 0.0
    %2898 = vmatprep.subr.mxu0 0.0
    %2899 = vmatpush1.msra.mxu0 0.0
    %2900 = vmatprep.subr.mxu0 0.0
    %2901 = vmatpush1.msra.mxu0 0.0
    %2902 = vmatprep.subr.mxu0 0.0
    %2903 = vmatpush1.msra.mxu0 0.0
    %2904 = vmatprep.subr.mxu0 0.0
    %2905 = vmatpush1.msra.mxu0 0.0
    %2906 = vmatprep.subr.mxu0 0.0
    %2907 = vmatpush1.msra.mxu0 0.0
    %2908 = vmatprep.subr.mxu0 0.0
    %2909 = vmatpush1.msra.mxu0 0.0
    %2910 = vmatprep.subr.mxu0 0.0
    %2911 = vmatpush1.msra.mxu0 0.0
    %2912 = vmatprep.subr.mxu0 0.0
    %2913 = vmatpush1.msra.mxu0 0.0
    %2914 = vmatprep.subr.mxu0 0.0
    %2915 = vmatpush1.msra.mxu0 0.0
    %2916 = vmatprep.subr.mxu0 0.0
    %2917 = vmatpush1.msra.mxu0 0.0
    %2918 = vmatprep.subr.mxu0 0.0
    %2919 = vmatpush1.msra.mxu0 0.0
    %2920 = vmatprep.subr.mxu0 0.0
    %2921 = vmatpush1.msra.mxu0 0.0
    %2922 = vmatprep.subr.mxu0 0.0
    %2923 = vmatpush1.msra.mxu0 0.0
    %2924 = vmatprep.subr.mxu0 0.0
    %2925 = vmatpush1.msra.mxu0 0.0
    %2926 = vmatprep.subr.mxu0 0.0
    %2927 = vmatpush1.msra.mxu0 0.0
    %2928 = vmatprep.mubr.f32.mxu0 0.0
    %2929 = vmatmul.mubr.f32.gmra.mrb[0].mxu0 %v2862
    %v2930 = vpop.f32.mrb[0].mxu0
    %v2931 = vadd.f32 %v2787, %v2930
    %v2932 = vpop.f32.mrb[0].mxu0
    %2933 = vdwg.mxu0
    %v2934 = vxor.u32 %v2931, 2147483648
    %v2935 = vmul.f32 %v2934, 1.442695
    %v2936 = vpow.pop %v2935
    %v2937 = vadd.f32 %v2936, 1.0
    %v2938 = vrcp.pop %v2937
    %v2939 = vmul.f32 1.0, %v2938
    %v2940 = vtanh.pop %v2931
    %v2941 = vmul.f32 %v2939, %v2342
    %2943 = vrot.lane.b32.xlu0 %v2940, 32
    %v2944 = vpop.permute.xlu0 %2943
    %v2946 = vmul.f32 %v2939, %v2944
    %2948 = vrot.lane.b32.xlu0 %v2946, 32
    %v2949 = vpop.permute.xlu0 %2948
    %v2951 = vadd.f32 %v2941, %v2949
    %v2952 = vtanh.pop %v2951
    %2954 = vrot.lane.b32.xlu0 %v2952, 32
    %v2955 = vpop.permute.xlu0 %2954
    %v2957 = vmul.f32 %v2939, %v2955
    %2959 = vrot.lane.b32.xlu0 %v2957, 64
    %v2960 = vpop.permute.xlu0 %2959
    %v2961 = vsel %vm265, %v2960, 0
    %2963 = vmatprep.subr.mxu0 0.0
    %2964 = vmatpush1.msra.mxu0 %v88
    %2965 = vmatprep.subr.mxu0 0.0
    %2966 = vmatpush1.msra.mxu0 %v89
    %2967 = vmatprep.subr.mxu0 0.0
    %2968 = vmatpush1.msra.mxu0 %v90
    %2969 = vmatprep.subr.mxu0 0.0
    %2970 = vmatpush1.msra.mxu0 %v91
    %2971 = vmatprep.subr.mxu0 0.0
    %2972 = vmatpush1.msra.mxu0 0.0
    %2973 = vmatprep.subr.mxu0 0.0
    %2974 = vmatpush1.msra.mxu0 0.0
    %2975 = vmatprep.subr.mxu0 0.0
    %2976 = vmatpush1.msra.mxu0 0.0
    %2977 = vmatprep.subr.mxu0 0.0
    %2978 = vmatpush1.msra.mxu0 0.0
    %2979 = vmatprep.subr.mxu0 0.0
    %2980 = vmatpush1.msra.mxu0 0.0
    %2981 = vmatprep.subr.mxu0 0.0
    %2982 = vmatpush1.msra.mxu0 0.0
    %2983 = vmatprep.subr.mxu0 0.0
    %2984 = vmatpush1.msra.mxu0 0.0
    %2985 = vmatprep.subr.mxu0 0.0
    %2986 = vmatpush1.msra.mxu0 0.0
    %2987 = vmatprep.subr.mxu0 0.0
    %2988 = vmatpush1.msra.mxu0 0.0
    %2989 = vmatprep.subr.mxu0 0.0
    %2990 = vmatpush1.msra.mxu0 0.0
    %2991 = vmatprep.subr.mxu0 0.0
    %2992 = vmatpush1.msra.mxu0 0.0
    %2993 = vmatprep.subr.mxu0 0.0
    %2994 = vmatpush1.msra.mxu0 0.0
    %2995 = vmatprep.subr.mxu0 0.0
    %2996 = vmatpush1.msra.mxu0 0.0
    %2997 = vmatprep.subr.mxu0 0.0
    %2998 = vmatpush1.msra.mxu0 0.0
    %2999 = vmatprep.subr.mxu0 0.0
    %3000 = vmatpush1.msra.mxu0 0.0
    %3001 = vmatprep.subr.mxu0 0.0
    %3002 = vmatpush1.msra.mxu0 0.0
    %3003 = vmatprep.subr.mxu0 0.0
    %3004 = vmatpush1.msra.mxu0 0.0
    %3005 = vmatprep.subr.mxu0 0.0
    %3006 = vmatpush1.msra.mxu0 0.0
    %3007 = vmatprep.subr.mxu0 0.0
    %3008 = vmatpush1.msra.mxu0 0.0
    %3009 = vmatprep.subr.mxu0 0.0
    %3010 = vmatpush1.msra.mxu0 0.0
    %3011 = vmatprep.subr.mxu0 0.0
    %3012 = vmatpush1.msra.mxu0 0.0
    %3013 = vmatprep.subr.mxu0 0.0
    %3014 = vmatpush1.msra.mxu0 0.0
    %3015 = vmatprep.subr.mxu0 0.0
    %3016 = vmatpush1.msra.mxu0 0.0
    %3017 = vmatprep.subr.mxu0 0.0
    %3018 = vmatpush1.msra.mxu0 0.0
    %3019 = vmatprep.subr.mxu0 0.0
    %3020 = vmatpush1.msra.mxu0 0.0
    %3021 = vmatprep.subr.mxu0 0.0
    %3022 = vmatpush1.msra.mxu0 0.0
    %3023 = vmatprep.subr.mxu0 0.0
    %3024 = vmatpush1.msra.mxu0 0.0
    %3025 = vmatprep.subr.mxu0 0.0
    %3026 = vmatpush1.msra.mxu0 0.0
    %3027 = vmatprep.mubr.f32.mxu0 0.0
    %3028 = vmatmul.mubr.f32.gmra.mrb[0].mxu0 %v2961
    %v3029 = vpop.f32.mrb[0].mxu0
    %v3030 = vadd.f32 %v2789, %v3029
    %v3031 = vpop.f32.mrb[0].mxu0
    %3032 = vdwg.mxu0
    %v3033 = vxor.u32 %v3030, 2147483648
    %v3034 = vmul.f32 %v3033, 1.442695
    %v3035 = vpow.pop %v3034
    %v3036 = vadd.f32 %v3035, 1.0
    %v3037 = vrcp.pop %v3036
    %v3038 = vmul.f32 1.0, %v3037
    %v3039 = vtanh.pop %v3030
    %v3040 = vmul.f32 %v3038, %v2441
    %3042 = vrot.lane.b32.xlu0 %v3039, 32
    %v3043 = vpop.permute.xlu0 %3042
    %v3045 = vmul.f32 %v3038, %v3043
    %3047 = vrot.lane.b32.xlu0 %v3045, 32
    %v3048 = vpop.permute.xlu0 %3047
    %v3050 = vadd.f32 %v3040, %v3048
    %v3051 = vtanh.pop %v3050
    %3053 = vrot.lane.b32.xlu0 %v3051, 32
    %v3054 = vpop.permute.xlu0 %3053
    %v3056 = vmul.f32 %v3038, %v3054
    %3058 = vrot.lane.b32.xlu0 %v3056, 64
    %v3059 = vpop.permute.xlu0 %3058
    %v3060 = vsel %vm265, %v3059, 0
    %3062 = vmatprep.subr.mxu0 0.0
    %3063 = vmatpush1.msra.mxu0 %v93
    %3064 = vmatprep.subr.mxu0 0.0
    %3065 = vmatpush1.msra.mxu0 %v94
    %3066 = vmatprep.subr.mxu0 0.0
    %3067 = vmatpush1.msra.mxu0 %v95
    %3068 = vmatprep.subr.mxu0 0.0
    %3069 = vmatpush1.msra.mxu0 %v96
    %3070 = vmatprep.subr.mxu0 0.0
    %3071 = vmatpush1.msra.mxu0 0.0
    %3072 = vmatprep.subr.mxu0 0.0
    %3073 = vmatpush1.msra.mxu0 0.0
    %3074 = vmatprep.subr.mxu0 0.0
    %3075 = vmatpush1.msra.mxu0 0.0
    %3076 = vmatprep.subr.mxu0 0.0
    %3077 = vmatpush1.msra.mxu0 0.0
    %3078 = vmatprep.subr.mxu0 0.0
    %3079 = vmatpush1.msra.mxu0 0.0
    %3080 = vmatprep.subr.mxu0 0.0
    %3081 = vmatpush1.msra.mxu0 0.0
    %3082 = vmatprep.subr.mxu0 0.0
    %3083 = vmatpush1.msra.mxu0 0.0
    %3084 = vmatprep.subr.mxu0 0.0
    %3085 = vmatpush1.msra.mxu0 0.0
    %3086 = vmatprep.subr.mxu0 0.0
    %3087 = vmatpush1.msra.mxu0 0.0
    %3088 = vmatprep.subr.mxu0 0.0
    %3089 = vmatpush1.msra.mxu0 0.0
    %3090 = vmatprep.subr.mxu0 0.0
    %3091 = vmatpush1.msra.mxu0 0.0
    %3092 = vmatprep.subr.mxu0 0.0
    %3093 = vmatpush1.msra.mxu0 0.0
    %3094 = vmatprep.subr.mxu0 0.0
    %3095 = vmatpush1.msra.mxu0 0.0
    %3096 = vmatprep.subr.mxu0 0.0
    %3097 = vmatpush1.msra.mxu0 0.0
    %3098 = vmatprep.subr.mxu0 0.0
    %3099 = vmatpush1.msra.mxu0 0.0
    %3100 = vmatprep.subr.mxu0 0.0
    %3101 = vmatpush1.msra.mxu0 0.0
    %3102 = vmatprep.subr.mxu0 0.0
    %3103 = vmatpush1.msra.mxu0 0.0
    %3104 = vmatprep.subr.mxu0 0.0
    %3105 = vmatpush1.msra.mxu0 0.0
    %3106 = vmatprep.subr.mxu0 0.0
    %3107 = vmatpush1.msra.mxu0 0.0
    %3108 = vmatprep.subr.mxu0 0.0
    %3109 = vmatpush1.msra.mxu0 0.0
    %3110 = vmatprep.subr.mxu0 0.0
    %3111 = vmatpush1.msra.mxu0 0.0
    %3112 = vmatprep.subr.mxu0 0.0
    %3113 = vmatpush1.msra.mxu0 0.0
    %3114 = vmatprep.subr.mxu0 0.0
    %3115 = vmatpush1.msra.mxu0 0.0
    %3116 = vmatprep.subr.mxu0 0.0
    %3117 = vmatpush1.msra.mxu0 0.0
    %3118 = vmatprep.subr.mxu0 0.0
    %3119 = vmatpush1.msra.mxu0 0.0
    %3120 = vmatprep.subr.mxu0 0.0
    %3121 = vmatpush1.msra.mxu0 0.0
    %3122 = vmatprep.subr.mxu0 0.0
    %3123 = vmatpush1.msra.mxu0 0.0
    %3124 = vmatprep.subr.mxu0 0.0
    %3125 = vmatpush1.msra.mxu0 0.0
    %3126 = vmatprep.mubr.f32.mxu0 0.0
    %3127 = vmatmul.mubr.f32.gmra.mrb[0].mxu0 %v3060
    %v3128 = vpop.f32.mrb[0].mxu0
    %v3129 = vadd.f32 %v2858, %v3128
    %v3130 = vpop.f32.mrb[0].mxu0
    %3131 = vdwg.mxu0
    %v3132 = vxor.u32 %v3129, 2147483648
    %v3133 = vmul.f32 %v3132, 1.442695
    %v3134 = vpow.pop %v3133
    %v3135 = vadd.f32 %v3134, 1.0
    %v3136 = vrcp.pop %v3135
    %v3137 = vmul.f32 1.0, %v3136
    %v3138 = vtanh.pop %v3129
    %v3139 = vmul.f32 %v3137, %v2540
    %3141 = vrot.lane.b32.xlu0 %v3138, 32
    %v3142 = vpop.permute.xlu0 %3141
    %v3144 = vmul.f32 %v3137, %v3142
    %3146 = vrot.lane.b32.xlu0 %v3144, 32
    %v3147 = vpop.permute.xlu0 %3146
    %v3149 = vadd.f32 %v3139, %v3147
    %v3150 = vtanh.pop %v3149
    %3152 = vrot.lane.b32.xlu0 %v3150, 32
    %v3153 = vpop.permute.xlu0 %3152
    %v3155 = vmul.f32 %v3137, %v3153
    %3157 = vrot.lane.b32.xlu0 %v3155, 64
    %v3158 = vpop.permute.xlu0 %3157
    %v3159 = vsel %vm265, %v3158, 0
    %3161 = vmatprep.subr.mxu0 0.0
    %3162 = vmatpush1.msra.mxu0 %v150
    %3163 = vmatprep.subr.mxu0 0.0
    %3164 = vmatpush1.msra.mxu0 %v151
    %3165 = vmatprep.subr.mxu0 0.0
    %3166 = vmatpush1.msra.mxu0 %v152
    %3167 = vmatprep.subr.mxu0 0.0
    %3168 = vmatpush1.msra.mxu0 %v153
    %3169 = vmatprep.subr.mxu0 0.0
    %3170 = vmatpush1.msra.mxu0 0.0
    %3171 = vmatprep.subr.mxu0 0.0
    %3172 = vmatpush1.msra.mxu0 0.0
    %3173 = vmatprep.subr.mxu0 0.0
    %3174 = vmatpush1.msra.mxu0 0.0
    %3175 = vmatprep.subr.mxu0 0.0
    %3176 = vmatpush1.msra.mxu0 0.0
    %3177 = vmatprep.subr.mxu0 0.0
    %3178 = vmatpush1.msra.mxu0 0.0
    %3179 = vmatprep.subr.mxu0 0.0
    %3180 = vmatpush1.msra.mxu0 0.0
    %3181 = vmatprep.subr.mxu0 0.0
    %3182 = vmatpush1.msra.mxu0 0.0
    %3183 = vmatprep.subr.mxu0 0.0
    %3184 = vmatpush1.msra.mxu0 0.0
    %3185 = vmatprep.subr.mxu0 0.0
    %3186 = vmatpush1.msra.mxu0 0.0
    %3187 = vmatprep.subr.mxu0 0.0
    %3188 = vmatpush1.msra.mxu0 0.0
    %3189 = vmatprep.subr.mxu0 0.0
    %3190 = vmatpush1.msra.mxu0 0.0
    %3191 = vmatprep.subr.mxu0 0.0
    %3192 = vmatpush1.msra.mxu0 0.0
    %3193 = vmatprep.subr.mxu0 0.0
    %3194 = vmatpush1.msra.mxu0 0.0
    %3195 = vmatprep.subr.mxu0 0.0
    %3196 = vmatpush1.msra.mxu0 0.0
    %3197 = vmatprep.subr.mxu0 0.0
    %3198 = vmatpush1.msra.mxu0 0.0
    %3199 = vmatprep.subr.mxu0 0.0
    %3200 = vmatpush1.msra.mxu0 0.0
    %3201 = vmatprep.subr.mxu0 0.0
    %3202 = vmatpush1.msra.mxu0 0.0
    %3203 = vmatprep.subr.mxu0 0.0
    %3204 = vmatpush1.msra.mxu0 0.0
    %3205 = vmatprep.subr.mxu0 0.0
    %3206 = vmatpush1.msra.mxu0 0.0
    %3207 = vmatprep.subr.mxu0 0.0
    %3208 = vmatpush1.msra.mxu0 0.0
    %3209 = vmatprep.subr.mxu0 0.0
    %3210 = vmatpush1.msra.mxu0 0.0
    %3211 = vmatprep.subr.mxu0 0.0
    %3212 = vmatpush1.msra.mxu0 0.0
    %3213 = vmatprep.subr.mxu0 0.0
    %3214 = vmatpush1.msra.mxu0 0.0
    %3215 = vmatprep.subr.mxu0 0.0
    %3216 = vmatpush1.msra.mxu0 0.0
    %3217 = vmatprep.subr.mxu0 0.0
    %3218 = vmatpush1.msra.mxu0 0.0
    %3219 = vmatprep.subr.mxu0 0.0
    %3220 = vmatpush1.msra.mxu0 0.0
    %3221 = vmatprep.subr.mxu0 0.0
    %3222 = vmatpush1.msra.mxu0 0.0
    %3223 = vmatprep.subr.mxu0 0.0
    %3224 = vmatpush1.msra.mxu0 0.0
    %3225 = vmatprep.mubr.f32.mxu0 0.0
    %3226 = vmatmul.mubr.f32.gmra.mrb[0].mxu0 %v3159
    %v3227 = vpop.f32.mrb[0].mxu0
    %v3228 = vadd.f32 %v159, %v3227
    %v3229 = vpop.f32.mrb[0].mxu0
    %3230 = vdwg.mxu0
    %s3231 = scalar_lea.vmem [#allocation7], 8
    %3232 = vst [vmem:[%s3231] sm:$0x3] %v3228
    %v3233 = vsel %vm176, %v3228, -inf
    %3234 = vmax.index.xlane.f32.xlu0 %v3233
    %v3235 = vpop.xlane.xlu0 %3234
    %s3236 = sld [smem:[#allocation2 + $0x5]]
    %p3237 = scmp.gt.s32.totalorder %s3236, 0
    %s3238 = scalar_lea.vmem %s1, 10
    %v3239 = vld [vmem:[%s3238] sm:$0x3]
    %v3240 = vsel %vm176, %v3239, -inf
    %3241 = vmax.index.xlane.f32.xlu0 %v3240
    %v3242 = vpop.xlane.xlu0 %3241
    %s3243 = scalar_select %p3237, 1, 0
    %v3244 = vstv %s3243
    %vm3245 = vcmp.eq.s32.totalorder %v3244, 1
    %v3246 = vsel %vm3245, %v3242, %v3235
    %vm3247 = vcmp.eq.s32.totalorder %v3246, %v162
    %v3248 = vsel %vm3247, 1, 0
    %v3249 = vcvt.s32.f32 %v3248
    %3250 = vmatprep.subr.mxu0 0.0
    %3251 = vmatpush1.msra.mxu0 %v67
    %3252 = vmatprep.subr.mxu0 0.0
    %3253 = vmatpush1.msra.mxu0 %v68
    %3254 = vmatprep.subr.mxu0 0.0
    %3255 = vmatpush1.msra.mxu0 %v69
    %3256 = vmatprep.subr.mxu0 0.0
    %3257 = vmatpush1.msra.mxu0 %v70
    %3258 = vmatprep.subr.mxu0 0.0
    %3259 = vmatpush1.msra.mxu0 %v71
    %3260 = vmatprep.subr.mxu0 0.0
    %3261 = vmatpush1.msra.mxu0 %v72
    %3262 = vmatprep.subr.mxu0 0.0
    %3263 = vmatpush1.msra.mxu0 %v73
    %3264 = vmatprep.subr.mxu0 0.0
    %3265 = vmatpush1.msra.mxu0 %v74
    %3266 = vmatprep.subr.mxu0 0.0
    %3267 = vmatpush1.msra.mxu0 %v75
    %3268 = vmatprep.subr.mxu0 0.0
    %3269 = vmatpush1.msra.mxu0 %v76
    %3270 = vmatprep.subr.mxu0 0.0
    %3271 = vmatpush1.msra.mxu0 %v77
    %3272 = vmatprep.subr.mxu0 0.0
    %3273 = vmatpush1.msra.mxu0 %v78
    %3274 = vmatprep.subr.mxu0 0.0
    %3275 = vmatpush1.msra.mxu0 %v79
    %3276 = vmatprep.subr.mxu0 0.0
    %3277 = vmatpush1.msra.mxu0 %v80
    %3278 = vmatprep.subr.mxu0 0.0
    %3279 = vmatpush1.msra.mxu0 %v81
    %3280 = vmatprep.subr.mxu0 0.0
    %3281 = vmatpush1.msra.mxu0 %v82
    %3282 = vmatprep.subr.mxu0 0.0
    %3283 = vmatpush1.msra.mxu0 0.0
    %3284 = vmatprep.subr.mxu0 0.0
    %3285 = vmatpush1.msra.mxu0 0.0
    %3286 = vmatprep.subr.mxu0 0.0
    %3287 = vmatpush1.msra.mxu0 0.0
    %3288 = vmatprep.subr.mxu0 0.0
    %3289 = vmatpush1.msra.mxu0 0.0
    %3290 = vmatprep.subr.mxu0 0.0
    %3291 = vmatpush1.msra.mxu0 0.0
    %3292 = vmatprep.subr.mxu0 0.0
    %3293 = vmatpush1.msra.mxu0 0.0
    %3294 = vmatprep.subr.mxu0 0.0
    %3295 = vmatpush1.msra.mxu0 0.0
    %3296 = vmatprep.subr.mxu0 0.0
    %3297 = vmatpush1.msra.mxu0 0.0
    %3298 = vmatprep.subr.mxu0 0.0
    %3299 = vmatpush1.msra.mxu0 0.0
    %3300 = vmatprep.subr.mxu0 0.0
    %3301 = vmatpush1.msra.mxu0 0.0
    %3302 = vmatprep.subr.mxu0 0.0
    %3303 = vmatpush1.msra.mxu0 0.0
    %3304 = vmatprep.subr.mxu0 0.0
    %3305 = vmatpush1.msra.mxu0 0.0
    %3306 = vmatprep.subr.mxu0 0.0
    %3307 = vmatpush1.msra.mxu0 0.0
    %3308 = vmatprep.subr.mxu0 0.0
    %3309 = vmatpush1.msra.mxu0 0.0
    %3310 = vmatprep.subr.mxu0 0.0
    %3311 = vmatpush1.msra.mxu0 0.0
    %3312 = vmatprep.subr.mxu0 0.0
    %3313 = vmatpush1.msra.mxu0 0.0
    %3314 = vmatprep.mubr.f32.mxu0 0.0
    %3315 = vmatmul.mubr.f32.gmra.mrb[0].mxu0 %v3249
    %v3316 = vpop.f32.mrb[0].mxu0
    %v3317 = vadd.f32 0.0, %v3316
    %v3318 = vpop.f32.mrb[0].mxu0
    %3319 = vdwg.mxu0
    %3321 = vrot.lane.b32.xlu0 %v3056, 96
    %v3322 = vpop.permute.xlu0 %3321
    %v3324 = vsel %vm265, %v2960, %v3322
    %v3325 = vsel %vm267, %v3324, %v3155
    %v3327 = vsel %vm269, %v3325, 0
    %3329 = vmatprep.subr.mxu0 %v98
    %3330 = vmatpush1.msra.mxu0 %v97
    %3331 = vmatprep.subr.mxu0 %v101
    %3332 = vmatpush1.msra.mxu0 %v100
    %3333 = vmatprep.subr.mxu0 %v104
    %3334 = vmatpush1.msra.mxu0 %v103
    %3335 = vmatprep.subr.mxu0 %v107
    %3336 = vmatpush1.msra.mxu0 %v106
    %3337 = vmatprep.subr.mxu0 %v110
    %3338 = vmatpush1.msra.mxu0 %v109
    %3339 = vmatprep.subr.mxu0 %v113
    %3340 = vmatpush1.msra.mxu0 %v112
    %3341 = vmatprep.subr.mxu0 %v116
    %3342 = vmatpush1.msra.mxu0 %v115
    %3343 = vmatprep.subr.mxu0 %v119
    %3344 = vmatpush1.msra.mxu0 %v118
    %3345 = vmatprep.subr.mxu0 %v122
    %3346 = vmatpush1.msra.mxu0 %v121
    %3347 = vmatprep.subr.mxu0 %v125
    %3348 = vmatpush1.msra.mxu0 %v124
    %3349 = vmatprep.subr.mxu0 %v128
    %3350 = vmatpush1.msra.mxu0 %v127
    %3351 = vmatprep.subr.mxu0 %v131
    %3352 = vmatpush1.msra.mxu0 %v130
    %3353 = vmatprep.subr.mxu0 0.0
    %3354 = vmatpush1.msra.mxu0 0.0
    %3355 = vmatprep.subr.mxu0 0.0
    %3356 = vmatpush1.msra.mxu0 0.0
    %3357 = vmatprep.subr.mxu0 0.0
    %3358 = vmatpush1.msra.mxu0 0.0
    %3359 = vmatprep.subr.mxu0 0.0
    %3360 = vmatpush1.msra.mxu0 0.0
    %3361 = vmatprep.subr.mxu0 0.0
    %3362 = vmatpush1.msra.mxu0 0.0
    %3363 = vmatprep.subr.mxu0 0.0
    %3364 = vmatpush1.msra.mxu0 0.0
    %3365 = vmatprep.subr.mxu0 0.0
    %3366 = vmatpush1.msra.mxu0 0.0
    %3367 = vmatprep.subr.mxu0 0.0
    %3368 = vmatpush1.msra.mxu0 0.0
    %3369 = vmatprep.subr.mxu0 0.0
    %3370 = vmatpush1.msra.mxu0 0.0
    %3371 = vmatprep.subr.mxu0 0.0
    %3372 = vmatpush1.msra.mxu0 0.0
    %3373 = vmatprep.subr.mxu0 0.0
    %3374 = vmatpush1.msra.mxu0 0.0
    %3375 = vmatprep.subr.mxu0 0.0
    %3376 = vmatpush1.msra.mxu0 0.0
    %3377 = vmatprep.subr.mxu0 0.0
    %3378 = vmatpush1.msra.mxu0 0.0
    %3379 = vmatprep.subr.mxu0 0.0
    %3380 = vmatpush1.msra.mxu0 0.0
    %3381 = vmatprep.subr.mxu0 0.0
    %3382 = vmatpush1.msra.mxu0 0.0
    %3383 = vmatprep.subr.mxu0 0.0
    %3384 = vmatpush1.msra.mxu0 0.0
    %3385 = vmatprep.subr.mxu0 0.0
    %3386 = vmatpush1.msra.mxu0 0.0
    %3387 = vmatprep.subr.mxu0 0.0
    %3388 = vmatpush1.msra.mxu0 0.0
    %3389 = vmatprep.subr.mxu0 0.0
    %3390 = vmatpush1.msra.mxu0 0.0
    %3391 = vmatprep.subr.mxu0 0.0
    %3392 = vmatpush1.msra.mxu0 0.0
    %3393 = vmatprep.mubr.f32.mxu0 0.0
    %3394 = vmatmul.mubr.f32.gmra.mrb[0].mxu0 %v3327
    %v3395 = vpop.f32.mrb[0].mxu0
    %v3396 = vadd.f32 %v138, %v3395
    %v3397 = vpop.f32.mrb[0].mxu0
    %v3398 = vadd.f32 %v142, %v3397
    %3399 = vdwg.mxu0
    %3400 = vmatprep.subr.mxu0 0.0
    %3401 = vmatpush1.msra.mxu0 %v99
    %3402 = vmatprep.subr.mxu0 0.0
    %3403 = vmatpush1.msra.mxu0 %v102
    %3404 = vmatprep.subr.mxu0 0.0
    %3405 = vmatpush1.msra.mxu0 %v105
    %3406 = vmatprep.subr.mxu0 0.0
    %3407 = vmatpush1.msra.mxu0 %v108
    %3408 = vmatprep.subr.mxu0 0.0
    %3409 = vmatpush1.msra.mxu0 %v111
    %3410 = vmatprep.subr.mxu0 0.0
    %3411 = vmatpush1.msra.mxu0 %v114
    %3412 = vmatprep.subr.mxu0 0.0
    %3413 = vmatpush1.msra.mxu0 %v117
    %3414 = vmatprep.subr.mxu0 0.0
    %3415 = vmatpush1.msra.mxu0 %v120
    %3416 = vmatprep.subr.mxu0 0.0
    %3417 = vmatpush1.msra.mxu0 %v123
    %3418 = vmatprep.subr.mxu0 0.0
    %3419 = vmatpush1.msra.mxu0 %v126
    %3420 = vmatprep.subr.mxu0 0.0
    %3421 = vmatpush1.msra.mxu0 %v129
    %3422 = vmatprep.subr.mxu0 0.0
    %3423 = vmatpush1.msra.mxu0 %v132
    %3424 = vmatprep.subr.mxu0 0.0
    %3425 = vmatpush1.msra.mxu0 0.0
    %3426 = vmatprep.subr.mxu0 0.0
    %3427 = vmatpush1.msra.mxu0 0.0
    %3428 = vmatprep.subr.mxu0 0.0
    %3429 = vmatpush1.msra.mxu0 0.0
    %3430 = vmatprep.subr.mxu0 0.0
    %3431 = vmatpush1.msra.mxu0 0.0
    %3432 = vmatprep.subr.mxu0 0.0
    %3433 = vmatpush1.msra.mxu0 0.0
    %3434 = vmatprep.subr.mxu0 0.0
    %3435 = vmatpush1.msra.mxu0 0.0
    %3436 = vmatprep.subr.mxu0 0.0
    %3437 = vmatpush1.msra.mxu0 0.0
    %3438 = vmatprep.subr.mxu0 0.0
    %3439 = vmatpush1.msra.mxu0 0.0
    %3440 = vmatprep.subr.mxu0 0.0
    %3441 = vmatpush1.msra.mxu0 0.0
    %3442 = vmatprep.subr.mxu0 0.0
    %3443 = vmatpush1.msra.mxu0 0.0
    %3444 = vmatprep.subr.mxu0 0.0
    %3445 = vmatpush1.msra.mxu0 0.0
    %3446 = vmatprep.subr.mxu0 0.0
    %3447 = vmatpush1.msra.mxu0 0.0
    %3448 = vmatprep.subr.mxu0 0.0
    %3449 = vmatpush1.msra.mxu0 0.0
    %3450 = vmatprep.subr.mxu0 0.0
    %3451 = vmatpush1.msra.mxu0 0.0
    %3452 = vmatprep.subr.mxu0 0.0
    %3453 = vmatpush1.msra.mxu0 0.0
    %3454 = vmatprep.subr.mxu0 0.0
    %3455 = vmatpush1.msra.mxu0 0.0
    %3456 = vmatprep.subr.mxu0 0.0
    %3457 = vmatpush1.msra.mxu0 0.0
    %3458 = vmatprep.subr.mxu0 0.0
    %3459 = vmatpush1.msra.mxu0 0.0
    %3460 = vmatprep.subr.mxu0 0.0
    %3461 = vmatpush1.msra.mxu0 0.0
    %3462 = vmatprep.subr.mxu0 0.0
    %3463 = vmatpush1.msra.mxu0 0.0
    %3464 = vmatprep.mubr.f32.mxu0 0.0
    %3465 = vmatmul.mubr.f32.gmra.mrb[0].mxu0 %v3327
    %v3466 = vpop.f32.mrb[0].mxu0
    %v3467 = vadd.f32 %v146, %v3466
    %v3468 = vpop.f32.mrb[0].mxu0
    %3469 = vdwg.mxu0
    %v3471 = vsel %vm265, %v3317, 0
    %3473 = vmatprep.subr.mxu0 0.0
    %3474 = vmatpush1.msra.mxu0 %v83
    %3475 = vmatprep.subr.mxu0 0.0
    %3476 = vmatpush1.msra.mxu0 %v84
    %3477 = vmatprep.subr.mxu0 0.0
    %3478 = vmatpush1.msra.mxu0 %v85
    %3479 = vmatprep.subr.mxu0 0.0
    %3480 = vmatpush1.msra.mxu0 %v86
    %3481 = vmatprep.subr.mxu0 0.0
    %3482 = vmatpush1.msra.mxu0 0.0
    %3483 = vmatprep.subr.mxu0 0.0
    %3484 = vmatpush1.msra.mxu0 0.0
    %3485 = vmatprep.subr.mxu0 0.0
    %3486 = vmatpush1.msra.mxu0 0.0
    %3487 = vmatprep.subr.mxu0 0.0
    %3488 = vmatpush1.msra.mxu0 0.0
    %3489 = vmatprep.subr.mxu0 0.0
    %3490 = vmatpush1.msra.mxu0 0.0
    %3491 = vmatprep.subr.mxu0 0.0
    %3492 = vmatpush1.msra.mxu0 0.0
    %3493 = vmatprep.subr.mxu0 0.0
    %3494 = vmatpush1.msra.mxu0 0.0
    %3495 = vmatprep.subr.mxu0 0.0
    %3496 = vmatpush1.msra.mxu0 0.0
    %3497 = vmatprep.subr.mxu0 0.0
    %3498 = vmatpush1.msra.mxu0 0.0
    %3499 = vmatprep.subr.mxu0 0.0
    %3500 = vmatpush1.msra.mxu0 0.0
    %3501 = vmatprep.subr.mxu0 0.0
    %3502 = vmatpush1.msra.mxu0 0.0
    %3503 = vmatprep.subr.mxu0 0.0
    %3504 = vmatpush1.msra.mxu0 0.0
    %3505 = vmatprep.subr.mxu0 0.0
    %3506 = vmatpush1.msra.mxu0 0.0
    %3507 = vmatprep.subr.mxu0 0.0
    %3508 = vmatpush1.msra.mxu0 0.0
    %3509 = vmatprep.subr.mxu0 0.0
    %3510 = vmatpush1.msra.mxu0 0.0
    %3511 = vmatprep.subr.mxu0 0.0
    %3512 = vmatpush1.msra.mxu0 0.0
    %3513 = vmatprep.subr.mxu0 0.0
    %3514 = vmatpush1.msra.mxu0 0.0
    %3515 = vmatprep.subr.mxu0 0.0
    %3516 = vmatpush1.msra.mxu0 0.0
    %3517 = vmatprep.subr.mxu0 0.0
    %3518 = vmatpush1.msra.mxu0 0.0
    %3519 = vmatprep.subr.mxu0 0.0
    %3520 = vmatpush1.msra.mxu0 0.0
    %3521 = vmatprep.subr.mxu0 0.0
    %3522 = vmatpush1.msra.mxu0 0.0
    %3523 = vmatprep.subr.mxu0 0.0
    %3524 = vmatpush1.msra.mxu0 0.0
    %3525 = vmatprep.subr.mxu0 0.0
    %3526 = vmatpush1.msra.mxu0 0.0
    %3527 = vmatprep.subr.mxu0 0.0
    %3528 = vmatpush1.msra.mxu0 0.0
    %3529 = vmatprep.subr.mxu0 0.0
    %3530 = vmatpush1.msra.mxu0 0.0
    %3531 = vmatprep.subr.mxu0 0.0
    %3532 = vmatpush1.msra.mxu0 0.0
    %3533 = vmatprep.subr.mxu0 0.0
    %3534 = vmatpush1.msra.mxu0 0.0
    %3535 = vmatprep.subr.mxu0 0.0
    %3536 = vmatpush1.msra.mxu0 0.0
    %3537 = vmatprep.mubr.f32.mxu0 0.0
    %3538 = vmatmul.mubr.f32.gmra.mrb[0].mxu0 %v3471
    %v3539 = vpop.f32.mrb[0].mxu0
    %v3540 = vadd.f32 %v3396, %v3539
    %v3541 = vpop.f32.mrb[0].mxu0
    %3542 = vdwg.mxu0
    %v3543 = vxor.u32 %v3540, 2147483648
    %v3544 = vmul.f32 %v3543, 1.442695
    %v3545 = vpow.pop %v3544
    %v3546 = vadd.f32 %v3545, 1.0
    %v3547 = vrcp.pop %v3546
    %v3548 = vmul.f32 1.0, %v3547
    %v3549 = vtanh.pop %v3540
    %v3550 = vmul.f32 %v3548, %v2951
    %3552 = vrot.lane.b32.xlu0 %v3549, 32
    %v3553 = vpop.permute.xlu0 %3552
    %v3555 = vmul.f32 %v3548, %v3553
    %3557 = vrot.lane.b32.xlu0 %v3555, 32
    %v3558 = vpop.permute.xlu0 %3557
    %v3560 = vadd.f32 %v3550, %v3558
    %v3561 = vtanh.pop %v3560
    %3563 = vrot.lane.b32.xlu0 %v3561, 32
    %v3564 = vpop.permute.xlu0 %3563
    %v3566 = vmul.f32 %v3548, %v3564
    %3568 = vrot.lane.b32.xlu0 %v3566, 64
    %v3569 = vpop.permute.xlu0 %3568
    %v3570 = vsel %vm265, %v3569, 0
    %3572 = vmatprep.subr.mxu0 0.0
    %3573 = vmatpush1.msra.mxu0 %v88
    %3574 = vmatprep.subr.mxu0 0.0
    %3575 = vmatpush1.msra.mxu0 %v89
    %3576 = vmatprep.subr.mxu0 0.0
    %3577 = vmatpush1.msra.mxu0 %v90
    %3578 = vmatprep.subr.mxu0 0.0
    %3579 = vmatpush1.msra.mxu0 %v91
    %3580 = vmatprep.subr.mxu0 0.0
    %3581 = vmatpush1.msra.mxu0 0.0
    %3582 = vmatprep.subr.mxu0 0.0
    %3583 = vmatpush1.msra.mxu0 0.0
    %3584 = vmatprep.subr.mxu0 0.0
    %3585 = vmatpush1.msra.mxu0 0.0
    %3586 = vmatprep.subr.mxu0 0.0
    %3587 = vmatpush1.msra.mxu0 0.0
    %3588 = vmatprep.subr.mxu0 0.0
    %3589 = vmatpush1.msra.mxu0 0.0
    %3590 = vmatprep.subr.mxu0 0.0
    %3591 = vmatpush1.msra.mxu0 0.0
    %3592 = vmatprep.subr.mxu0 0.0
    %3593 = vmatpush1.msra.mxu0 0.0
    %3594 = vmatprep.subr.mxu0 0.0
    %3595 = vmatpush1.msra.mxu0 0.0
    %3596 = vmatprep.subr.mxu0 0.0
    %3597 = vmatpush1.msra.mxu0 0.0
    %3598 = vmatprep.subr.mxu0 0.0
    %3599 = vmatpush1.msra.mxu0 0.0
    %3600 = vmatprep.subr.mxu0 0.0
    %3601 = vmatpush1.msra.mxu0 0.0
    %3602 = vmatprep.subr.mxu0 0.0
    %3603 = vmatpush1.msra.mxu0 0.0
    %3604 = vmatprep.subr.mxu0 0.0
    %3605 = vmatpush1.msra.mxu0 0.0
    %3606 = vmatprep.subr.mxu0 0.0
    %3607 = vmatpush1.msra.mxu0 0.0
    %3608 = vmatprep.subr.mxu0 0.0
    %3609 = vmatpush1.msra.mxu0 0.0
    %3610 = vmatprep.subr.mxu0 0.0
    %3611 = vmatpush1.msra.mxu0 0.0
    %3612 = vmatprep.subr.mxu0 0.0
    %3613 = vmatpush1.msra.mxu0 0.0
    %3614 = vmatprep.subr.mxu0 0.0
    %3615 = vmatpush1.msra.mxu0 0.0
    %3616 = vmatprep.subr.mxu0 0.0
    %3617 = vmatpush1.msra.mxu0 0.0
    %3618 = vmatprep.subr.mxu0 0.0
    %3619 = vmatpush1.msra.mxu0 0.0
    %3620 = vmatprep.subr.mxu0 0.0
    %3621 = vmatpush1.msra.mxu0 0.0
    %3622 = vmatprep.subr.mxu0 0.0
    %3623 = vmatpush1.msra.mxu0 0.0
    %3624 = vmatprep.subr.mxu0 0.0
    %3625 = vmatpush1.msra.mxu0 0.0
    %3626 = vmatprep.subr.mxu0 0.0
    %3627 = vmatpush1.msra.mxu0 0.0
    %3628 = vmatprep.subr.mxu0 0.0
    %3629 = vmatpush1.msra.mxu0 0.0
    %3630 = vmatprep.subr.mxu0 0.0
    %3631 = vmatpush1.msra.mxu0 0.0
    %3632 = vmatprep.subr.mxu0 0.0
    %3633 = vmatpush1.msra.mxu0 0.0
    %3634 = vmatprep.subr.mxu0 0.0
    %3635 = vmatpush1.msra.mxu0 0.0
    %3636 = vmatprep.mubr.f32.mxu0 0.0
    %3637 = vmatmul.mubr.f32.gmra.mrb[0].mxu0 %v3570
    %v3638 = vpop.f32.mrb[0].mxu0
    %v3639 = vadd.f32 %v3398, %v3638
    %v3640 = vpop.f32.mrb[0].mxu0
    %3641 = vdwg.mxu0
    %v3642 = vxor.u32 %v3639, 2147483648
    %v3643 = vmul.f32 %v3642, 1.442695
    %v3644 = vpow.pop %v3643
    %v3645 = vadd.f32 %v3644, 1.0
    %v3646 = vrcp.pop %v3645
    %v3647 = vmul.f32 1.0, %v3646
    %v3648 = vtanh.pop %v3639
    %v3649 = vmul.f32 %v3647, %v3050
    %3651 = vrot.lane.b32.xlu0 %v3648, 32
    %v3652 = vpop.permute.xlu0 %3651
    %v3654 = vmul.f32 %v3647, %v3652
    %3656 = vrot.lane.b32.xlu0 %v3654, 32
    %v3657 = vpop.permute.xlu0 %3656
    %v3659 = vadd.f32 %v3649, %v3657
    %v3660 = vtanh.pop %v3659
    %3662 = vrot.lane.b32.xlu0 %v3660, 32
    %v3663 = vpop.permute.xlu0 %3662
    %v3665 = vmul.f32 %v3647, %v3663
    %3667 = vrot.lane.b32.xlu0 %v3665, 64
    %v3668 = vpop.permute.xlu0 %3667
    %v3669 = vsel %vm265, %v3668, 0
    %3671 = vmatprep.subr.mxu0 0.0
    %3672 = vmatpush1.msra.mxu0 %v93
    %3673 = vmatprep.subr.mxu0 0.0
    %3674 = vmatpush1.msra.mxu0 %v94
    %3675 = vmatprep.subr.mxu0 0.0
    %3676 = vmatpush1.msra.mxu0 %v95
    %3677 = vmatprep.subr.mxu0 0.0
    %3678 = vmatpush1.msra.mxu0 %v96
    %3679 = vmatprep.subr.mxu0 0.0
    %3680 = vmatpush1.msra.mxu0 0.0
    %3681 = vmatprep.subr.mxu0 0.0
    %3682 = vmatpush1.msra.mxu0 0.0
    %3683 = vmatprep.subr.mxu0 0.0
    %3684 = vmatpush1.msra.mxu0 0.0
    %3685 = vmatprep.subr.mxu0 0.0
    %3686 = vmatpush1.msra.mxu0 0.0
    %3687 = vmatprep.subr.mxu0 0.0
    %3688 = vmatpush1.msra.mxu0 0.0
    %3689 = vmatprep.subr.mxu0 0.0
    %3690 = vmatpush1.msra.mxu0 0.0
    %3691 = vmatprep.subr.mxu0 0.0
    %3692 = vmatpush1.msra.mxu0 0.0
    %3693 = vmatprep.subr.mxu0 0.0
    %3694 = vmatpush1.msra.mxu0 0.0
    %3695 = vmatprep.subr.mxu0 0.0
    %3696 = vmatpush1.msra.mxu0 0.0
    %3697 = vmatprep.subr.mxu0 0.0
    %3698 = vmatpush1.msra.mxu0 0.0
    %3699 = vmatprep.subr.mxu0 0.0
    %3700 = vmatpush1.msra.mxu0 0.0
    %3701 = vmatprep.subr.mxu0 0.0
    %3702 = vmatpush1.msra.mxu0 0.0
    %3703 = vmatprep.subr.mxu0 0.0
    %3704 = vmatpush1.msra.mxu0 0.0
    %3705 = vmatprep.subr.mxu0 0.0
    %3706 = vmatpush1.msra.mxu0 0.0
    %3707 = vmatprep.subr.mxu0 0.0
    %3708 = vmatpush1.msra.mxu0 0.0
    %3709 = vmatprep.subr.mxu0 0.0
    %3710 = vmatpush1.msra.mxu0 0.0
    %3711 = vmatprep.subr.mxu0 0.0
    %3712 = vmatpush1.msra.mxu0 0.0
    %3713 = vmatprep.subr.mxu0 0.0
    %3714 = vmatpush1.msra.mxu0 0.0
    %3715 = vmatprep.subr.mxu0 0.0
    %3716 = vmatpush1.msra.mxu0 0.0
    %3717 = vmatprep.subr.mxu0 0.0
    %3718 = vmatpush1.msra.mxu0 0.0
    %3719 = vmatprep.subr.mxu0 0.0
    %3720 = vmatpush1.msra.mxu0 0.0
    %3721 = vmatprep.subr.mxu0 0.0
    %3722 = vmatpush1.msra.mxu0 0.0
    %3723 = vmatprep.subr.mxu0 0.0
    %3724 = vmatpush1.msra.mxu0 0.0
    %3725 = vmatprep.subr.mxu0 0.0
    %3726 = vmatpush1.msra.mxu0 0.0
    %3727 = vmatprep.subr.mxu0 0.0
    %3728 = vmatpush1.msra.mxu0 0.0
    %3729 = vmatprep.subr.mxu0 0.0
    %3730 = vmatpush1.msra.mxu0 0.0
    %3731 = vmatprep.subr.mxu0 0.0
    %3732 = vmatpush1.msra.mxu0 0.0
    %3733 = vmatprep.subr.mxu0 0.0
    %3734 = vmatpush1.msra.mxu0 0.0
    %3735 = vmatprep.mubr.f32.mxu0 0.0
    %3736 = vmatmul.mubr.f32.gmra.mrb[0].mxu0 %v3669
    %v3737 = vpop.f32.mrb[0].mxu0
    %v3738 = vadd.f32 %v3467, %v3737
    %v3739 = vpop.f32.mrb[0].mxu0
    %3740 = vdwg.mxu0
    %v3741 = vxor.u32 %v3738, 2147483648
    %v3742 = vmul.f32 %v3741, 1.442695
    %v3743 = vpow.pop %v3742
    %v3744 = vadd.f32 %v3743, 1.0
    %v3745 = vrcp.pop %v3744
    %v3746 = vmul.f32 1.0, %v3745
    %v3747 = vtanh.pop %v3738
    %v3748 = vmul.f32 %v3746, %v3149
    %3750 = vrot.lane.b32.xlu0 %v3747, 32
    %v3751 = vpop.permute.xlu0 %3750
    %v3753 = vmul.f32 %v3746, %v3751
    %3755 = vrot.lane.b32.xlu0 %v3753, 32
    %v3756 = vpop.permute.xlu0 %3755
    %v3758 = vadd.f32 %v3748, %v3756
    %v3759 = vtanh.pop %v3758
    %3761 = vrot.lane.b32.xlu0 %v3759, 32
    %v3762 = vpop.permute.xlu0 %3761
    %v3764 = vmul.f32 %v3746, %v3762
    %3766 = vrot.lane.b32.xlu0 %v3764, 64
    %v3767 = vpop.permute.xlu0 %3766
    %v3768 = vsel %vm265, %v3767, 0
    %3770 = vmatprep.subr.mxu0 0.0
    %3771 = vmatpush1.msra.mxu0 %v150
    %3772 = vmatprep.subr.mxu0 0.0
    %3773 = vmatpush1.msra.mxu0 %v151
    %3774 = vmatprep.subr.mxu0 0.0
    %3775 = vmatpush1.msra.mxu0 %v152
    %3776 = vmatprep.subr.mxu0 0.0
    %3777 = vmatpush1.msra.mxu0 %v153
    %3778 = vmatprep.subr.mxu0 0.0
    %3779 = vmatpush1.msra.mxu0 0.0
    %3780 = vmatprep.subr.mxu0 0.0
    %3781 = vmatpush1.msra.mxu0 0.0
    %3782 = vmatprep.subr.mxu0 0.0
    %3783 = vmatpush1.msra.mxu0 0.0
    %3784 = vmatprep.subr.mxu0 0.0
    %3785 = vmatpush1.msra.mxu0 0.0
    %3786 = vmatprep.subr.mxu0 0.0
    %3787 = vmatpush1.msra.mxu0 0.0
    %3788 = vmatprep.subr.mxu0 0.0
    %3789 = vmatpush1.msra.mxu0 0.0
    %3790 = vmatprep.subr.mxu0 0.0
    %3791 = vmatpush1.msra.mxu0 0.0
    %3792 = vmatprep.subr.mxu0 0.0
    %3793 = vmatpush1.msra.mxu0 0.0
    %3794 = vmatprep.subr.mxu0 0.0
    %3795 = vmatpush1.msra.mxu0 0.0
    %3796 = vmatprep.subr.mxu0 0.0
    %3797 = vmatpush1.msra.mxu0 0.0
    %3798 = vmatprep.subr.mxu0 0.0
    %3799 = vmatpush1.msra.mxu0 0.0
    %3800 = vmatprep.subr.mxu0 0.0
    %3801 = vmatpush1.msra.mxu0 0.0
    %3802 = vmatprep.subr.mxu0 0.0
    %3803 = vmatpush1.msra.mxu0 0.0
    %3804 = vmatprep.subr.mxu0 0.0
    %3805 = vmatpush1.msra.mxu0 0.0
    %3806 = vmatprep.subr.mxu0 0.0
    %3807 = vmatpush1.msra.mxu0 0.0
    %3808 = vmatprep.subr.mxu0 0.0
    %3809 = vmatpush1.msra.mxu0 0.0
    %3810 = vmatprep.subr.mxu0 0.0
    %3811 = vmatpush1.msra.mxu0 0.0
    %3812 = vmatprep.subr.mxu0 0.0
    %3813 = vmatpush1.msra.mxu0 0.0
    %3814 = vmatprep.subr.mxu0 0.0
    %3815 = vmatpush1.msra.mxu0 0.0
    %3816 = vmatprep.subr.mxu0 0.0
    %3817 = vmatpush1.msra.mxu0 0.0
    %3818 = vmatprep.subr.mxu0 0.0
    %3819 = vmatpush1.msra.mxu0 0.0
    %3820 = vmatprep.subr.mxu0 0.0
    %3821 = vmatpush1.msra.mxu0 0.0
    %3822 = vmatprep.subr.mxu0 0.0
    %3823 = vmatpush1.msra.mxu0 0.0
    %3824 = vmatprep.subr.mxu0 0.0
    %3825 = vmatpush1.msra.mxu0 0.0
    %3826 = vmatprep.subr.mxu0 0.0
    %3827 = vmatpush1.msra.mxu0 0.0
    %3828 = vmatprep.subr.mxu0 0.0
    %3829 = vmatpush1.msra.mxu0 0.0
    %3830 = vmatprep.subr.mxu0 0.0
    %3831 = vmatpush1.msra.mxu0 0.0
    %3832 = vmatprep.subr.mxu0 0.0
    %3833 = vmatpush1.msra.mxu0 0.0
    %3834 = vmatprep.mubr.f32.mxu0 0.0
    %3835 = vmatmul.mubr.f32.gmra.mrb[0].mxu0 %v3768
    %v3836 = vpop.f32.mrb[0].mxu0
    %v3837 = vadd.f32 %v159, %v3836
    %v3838 = vpop.f32.mrb[0].mxu0
    %3839 = vdwg.mxu0
    %s3840 = scalar_lea.vmem [#allocation7], 10
    %3841 = vst [vmem:[%s3840] sm:$0x3] %v3837
    %v3842 = vsel %vm176, %v3837, -inf
    %3843 = vmax.index.xlane.f32.xlu0 %v3842
    %v3844 = vpop.xlane.xlu0 %3843
    %s3845 = sld [smem:[#allocation2 + $0x6]]
    %p3846 = scmp.gt.s32.totalorder %s3845, 0
    %s3847 = scalar_lea.vmem %s1, 12
    %v3848 = vld [vmem:[%s3847] sm:$0x3]
    %v3849 = vsel %vm176, %v3848, -inf
    %3850 = vmax.index.xlane.f32.xlu0 %v3849
    %v3851 = vpop.xlane.xlu0 %3850
    %s3852 = scalar_select %p3846, 1, 0
    %v3853 = vstv %s3852
    %vm3854 = vcmp.eq.s32.totalorder %v3853, 1
    %v3855 = vsel %vm3854, %v3851, %v3844
    %vm3856 = vcmp.eq.s32.totalorder %v3855, %v162
    %v3857 = vsel %vm3856, 1, 0
    %v3858 = vcvt.s32.f32 %v3857
    %3859 = vmatprep.subr.mxu0 0.0
    %3860 = vmatpush1.msra.mxu0 %v67
    %3861 = vmatprep.subr.mxu0 0.0
    %3862 = vmatpush1.msra.mxu0 %v68
    %3863 = vmatprep.subr.mxu0 0.0
    %3864 = vmatpush1.msra.mxu0 %v69
    %3865 = vmatprep.subr.mxu0 0.0
    %3866 = vmatpush1.msra.mxu0 %v70
    %3867 = vmatprep.subr.mxu0 0.0
    %3868 = vmatpush1.msra.mxu0 %v71
    %3869 = vmatprep.subr.mxu0 0.0
    %3870 = vmatpush1.msra.mxu0 %v72
    %3871 = vmatprep.subr.mxu0 0.0
    %3872 = vmatpush1.msra.mxu0 %v73
    %3873 = vmatprep.subr.mxu0 0.0
    %3874 = vmatpush1.msra.mxu0 %v74
    %3875 = vmatprep.subr.mxu0 0.0
    %3876 = vmatpush1.msra.mxu0 %v75
    %3877 = vmatprep.subr.mxu0 0.0
    %3878 = vmatpush1.msra.mxu0 %v76
    %3879 = vmatprep.subr.mxu0 0.0
    %3880 = vmatpush1.msra.mxu0 %v77
    %3881 = vmatprep.subr.mxu0 0.0
    %3882 = vmatpush1.msra.mxu0 %v78
    %3883 = vmatprep.subr.mxu0 0.0
    %3884 = vmatpush1.msra.mxu0 %v79
    %3885 = vmatprep.subr.mxu0 0.0
    %3886 = vmatpush1.msra.mxu0 %v80
    %3887 = vmatprep.subr.mxu0 0.0
    %3888 = vmatpush1.msra.mxu0 %v81
    %3889 = vmatprep.subr.mxu0 0.0
    %3890 = vmatpush1.msra.mxu0 %v82
    %3891 = vmatprep.subr.mxu0 0.0
    %3892 = vmatpush1.msra.mxu0 0.0
    %3893 = vmatprep.subr.mxu0 0.0
    %3894 = vmatpush1.msra.mxu0 0.0
    %3895 = vmatprep.subr.mxu0 0.0
    %3896 = vmatpush1.msra.mxu0 0.0
    %3897 = vmatprep.subr.mxu0 0.0
    %3898 = vmatpush1.msra.mxu0 0.0
    %3899 = vmatprep.subr.mxu0 0.0
    %3900 = vmatpush1.msra.mxu0 0.0
    %3901 = vmatprep.subr.mxu0 0.0
    %3902 = vmatpush1.msra.mxu0 0.0
    %3903 = vmatprep.subr.mxu0 0.0
    %3904 = vmatpush1.msra.mxu0 0.0
    %3905 = vmatprep.subr.mxu0 0.0
    %3906 = vmatpush1.msra.mxu0 0.0
    %3907 = vmatprep.subr.mxu0 0.0
    %3908 = vmatpush1.msra.mxu0 0.0
    %3909 = vmatprep.subr.mxu0 0.0
    %3910 = vmatpush1.msra.mxu0 0.0
    %3911 = vmatprep.subr.mxu0 0.0
    %3912 = vmatpush1.msra.mxu0 0.0
    %3913 = vmatprep.subr.mxu0 0.0
    %3914 = vmatpush1.msra.mxu0 0.0
    %3915 = vmatprep.subr.mxu0 0.0
    %3916 = vmatpush1.msra.mxu0 0.0
    %3917 = vmatprep.subr.mxu0 0.0
    %3918 = vmatpush1.msra.mxu0 0.0
    %3919 = vmatprep.subr.mxu0 0.0
    %3920 = vmatpush1.msra.mxu0 0.0
    %3921 = vmatprep.subr.mxu0 0.0
    %3922 = vmatpush1.msra.mxu0 0.0
    %3923 = vmatprep.mubr.f32.mxu0 0.0
    %3924 = vmatmul.mubr.f32.gmra.mrb[0].mxu0 %v3858
    %v3925 = vpop.f32.mrb[0].mxu0
    %v3926 = vadd.f32 0.0, %v3925
    %v3927 = vpop.f32.mrb[0].mxu0
    %3928 = vdwg.mxu0
    %3930 = vrot.lane.b32.xlu0 %v3665, 96
    %v3931 = vpop.permute.xlu0 %3930
    %v3933 = vsel %vm265, %v3569, %v3931
    %v3934 = vsel %vm267, %v3933, %v3764
    %v3936 = vsel %vm269, %v3934, 0
    %3938 = vmatprep.subr.mxu0 %v98
    %3939 = vmatpush1.msra.mxu0 %v97
    %3940 = vmatprep.subr.mxu0 %v101
    %3941 = vmatpush1.msra.mxu0 %v100
    %3942 = vmatprep.subr.mxu0 %v104
    %3943 = vmatpush1.msra.mxu0 %v103
    %3944 = vmatprep.subr.mxu0 %v107
    %3945 = vmatpush1.msra.mxu0 %v106
    %3946 = vmatprep.subr.mxu0 %v110
    %3947 = vmatpush1.msra.mxu0 %v109
    %3948 = vmatprep.subr.mxu0 %v113
    %3949 = vmatpush1.msra.mxu0 %v112
    %3950 = vmatprep.subr.mxu0 %v116
    %3951 = vmatpush1.msra.mxu0 %v115
    %3952 = vmatprep.subr.mxu0 %v119
    %3953 = vmatpush1.msra.mxu0 %v118
    %3954 = vmatprep.subr.mxu0 %v122
    %3955 = vmatpush1.msra.mxu0 %v121
    %3956 = vmatprep.subr.mxu0 %v125
    %3957 = vmatpush1.msra.mxu0 %v124
    %3958 = vmatprep.subr.mxu0 %v128
    %3959 = vmatpush1.msra.mxu0 %v127
    %3960 = vmatprep.subr.mxu0 %v131
    %3961 = vmatpush1.msra.mxu0 %v130
    %3962 = vmatprep.subr.mxu0 0.0
    %3963 = vmatpush1.msra.mxu0 0.0
    %3964 = vmatprep.subr.mxu0 0.0
    %3965 = vmatpush1.msra.mxu0 0.0
    %3966 = vmatprep.subr.mxu0 0.0
    %3967 = vmatpush1.msra.mxu0 0.0
    %3968 = vmatprep.subr.mxu0 0.0
    %3969 = vmatpush1.msra.mxu0 0.0
    %3970 = vmatprep.subr.mxu0 0.0
    %3971 = vmatpush1.msra.mxu0 0.0
    %3972 = vmatprep.subr.mxu0 0.0
    %3973 = vmatpush1.msra.mxu0 0.0
    %3974 = vmatprep.subr.mxu0 0.0
    %3975 = vmatpush1.msra.mxu0 0.0
    %3976 = vmatprep.subr.mxu0 0.0
    %3977 = vmatpush1.msra.mxu0 0.0
    %3978 = vmatprep.subr.mxu0 0.0
    %3979 = vmatpush1.msra.mxu0 0.0
    %3980 = vmatprep.subr.mxu0 0.0
    %3981 = vmatpush1.msra.mxu0 0.0
    %3982 = vmatprep.subr.mxu0 0.0
    %3983 = vmatpush1.msra.mxu0 0.0
    %3984 = vmatprep.subr.mxu0 0.0
    %3985 = vmatpush1.msra.mxu0 0.0
    %3986 = vmatprep.subr.mxu0 0.0
    %3987 = vmatpush1.msra.mxu0 0.0
    %3988 = vmatprep.subr.mxu0 0.0
    %3989 = vmatpush1.msra.mxu0 0.0
    %3990 = vmatprep.subr.mxu0 0.0
    %3991 = vmatpush1.msra.mxu0 0.0
    %3992 = vmatprep.subr.mxu0 0.0
    %3993 = vmatpush1.msra.mxu0 0.0
    %3994 = vmatprep.subr.mxu0 0.0
    %3995 = vmatpush1.msra.mxu0 0.0
    %3996 = vmatprep.subr.mxu0 0.0
    %3997 = vmatpush1.msra.mxu0 0.0
    %3998 = vmatprep.subr.mxu0 0.0
    %3999 = vmatpush1.msra.mxu0 0.0
    %4000 = vmatprep.subr.mxu0 0.0
    %4001 = vmatpush1.msra.mxu0 0.0
    %4002 = vmatprep.mubr.f32.mxu0 0.0
    %4003 = vmatmul.mubr.f32.gmra.mrb[0].mxu0 %v3936
    %v4004 = vpop.f32.mrb[0].mxu0
    %v4005 = vadd.f32 %v138, %v4004
    %v4006 = vpop.f32.mrb[0].mxu0
    %v4007 = vadd.f32 %v142, %v4006
    %4008 = vdwg.mxu0
    %4009 = vmatprep.subr.mxu0 0.0
    %4010 = vmatpush1.msra.mxu0 %v99
    %4011 = vmatprep.subr.mxu0 0.0
    %4012 = vmatpush1.msra.mxu0 %v102
    %4013 = vmatprep.subr.mxu0 0.0
    %4014 = vmatpush1.msra.mxu0 %v105
    %4015 = vmatprep.subr.mxu0 0.0
    %4016 = vmatpush1.msra.mxu0 %v108
    %4017 = vmatprep.subr.mxu0 0.0
    %4018 = vmatpush1.msra.mxu0 %v111
    %4019 = vmatprep.subr.mxu0 0.0
    %4020 = vmatpush1.msra.mxu0 %v114
    %4021 = vmatprep.subr.mxu0 0.0
    %4022 = vmatpush1.msra.mxu0 %v117
    %4023 = vmatprep.subr.mxu0 0.0
    %4024 = vmatpush1.msra.mxu0 %v120
    %4025 = vmatprep.subr.mxu0 0.0
    %4026 = vmatpush1.msra.mxu0 %v123
    %4027 = vmatprep.subr.mxu0 0.0
    %4028 = vmatpush1.msra.mxu0 %v126
    %4029 = vmatprep.subr.mxu0 0.0
    %4030 = vmatpush1.msra.mxu0 %v129
    %4031 = vmatprep.subr.mxu0 0.0
    %4032 = vmatpush1.msra.mxu0 %v132
    %4033 = vmatprep.subr.mxu0 0.0
    %4034 = vmatpush1.msra.mxu0 0.0
    %4035 = vmatprep.subr.mxu0 0.0
    %4036 = vmatpush1.msra.mxu0 0.0
    %4037 = vmatprep.subr.mxu0 0.0
    %4038 = vmatpush1.msra.mxu0 0.0
    %4039 = vmatprep.subr.mxu0 0.0
    %4040 = vmatpush1.msra.mxu0 0.0
    %4041 = vmatprep.subr.mxu0 0.0
    %4042 = vmatpush1.msra.mxu0 0.0
    %4043 = vmatprep.subr.mxu0 0.0
    %4044 = vmatpush1.msra.mxu0 0.0
    %4045 = vmatprep.subr.mxu0 0.0
    %4046 = vmatpush1.msra.mxu0 0.0
    %4047 = vmatprep.subr.mxu0 0.0
    %4048 = vmatpush1.msra.mxu0 0.0
    %4049 = vmatprep.subr.mxu0 0.0
    %4050 = vmatpush1.msra.mxu0 0.0
    %4051 = vmatprep.subr.mxu0 0.0
    %4052 = vmatpush1.msra.mxu0 0.0
    %4053 = vmatprep.subr.mxu0 0.0
    %4054 = vmatpush1.msra.mxu0 0.0
    %4055 = vmatprep.subr.mxu0 0.0
    %4056 = vmatpush1.msra.mxu0 0.0
    %4057 = vmatprep.subr.mxu0 0.0
    %4058 = vmatpush1.msra.mxu0 0.0
    %4059 = vmatprep.subr.mxu0 0.0
    %4060 = vmatpush1.msra.mxu0 0.0
    %4061 = vmatprep.subr.mxu0 0.0
    %4062 = vmatpush1.msra.mxu0 0.0
    %4063 = vmatprep.subr.mxu0 0.0
    %4064 = vmatpush1.msra.mxu0 0.0
    %4065 = vmatprep.subr.mxu0 0.0
    %4066 = vmatpush1.msra.mxu0 0.0
    %4067 = vmatprep.subr.mxu0 0.0
    %4068 = vmatpush1.msra.mxu0 0.0
    %4069 = vmatprep.subr.mxu0 0.0
    %4070 = vmatpush1.msra.mxu0 0.0
    %4071 = vmatprep.subr.mxu0 0.0
    %4072 = vmatpush1.msra.mxu0 0.0
    %4073 = vmatprep.mubr.f32.mxu0 0.0
    %4074 = vmatmul.mubr.f32.gmra.mrb[0].mxu0 %v3936
    %v4075 = vpop.f32.mrb[0].mxu0
    %v4076 = vadd.f32 %v146, %v4075
    %v4077 = vpop.f32.mrb[0].mxu0
    %4078 = vdwg.mxu0
    %v4080 = vsel %vm265, %v3926, 0
    %4082 = vmatprep.subr.mxu0 0.0
    %4083 = vmatpush1.msra.mxu0 %v83
    %4084 = vmatprep.subr.mxu0 0.0
    %4085 = vmatpush1.msra.mxu0 %v84
    %4086 = vmatprep.subr.mxu0 0.0
    %4087 = vmatpush1.msra.mxu0 %v85
    %4088 = vmatprep.subr.mxu0 0.0
    %4089 = vmatpush1.msra.mxu0 %v86
    %4090 = vmatprep.subr.mxu0 0.0
    %4091 = vmatpush1.msra.mxu0 0.0
    %4092 = vmatprep.subr.mxu0 0.0
    %4093 = vmatpush1.msra.mxu0 0.0
    %4094 = vmatprep.subr.mxu0 0.0
    %4095 = vmatpush1.msra.mxu0 0.0
    %4096 = vmatprep.subr.mxu0 0.0
    %4097 = vmatpush1.msra.mxu0 0.0
    %4098 = vmatprep.subr.mxu0 0.0
    %4099 = vmatpush1.msra.mxu0 0.0
    %4100 = vmatprep.subr.mxu0 0.0
    %4101 = vmatpush1.msra.mxu0 0.0
    %4102 = vmatprep.subr.mxu0 0.0
    %4103 = vmatpush1.msra.mxu0 0.0
    %4104 = vmatprep.subr.mxu0 0.0
    %4105 = vmatpush1.msra.mxu0 0.0
    %4106 = vmatprep.subr.mxu0 0.0
    %4107 = vmatpush1.msra.mxu0 0.0
    %4108 = vmatprep.subr.mxu0 0.0
    %4109 = vmatpush1.msra.mxu0 0.0
    %4110 = vmatprep.subr.mxu0 0.0
    %4111 = vmatpush1.msra.mxu0 0.0
    %4112 = vmatprep.subr.mxu0 0.0
    %4113 = vmatpush1.msra.mxu0 0.0
    %4114 = vmatprep.subr.mxu0 0.0
    %4115 = vmatpush1.msra.mxu0 0.0
    %4116 = vmatprep.subr.mxu0 0.0
    %4117 = vmatpush1.msra.mxu0 0.0
    %4118 = vmatprep.subr.mxu0 0.0
    %4119 = vmatpush1.msra.mxu0 0.0
    %4120 = vmatprep.subr.mxu0 0.0
    %4121 = vmatpush1.msra.mxu0 0.0
    %4122 = vmatprep.subr.mxu0 0.0
    %4123 = vmatpush1.msra.mxu0 0.0
    %4124 = vmatprep.subr.mxu0 0.0
    %4125 = vmatpush1.msra.mxu0 0.0
    %4126 = vmatprep.subr.mxu0 0.0
    %4127 = vmatpush1.msra.mxu0 0.0
    %4128 = vmatprep.subr.mxu0 0.0
    %4129 = vmatpush1.msra.mxu0 0.0
    %4130 = vmatprep.subr.mxu0 0.0
    %4131 = vmatpush1.msra.mxu0 0.0
    %4132 = vmatprep.subr.mxu0 0.0
    %4133 = vmatpush1.msra.mxu0 0.0
    %4134 = vmatprep.subr.mxu0 0.0
    %4135 = vmatpush1.msra.mxu0 0.0
    %4136 = vmatprep.subr.mxu0 0.0
    %4137 = vmatpush1.msra.mxu0 0.0
    %4138 = vmatprep.subr.mxu0 0.0
    %4139 = vmatpush1.msra.mxu0 0.0
    %4140 = vmatprep.subr.mxu0 0.0
    %4141 = vmatpush1.msra.mxu0 0.0
    %4142 = vmatprep.subr.mxu0 0.0
    %4143 = vmatpush1.msra.mxu0 0.0
    %4144 = vmatprep.subr.mxu0 0.0
    %4145 = vmatpush1.msra.mxu0 0.0
    %4146 = vmatprep.mubr.f32.mxu0 0.0
    %4147 = vmatmul.mubr.f32.gmra.mrb[0].mxu0 %v4080
    %v4148 = vpop.f32.mrb[0].mxu0
    %v4149 = vadd.f32 %v4005, %v4148
    %v4150 = vpop.f32.mrb[0].mxu0
    %4151 = vdwg.mxu0
    %v4152 = vxor.u32 %v4149, 2147483648
    %v4153 = vmul.f32 %v4152, 1.442695
    %v4154 = vpow.pop %v4153
    %v4155 = vadd.f32 %v4154, 1.0
    %v4156 = vrcp.pop %v4155
    %v4157 = vmul.f32 1.0, %v4156
    %v4158 = vtanh.pop %v4149
    %v4159 = vmul.f32 %v4157, %v3560
    %4161 = vrot.lane.b32.xlu0 %v4158, 32
    %v4162 = vpop.permute.xlu0 %4161
    %v4164 = vmul.f32 %v4157, %v4162
    %4166 = vrot.lane.b32.xlu0 %v4164, 32
    %v4167 = vpop.permute.xlu0 %4166
    %v4169 = vadd.f32 %v4159, %v4167
    %v4170 = vtanh.pop %v4169
    %4172 = vrot.lane.b32.xlu0 %v4170, 32
    %v4173 = vpop.permute.xlu0 %4172
    %v4175 = vmul.f32 %v4157, %v4173
    %4177 = vrot.lane.b32.xlu0 %v4175, 64
    %v4178 = vpop.permute.xlu0 %4177
    %v4179 = vsel %vm265, %v4178, 0
    %4181 = vmatprep.subr.mxu0 0.0
    %4182 = vmatpush1.msra.mxu0 %v88
    %4183 = vmatprep.subr.mxu0 0.0
    %4184 = vmatpush1.msra.mxu0 %v89
    %4185 = vmatprep.subr.mxu0 0.0
    %4186 = vmatpush1.msra.mxu0 %v90
    %4187 = vmatprep.subr.mxu0 0.0
    %4188 = vmatpush1.msra.mxu0 %v91
    %4189 = vmatprep.subr.mxu0 0.0
    %4190 = vmatpush1.msra.mxu0 0.0
    %4191 = vmatprep.subr.mxu0 0.0
    %4192 = vmatpush1.msra.mxu0 0.0
    %4193 = vmatprep.subr.mxu0 0.0
    %4194 = vmatpush1.msra.mxu0 0.0
    %4195 = vmatprep.subr.mxu0 0.0
    %4196 = vmatpush1.msra.mxu0 0.0
    %4197 = vmatprep.subr.mxu0 0.0
    %4198 = vmatpush1.msra.mxu0 0.0
    %4199 = vmatprep.subr.mxu0 0.0
    %4200 = vmatpush1.msra.mxu0 0.0
    %4201 = vmatprep.subr.mxu0 0.0
    %4202 = vmatpush1.msra.mxu0 0.0
    %4203 = vmatprep.subr.mxu0 0.0
    %4204 = vmatpush1.msra.mxu0 0.0
    %4205 = vmatprep.subr.mxu0 0.0
    %4206 = vmatpush1.msra.mxu0 0.0
    %4207 = vmatprep.subr.mxu0 0.0
    %4208 = vmatpush1.msra.mxu0 0.0
    %4209 = vmatprep.subr.mxu0 0.0
    %4210 = vmatpush1.msra.mxu0 0.0
    %4211 = vmatprep.subr.mxu0 0.0
    %4212 = vmatpush1.msra.mxu0 0.0
    %4213 = vmatprep.subr.mxu0 0.0
    %4214 = vmatpush1.msra.mxu0 0.0
    %4215 = vmatprep.subr.mxu0 0.0
    %4216 = vmatpush1.msra.mxu0 0.0
    %4217 = vmatprep.subr.mxu0 0.0
    %4218 = vmatpush1.msra.mxu0 0.0
    %4219 = vmatprep.subr.mxu0 0.0
    %4220 = vmatpush1.msra.mxu0 0.0
    %4221 = vmatprep.subr.mxu0 0.0
    %4222 = vmatpush1.msra.mxu0 0.0
    %4223 = vmatprep.subr.mxu0 0.0
    %4224 = vmatpush1.msra.mxu0 0.0
    %4225 = vmatprep.subr.mxu0 0.0
    %4226 = vmatpush1.msra.mxu0 0.0
    %4227 = vmatprep.subr.mxu0 0.0
    %4228 = vmatpush1.msra.mxu0 0.0
    %4229 = vmatprep.subr.mxu0 0.0
    %4230 = vmatpush1.msra.mxu0 0.0
    %4231 = vmatprep.subr.mxu0 0.0
    %4232 = vmatpush1.msra.mxu0 0.0
    %4233 = vmatprep.subr.mxu0 0.0
    %4234 = vmatpush1.msra.mxu0 0.0
    %4235 = vmatprep.subr.mxu0 0.0
    %4236 = vmatpush1.msra.mxu0 0.0
    %4237 = vmatprep.subr.mxu0 0.0
    %4238 = vmatpush1.msra.mxu0 0.0
    %4239 = vmatprep.subr.mxu0 0.0
    %4240 = vmatpush1.msra.mxu0 0.0
    %4241 = vmatprep.subr.mxu0 0.0
    %4242 = vmatpush1.msra.mxu0 0.0
    %4243 = vmatprep.subr.mxu0 0.0
    %4244 = vmatpush1.msra.mxu0 0.0
    %4245 = vmatprep.mubr.f32.mxu0 0.0
    %4246 = vmatmul.mubr.f32.gmra.mrb[0].mxu0 %v4179
    %v4247 = vpop.f32.mrb[0].mxu0
    %v4248 = vadd.f32 %v4007, %v4247
    %v4249 = vpop.f32.mrb[0].mxu0
    %4250 = vdwg.mxu0
    %v4251 = vxor.u32 %v4248, 2147483648
    %v4252 = vmul.f32 %v4251, 1.442695
    %v4253 = vpow.pop %v4252
    %v4254 = vadd.f32 %v4253, 1.0
    %v4255 = vrcp.pop %v4254
    %v4256 = vmul.f32 1.0, %v4255
    %v4257 = vtanh.pop %v4248
    %v4258 = vmul.f32 %v4256, %v3659
    %4260 = vrot.lane.b32.xlu0 %v4257, 32
    %v4261 = vpop.permute.xlu0 %4260
    %v4263 = vmul.f32 %v4256, %v4261
    %4265 = vrot.lane.b32.xlu0 %v4263, 32
    %v4266 = vpop.permute.xlu0 %4265
    %v4268 = vadd.f32 %v4258, %v4266
    %v4269 = vtanh.pop %v4268
    %4271 = vrot.lane.b32.xlu0 %v4269, 32
    %v4272 = vpop.permute.xlu0 %4271
    %v4274 = vmul.f32 %v4256, %v4272
    %4276 = vrot.lane.b32.xlu0 %v4274, 64
    %v4277 = vpop.permute.xlu0 %4276
    %v4278 = vsel %vm265, %v4277, 0
    %4280 = vmatprep.subr.mxu0 0.0
    %4281 = vmatpush1.msra.mxu0 %v93
    %4282 = vmatprep.subr.mxu0 0.0
    %4283 = vmatpush1.msra.mxu0 %v94
    %4284 = vmatprep.subr.mxu0 0.0
    %4285 = vmatpush1.msra.mxu0 %v95
    %4286 = vmatprep.subr.mxu0 0.0
    %4287 = vmatpush1.msra.mxu0 %v96
    %4288 = vmatprep.subr.mxu0 0.0
    %4289 = vmatpush1.msra.mxu0 0.0
    %4290 = vmatprep.subr.mxu0 0.0
    %4291 = vmatpush1.msra.mxu0 0.0
    %4292 = vmatprep.subr.mxu0 0.0
    %4293 = vmatpush1.msra.mxu0 0.0
    %4294 = vmatprep.subr.mxu0 0.0
    %4295 = vmatpush1.msra.mxu0 0.0
    %4296 = vmatprep.subr.mxu0 0.0
    %4297 = vmatpush1.msra.mxu0 0.0
    %4298 = vmatprep.subr.mxu0 0.0
    %4299 = vmatpush1.msra.mxu0 0.0
    %4300 = vmatprep.subr.mxu0 0.0
    %4301 = vmatpush1.msra.mxu0 0.0
    %4302 = vmatprep.subr.mxu0 0.0
    %4303 = vmatpush1.msra.mxu0 0.0
    %4304 = vmatprep.subr.mxu0 0.0
    %4305 = vmatpush1.msra.mxu0 0.0
    %4306 = vmatprep.subr.mxu0 0.0
    %4307 = vmatpush1.msra.mxu0 0.0
    %4308 = vmatprep.subr.mxu0 0.0
    %4309 = vmatpush1.msra.mxu0 0.0
    %4310 = vmatprep.subr.mxu0 0.0
    %4311 = vmatpush1.msra.mxu0 0.0
    %4312 = vmatprep.subr.mxu0 0.0
    %4313 = vmatpush1.msra.mxu0 0.0
    %4314 = vmatprep.subr.mxu0 0.0
    %4315 = vmatpush1.msra.mxu0 0.0
    %4316 = vmatprep.subr.mxu0 0.0
    %4317 = vmatpush1.msra.mxu0 0.0
    %4318 = vmatprep.subr.mxu0 0.0
    %4319 = vmatpush1.msra.mxu0 0.0
    %4320 = vmatprep.subr.mxu0 0.0
    %4321 = vmatpush1.msra.mxu0 0.0
    %4322 = vmatprep.subr.mxu0 0.0
    %4323 = vmatpush1.msra.mxu0 0.0
    %4324 = vmatprep.subr.mxu0 0.0
    %4325 = vmatpush1.msra.mxu0 0.0
    %4326 = vmatprep.subr.mxu0 0.0
    %4327 = vmatpush1.msra.mxu0 0.0
    %4328 = vmatprep.subr.mxu0 0.0
    %4329 = vmatpush1.msra.mxu0 0.0
    %4330 = vmatprep.subr.mxu0 0.0
    %4331 = vmatpush1.msra.mxu0 0.0
    %4332 = vmatprep.subr.mxu0 0.0
    %4333 = vmatpush1.msra.mxu0 0.0
    %4334 = vmatprep.subr.mxu0 0.0
    %4335 = vmatpush1.msra.mxu0 0.0
    %4336 = vmatprep.subr.mxu0 0.0
    %4337 = vmatpush1.msra.mxu0 0.0
    %4338 = vmatprep.subr.mxu0 0.0
    %4339 = vmatpush1.msra.mxu0 0.0
    %4340 = vmatprep.subr.mxu0 0.0
    %4341 = vmatpush1.msra.mxu0 0.0
    %4342 = vmatprep.subr.mxu0 0.0
    %4343 = vmatpush1.msra.mxu0 0.0
    %4344 = vmatprep.mubr.f32.mxu0 0.0
    %4345 = vmatmul.mubr.f32.gmra.mrb[0].mxu0 %v4278
    %v4346 = vpop.f32.mrb[0].mxu0
    %v4347 = vadd.f32 %v4076, %v4346
    %v4348 = vpop.f32.mrb[0].mxu0
    %4349 = vdwg.mxu0
    %v4350 = vxor.u32 %v4347, 2147483648
    %v4351 = vmul.f32 %v4350, 1.442695
    %v4352 = vpow.pop %v4351
    %v4353 = vadd.f32 %v4352, 1.0
    %v4354 = vrcp.pop %v4353
    %v4355 = vmul.f32 1.0, %v4354
    %v4356 = vtanh.pop %v4347
    %v4357 = vmul.f32 %v4355, %v3758
    %4359 = vrot.lane.b32.xlu0 %v4356, 32
    %v4360 = vpop.permute.xlu0 %4359
    %v4362 = vmul.f32 %v4355, %v4360
    %4364 = vrot.lane.b32.xlu0 %v4362, 32
    %v4365 = vpop.permute.xlu0 %4364
    %v4367 = vadd.f32 %v4357, %v4365
    %v4368 = vtanh.pop %v4367
    %4370 = vrot.lane.b32.xlu0 %v4368, 32
    %v4371 = vpop.permute.xlu0 %4370
    %v4373 = vmul.f32 %v4355, %v4371
    %4375 = vrot.lane.b32.xlu0 %v4373, 64
    %v4376 = vpop.permute.xlu0 %4375
    %v4377 = vsel %vm265, %v4376, 0
    %4379 = vmatprep.subr.mxu0 0.0
    %4380 = vmatpush1.msra.mxu0 %v150
    %4381 = vmatprep.subr.mxu0 0.0
    %4382 = vmatpush1.msra.mxu0 %v151
    %4383 = vmatprep.subr.mxu0 0.0
    %4384 = vmatpush1.msra.mxu0 %v152
    %4385 = vmatprep.subr.mxu0 0.0
    %4386 = vmatpush1.msra.mxu0 %v153
    %4387 = vmatprep.subr.mxu0 0.0
    %4388 = vmatpush1.msra.mxu0 0.0
    %4389 = vmatprep.subr.mxu0 0.0
    %4390 = vmatpush1.msra.mxu0 0.0
    %4391 = vmatprep.subr.mxu0 0.0
    %4392 = vmatpush1.msra.mxu0 0.0
    %4393 = vmatprep.subr.mxu0 0.0
    %4394 = vmatpush1.msra.mxu0 0.0
    %4395 = vmatprep.subr.mxu0 0.0
    %4396 = vmatpush1.msra.mxu0 0.0
    %4397 = vmatprep.subr.mxu0 0.0
    %4398 = vmatpush1.msra.mxu0 0.0
    %4399 = vmatprep.subr.mxu0 0.0
    %4400 = vmatpush1.msra.mxu0 0.0
    %4401 = vmatprep.subr.mxu0 0.0
    %4402 = vmatpush1.msra.mxu0 0.0
    %4403 = vmatprep.subr.mxu0 0.0
    %4404 = vmatpush1.msra.mxu0 0.0
    %4405 = vmatprep.subr.mxu0 0.0
    %4406 = vmatpush1.msra.mxu0 0.0
    %4407 = vmatprep.subr.mxu0 0.0
    %4408 = vmatpush1.msra.mxu0 0.0
    %4409 = vmatprep.subr.mxu0 0.0
    %4410 = vmatpush1.msra.mxu0 0.0
    %4411 = vmatprep.subr.mxu0 0.0
    %4412 = vmatpush1.msra.mxu0 0.0
    %4413 = vmatprep.subr.mxu0 0.0
    %4414 = vmatpush1.msra.mxu0 0.0
    %4415 = vmatprep.subr.mxu0 0.0
    %4416 = vmatpush1.msra.mxu0 0.0
    %4417 = vmatprep.subr.mxu0 0.0
    %4418 = vmatpush1.msra.mxu0 0.0
    %4419 = vmatprep.subr.mxu0 0.0
    %4420 = vmatpush1.msra.mxu0 0.0
    %4421 = vmatprep.subr.mxu0 0.0
    %4422 = vmatpush1.msra.mxu0 0.0
    %4423 = vmatprep.subr.mxu0 0.0
    %4424 = vmatpush1.msra.mxu0 0.0
    %4425 = vmatprep.subr.mxu0 0.0
    %4426 = vmatpush1.msra.mxu0 0.0
    %4427 = vmatprep.subr.mxu0 0.0
    %4428 = vmatpush1.msra.mxu0 0.0
    %4429 = vmatprep.subr.mxu0 0.0
    %4430 = vmatpush1.msra.mxu0 0.0
    %4431 = vmatprep.subr.mxu0 0.0
    %4432 = vmatpush1.msra.mxu0 0.0
    %4433 = vmatprep.subr.mxu0 0.0
    %4434 = vmatpush1.msra.mxu0 0.0
    %4435 = vmatprep.subr.mxu0 0.0
    %4436 = vmatpush1.msra.mxu0 0.0
    %4437 = vmatprep.subr.mxu0 0.0
    %4438 = vmatpush1.msra.mxu0 0.0
    %4439 = vmatprep.subr.mxu0 0.0
    %4440 = vmatpush1.msra.mxu0 0.0
    %4441 = vmatprep.subr.mxu0 0.0
    %4442 = vmatpush1.msra.mxu0 0.0
    %4443 = vmatprep.mubr.f32.mxu0 0.0
    %4444 = vmatmul.mubr.f32.gmra.mrb[0].mxu0 %v4377
    %v4445 = vpop.f32.mrb[0].mxu0
    %v4446 = vadd.f32 %v159, %v4445
    %v4447 = vpop.f32.mrb[0].mxu0
    %4448 = vdwg.mxu0
    %s4449 = scalar_lea.vmem [#allocation7], 12
    %4450 = vst [vmem:[%s4449] sm:$0x3] %v4446
    %v4451 = vsel %vm176, %v4446, -inf
    %4452 = vmax.index.xlane.f32.xlu0 %v4451
    %v4453 = vpop.xlane.xlu0 %4452
    %s4454 = sld [smem:[#allocation2 + $0x7]]
    %p4455 = scmp.gt.s32.totalorder %s4454, 0
    %s4456 = scalar_lea.vmem %s1, 14
    %v4457 = vld [vmem:[%s4456] sm:$0x3]
    %v4458 = vsel %vm176, %v4457, -inf
    %4459 = vmax.index.xlane.f32.xlu0 %v4458
    %v4460 = vpop.xlane.xlu0 %4459
    %s4461 = scalar_select %p4455, 1, 0
    %v4462 = vstv %s4461
    %vm4463 = vcmp.eq.s32.totalorder %v4462, 1
    %v4464 = vsel %vm4463, %v4460, %v4453
    %vm4465 = vcmp.eq.s32.totalorder %v4464, %v162
    %v4466 = vsel %vm4465, 1, 0
    %v4467 = vcvt.s32.f32 %v4466
    %4468 = vmatprep.subr.mxu0 0.0
    %4469 = vmatpush1.msra.mxu0 %v67
    %4470 = vmatprep.subr.mxu0 0.0
    %4471 = vmatpush1.msra.mxu0 %v68
    %4472 = vmatprep.subr.mxu0 0.0
    %4473 = vmatpush1.msra.mxu0 %v69
    %4474 = vmatprep.subr.mxu0 0.0
    %4475 = vmatpush1.msra.mxu0 %v70
    %4476 = vmatprep.subr.mxu0 0.0
    %4477 = vmatpush1.msra.mxu0 %v71
    %4478 = vmatprep.subr.mxu0 0.0
    %4479 = vmatpush1.msra.mxu0 %v72
    %4480 = vmatprep.subr.mxu0 0.0
    %4481 = vmatpush1.msra.mxu0 %v73
    %4482 = vmatprep.subr.mxu0 0.0
    %4483 = vmatpush1.msra.mxu0 %v74
    %4484 = vmatprep.subr.mxu0 0.0
    %4485 = vmatpush1.msra.mxu0 %v75
    %4486 = vmatprep.subr.mxu0 0.0
    %4487 = vmatpush1.msra.mxu0 %v76
    %4488 = vmatprep.subr.mxu0 0.0
    %4489 = vmatpush1.msra.mxu0 %v77
    %4490 = vmatprep.subr.mxu0 0.0
    %4491 = vmatpush1.msra.mxu0 %v78
    %4492 = vmatprep.subr.mxu0 0.0
    %4493 = vmatpush1.msra.mxu0 %v79
    %4494 = vmatprep.subr.mxu0 0.0
    %4495 = vmatpush1.msra.mxu0 %v80
    %4496 = vmatprep.subr.mxu0 0.0
    %4497 = vmatpush1.msra.mxu0 %v81
    %4498 = vmatprep.subr.mxu0 0.0
    %4499 = vmatpush1.msra.mxu0 %v82
    %4500 = vmatprep.subr.mxu0 0.0
    %4501 = vmatpush1.msra.mxu0 0.0
    %4502 = vmatprep.subr.mxu0 0.0
    %4503 = vmatpush1.msra.mxu0 0.0
    %4504 = vmatprep.subr.mxu0 0.0
    %4505 = vmatpush1.msra.mxu0 0.0
    %4506 = vmatprep.subr.mxu0 0.0
    %4507 = vmatpush1.msra.mxu0 0.0
    %4508 = vmatprep.subr.mxu0 0.0
    %4509 = vmatpush1.msra.mxu0 0.0
    %4510 = vmatprep.subr.mxu0 0.0
    %4511 = vmatpush1.msra.mxu0 0.0
    %4512 = vmatprep.subr.mxu0 0.0
    %4513 = vmatpush1.msra.mxu0 0.0
    %4514 = vmatprep.subr.mxu0 0.0
    %4515 = vmatpush1.msra.mxu0 0.0
    %4516 = vmatprep.subr.mxu0 0.0
    %4517 = vmatpush1.msra.mxu0 0.0
    %4518 = vmatprep.subr.mxu0 0.0
    %4519 = vmatpush1.msra.mxu0 0.0
    %4520 = vmatprep.subr.mxu0 0.0
    %4521 = vmatpush1.msra.mxu0 0.0
    %4522 = vmatprep.subr.mxu0 0.0
    %4523 = vmatpush1.msra.mxu0 0.0
    %4524 = vmatprep.subr.mxu0 0.0
    %4525 = vmatpush1.msra.mxu0 0.0
    %4526 = vmatprep.subr.mxu0 0.0
    %4527 = vmatpush1.msra.mxu0 0.0
    %4528 = vmatprep.subr.mxu0 0.0
    %4529 = vmatpush1.msra.mxu0 0.0
    %4530 = vmatprep.subr.mxu0 0.0
    %4531 = vmatpush1.msra.mxu0 0.0
    %4532 = vmatprep.mubr.f32.mxu0 0.0
    %4533 = vmatmul.mubr.f32.gmra.mrb[0].mxu0 %v4467
    %v4534 = vpop.f32.mrb[0].mxu0
    %v4535 = vadd.f32 0.0, %v4534
    %v4536 = vpop.f32.mrb[0].mxu0
    %4537 = vdwg.mxu0
    %4539 = vrot.lane.b32.xlu0 %v4274, 96
    %v4540 = vpop.permute.xlu0 %4539
    %v4542 = vsel %vm265, %v4178, %v4540
    %v4543 = vsel %vm267, %v4542, %v4373
    %v4545 = vsel %vm269, %v4543, 0
    %4547 = vmatprep.subr.mxu0 %v98
    %4548 = vmatpush1.msra.mxu0 %v97
    %4549 = vmatprep.subr.mxu0 %v101
    %4550 = vmatpush1.msra.mxu0 %v100
    %4551 = vmatprep.subr.mxu0 %v104
    %4552 = vmatpush1.msra.mxu0 %v103
    %4553 = vmatprep.subr.mxu0 %v107
    %4554 = vmatpush1.msra.mxu0 %v106
    %4555 = vmatprep.subr.mxu0 %v110
    %4556 = vmatpush1.msra.mxu0 %v109
    %4557 = vmatprep.subr.mxu0 %v113
    %4558 = vmatpush1.msra.mxu0 %v112
    %4559 = vmatprep.subr.mxu0 %v116
    %4560 = vmatpush1.msra.mxu0 %v115
    %4561 = vmatprep.subr.mxu0 %v119
    %4562 = vmatpush1.msra.mxu0 %v118
    %4563 = vmatprep.subr.mxu0 %v122
    %4564 = vmatpush1.msra.mxu0 %v121
    %4565 = vmatprep.subr.mxu0 %v125
    %4566 = vmatpush1.msra.mxu0 %v124
    %4567 = vmatprep.subr.mxu0 %v128
    %4568 = vmatpush1.msra.mxu0 %v127
    %4569 = vmatprep.subr.mxu0 %v131
    %4570 = vmatpush1.msra.mxu0 %v130
    %4571 = vmatprep.subr.mxu0 0.0
    %4572 = vmatpush1.msra.mxu0 0.0
    %4573 = vmatprep.subr.mxu0 0.0
    %4574 = vmatpush1.msra.mxu0 0.0
    %4575 = vmatprep.subr.mxu0 0.0
    %4576 = vmatpush1.msra.mxu0 0.0
    %4577 = vmatprep.subr.mxu0 0.0
    %4578 = vmatpush1.msra.mxu0 0.0
    %4579 = vmatprep.subr.mxu0 0.0
    %4580 = vmatpush1.msra.mxu0 0.0
    %4581 = vmatprep.subr.mxu0 0.0
    %4582 = vmatpush1.msra.mxu0 0.0
    %4583 = vmatprep.subr.mxu0 0.0
    %4584 = vmatpush1.msra.mxu0 0.0
    %4585 = vmatprep.subr.mxu0 0.0
    %4586 = vmatpush1.msra.mxu0 0.0
    %4587 = vmatprep.subr.mxu0 0.0
    %4588 = vmatpush1.msra.mxu0 0.0
    %4589 = vmatprep.subr.mxu0 0.0
    %4590 = vmatpush1.msra.mxu0 0.0
    %4591 = vmatprep.subr.mxu0 0.0
    %4592 = vmatpush1.msra.mxu0 0.0
    %4593 = vmatprep.subr.mxu0 0.0
    %4594 = vmatpush1.msra.mxu0 0.0
    %4595 = vmatprep.subr.mxu0 0.0
    %4596 = vmatpush1.msra.mxu0 0.0
    %4597 = vmatprep.subr.mxu0 0.0
    %4598 = vmatpush1.msra.mxu0 0.0
    %4599 = vmatprep.subr.mxu0 0.0
    %4600 = vmatpush1.msra.mxu0 0.0
    %4601 = vmatprep.subr.mxu0 0.0
    %4602 = vmatpush1.msra.mxu0 0.0
    %4603 = vmatprep.subr.mxu0 0.0
    %4604 = vmatpush1.msra.mxu0 0.0
    %4605 = vmatprep.subr.mxu0 0.0
    %4606 = vmatpush1.msra.mxu0 0.0
    %4607 = vmatprep.subr.mxu0 0.0
    %4608 = vmatpush1.msra.mxu0 0.0
    %4609 = vmatprep.subr.mxu0 0.0
    %4610 = vmatpush1.msra.mxu0 0.0
    %4611 = vmatprep.mubr.f32.mxu0 0.0
    %4612 = vmatmul.mubr.f32.gmra.mrb[0].mxu0 %v4545
    %v4613 = vpop.f32.mrb[0].mxu0
    %v4614 = vadd.f32 %v138, %v4613
    %v4615 = vpop.f32.mrb[0].mxu0
    %v4616 = vadd.f32 %v142, %v4615
    %4617 = vdwg.mxu0
    %4618 = vmatprep.subr.mxu0 0.0
    %4619 = vmatpush1.msra.mxu0 %v99
    %4620 = vmatprep.subr.mxu0 0.0
    %4621 = vmatpush1.msra.mxu0 %v102
    %4622 = vmatprep.subr.mxu0 0.0
    %4623 = vmatpush1.msra.mxu0 %v105
    %4624 = vmatprep.subr.mxu0 0.0
    %4625 = vmatpush1.msra.mxu0 %v108
    %4626 = vmatprep.subr.mxu0 0.0
    %4627 = vmatpush1.msra.mxu0 %v111
    %4628 = vmatprep.subr.mxu0 0.0
    %4629 = vmatpush1.msra.mxu0 %v114
    %4630 = vmatprep.subr.mxu0 0.0
    %4631 = vmatpush1.msra.mxu0 %v117
    %4632 = vmatprep.subr.mxu0 0.0
    %4633 = vmatpush1.msra.mxu0 %v120
    %4634 = vmatprep.subr.mxu0 0.0
    %4635 = vmatpush1.msra.mxu0 %v123
    %4636 = vmatprep.subr.mxu0 0.0
    %4637 = vmatpush1.msra.mxu0 %v126
    %4638 = vmatprep.subr.mxu0 0.0
    %4639 = vmatpush1.msra.mxu0 %v129
    %4640 = vmatprep.subr.mxu0 0.0
    %4641 = vmatpush1.msra.mxu0 %v132
    %4642 = vmatprep.subr.mxu0 0.0
    %4643 = vmatpush1.msra.mxu0 0.0
    %4644 = vmatprep.subr.mxu0 0.0
    %4645 = vmatpush1.msra.mxu0 0.0
    %4646 = vmatprep.subr.mxu0 0.0
    %4647 = vmatpush1.msra.mxu0 0.0
    %4648 = vmatprep.subr.mxu0 0.0
    %4649 = vmatpush1.msra.mxu0 0.0
    %4650 = vmatprep.subr.mxu0 0.0
    %4651 = vmatpush1.msra.mxu0 0.0
    %4652 = vmatprep.subr.mxu0 0.0
    %4653 = vmatpush1.msra.mxu0 0.0
    %4654 = vmatprep.subr.mxu0 0.0
    %4655 = vmatpush1.msra.mxu0 0.0
    %4656 = vmatprep.subr.mxu0 0.0
    %4657 = vmatpush1.msra.mxu0 0.0
    %4658 = vmatprep.subr.mxu0 0.0
    %4659 = vmatpush1.msra.mxu0 0.0
    %4660 = vmatprep.subr.mxu0 0.0
    %4661 = vmatpush1.msra.mxu0 0.0
    %4662 = vmatprep.subr.mxu0 0.0
    %4663 = vmatpush1.msra.mxu0 0.0
    %4664 = vmatprep.subr.mxu0 0.0
    %4665 = vmatpush1.msra.mxu0 0.0
    %4666 = vmatprep.subr.mxu0 0.0
    %4667 = vmatpush1.msra.mxu0 0.0
    %4668 = vmatprep.subr.mxu0 0.0
    %4669 = vmatpush1.msra.mxu0 0.0
    %4670 = vmatprep.subr.mxu0 0.0
    %4671 = vmatpush1.msra.mxu0 0.0
    %4672 = vmatprep.subr.mxu0 0.0
    %4673 = vmatpush1.msra.mxu0 0.0
    %4674 = vmatprep.subr.mxu0 0.0
    %4675 = vmatpush1.msra.mxu0 0.0
    %4676 = vmatprep.subr.mxu0 0.0
    %4677 = vmatpush1.msra.mxu0 0.0
    %4678 = vmatprep.subr.mxu0 0.0
    %4679 = vmatpush1.msra.mxu0 0.0
    %4680 = vmatprep.subr.mxu0 0.0
    %4681 = vmatpush1.msra.mxu0 0.0
    %4682 = vmatprep.mubr.f32.mxu0 0.0
    %4683 = vmatmul.mubr.f32.gmra.mrb[0].mxu0 %v4545
    %v4684 = vpop.f32.mrb[0].mxu0
    %v4685 = vadd.f32 %v146, %v4684
    %v4686 = vpop.f32.mrb[0].mxu0
    %4687 = vdwg.mxu0
    %v4689 = vsel %vm265, %v4535, 0
    %4691 = vmatprep.subr.mxu0 0.0
    %4692 = vmatpush1.msra.mxu0 %v83
    %4693 = vmatprep.subr.mxu0 0.0
    %4694 = vmatpush1.msra.mxu0 %v84
    %4695 = vmatprep.subr.mxu0 0.0
    %4696 = vmatpush1.msra.mxu0 %v85
    %4697 = vmatprep.subr.mxu0 0.0
    %4698 = vmatpush1.msra.mxu0 %v86
    %4699 = vmatprep.subr.mxu0 0.0
    %4700 = vmatpush1.msra.mxu0 0.0
    %4701 = vmatprep.subr.mxu0 0.0
    %4702 = vmatpush1.msra.mxu0 0.0
    %4703 = vmatprep.subr.mxu0 0.0
    %4704 = vmatpush1.msra.mxu0 0.0
    %4705 = vmatprep.subr.mxu0 0.0
    %4706 = vmatpush1.msra.mxu0 0.0
    %4707 = vmatprep.subr.mxu0 0.0
    %4708 = vmatpush1.msra.mxu0 0.0
    %4709 = vmatprep.subr.mxu0 0.0
    %4710 = vmatpush1.msra.mxu0 0.0
    %4711 = vmatprep.subr.mxu0 0.0
    %4712 = vmatpush1.msra.mxu0 0.0
    %4713 = vmatprep.subr.mxu0 0.0
    %4714 = vmatpush1.msra.mxu0 0.0
    %4715 = vmatprep.subr.mxu0 0.0
    %4716 = vmatpush1.msra.mxu0 0.0
    %4717 = vmatprep.subr.mxu0 0.0
    %4718 = vmatpush1.msra.mxu0 0.0
    %4719 = vmatprep.subr.mxu0 0.0
    %4720 = vmatpush1.msra.mxu0 0.0
    %4721 = vmatprep.subr.mxu0 0.0
    %4722 = vmatpush1.msra.mxu0 0.0
    %4723 = vmatprep.subr.mxu0 0.0
    %4724 = vmatpush1.msra.mxu0 0.0
    %4725 = vmatprep.subr.mxu0 0.0
    %4726 = vmatpush1.msra.mxu0 0.0
    %4727 = vmatprep.subr.mxu0 0.0
    %4728 = vmatpush1.msra.mxu0 0.0
    %4729 = vmatprep.subr.mxu0 0.0
    %4730 = vmatpush1.msra.mxu0 0.0
    %4731 = vmatprep.subr.mxu0 0.0
    %4732 = vmatpush1.msra.mxu0 0.0
    %4733 = vmatprep.subr.mxu0 0.0
    %4734 = vmatpush1.msra.mxu0 0.0
    %4735 = vmatprep.subr.mxu0 0.0
    %4736 = vmatpush1.msra.mxu0 0.0
    %4737 = vmatprep.subr.mxu0 0.0
    %4738 = vmatpush1.msra.mxu0 0.0
    %4739 = vmatprep.subr.mxu0 0.0
    %4740 = vmatpush1.msra.mxu0 0.0
    %4741 = vmatprep.subr.mxu0 0.0
    %4742 = vmatpush1.msra.mxu0 0.0
    %4743 = vmatprep.subr.mxu0 0.0
    %4744 = vmatpush1.msra.mxu0 0.0
    %4745 = vmatprep.subr.mxu0 0.0
    %4746 = vmatpush1.msra.mxu0 0.0
    %4747 = vmatprep.subr.mxu0 0.0
    %4748 = vmatpush1.msra.mxu0 0.0
    %4749 = vmatprep.subr.mxu0 0.0
    %4750 = vmatpush1.msra.mxu0 0.0
    %4751 = vmatprep.subr.mxu0 0.0
    %4752 = vmatpush1.msra.mxu0 0.0
    %4753 = vmatprep.subr.mxu0 0.0
    %4754 = vmatpush1.msra.mxu0 0.0
    %4755 = vmatprep.mubr.f32.mxu0 0.0
    %4756 = vmatmul.mubr.f32.gmra.mrb[0].mxu0 %v4689
    %v4757 = vpop.f32.mrb[0].mxu0
    %v4758 = vadd.f32 %v4614, %v4757
    %v4759 = vpop.f32.mrb[0].mxu0
    %4760 = vdwg.mxu0
    %v4761 = vxor.u32 %v4758, 2147483648
    %v4762 = vmul.f32 %v4761, 1.442695
    %v4763 = vpow.pop %v4762
    %v4764 = vadd.f32 %v4763, 1.0
    %v4765 = vrcp.pop %v4764
    %v4766 = vmul.f32 1.0, %v4765
    %v4767 = vtanh.pop %v4758
    %v4768 = vmul.f32 %v4766, %v4169
    %4770 = vrot.lane.b32.xlu0 %v4767, 32
    %v4771 = vpop.permute.xlu0 %4770
    %v4773 = vmul.f32 %v4766, %v4771
    %4775 = vrot.lane.b32.xlu0 %v4773, 32
    %v4776 = vpop.permute.xlu0 %4775
    %v4778 = vadd.f32 %v4768, %v4776
    %v4779 = vtanh.pop %v4778
    %4781 = vrot.lane.b32.xlu0 %v4779, 32
    %v4782 = vpop.permute.xlu0 %4781
    %v4784 = vmul.f32 %v4766, %v4782
    %4786 = vrot.lane.b32.xlu0 %v4784, 64
    %v4787 = vpop.permute.xlu0 %4786
    %v4788 = vsel %vm265, %v4787, 0
    %4790 = vmatprep.subr.mxu0 0.0
    %4791 = vmatpush1.msra.mxu0 %v88
    %4792 = vmatprep.subr.mxu0 0.0
    %4793 = vmatpush1.msra.mxu0 %v89
    %4794 = vmatprep.subr.mxu0 0.0
    %4795 = vmatpush1.msra.mxu0 %v90
    %4796 = vmatprep.subr.mxu0 0.0
    %4797 = vmatpush1.msra.mxu0 %v91
    %4798 = vmatprep.subr.mxu0 0.0
    %4799 = vmatpush1.msra.mxu0 0.0
    %4800 = vmatprep.subr.mxu0 0.0
    %4801 = vmatpush1.msra.mxu0 0.0
    %4802 = vmatprep.subr.mxu0 0.0
    %4803 = vmatpush1.msra.mxu0 0.0
    %4804 = vmatprep.subr.mxu0 0.0
    %4805 = vmatpush1.msra.mxu0 0.0
    %4806 = vmatprep.subr.mxu0 0.0
    %4807 = vmatpush1.msra.mxu0 0.0
    %4808 = vmatprep.subr.mxu0 0.0
    %4809 = vmatpush1.msra.mxu0 0.0
    %4810 = vmatprep.subr.mxu0 0.0
    %4811 = vmatpush1.msra.mxu0 0.0
    %4812 = vmatprep.subr.mxu0 0.0
    %4813 = vmatpush1.msra.mxu0 0.0
    %4814 = vmatprep.subr.mxu0 0.0
    %4815 = vmatpush1.msra.mxu0 0.0
    %4816 = vmatprep.subr.mxu0 0.0
    %4817 = vmatpush1.msra.mxu0 0.0
    %4818 = vmatprep.subr.mxu0 0.0
    %4819 = vmatpush1.msra.mxu0 0.0
    %4820 = vmatprep.subr.mxu0 0.0
    %4821 = vmatpush1.msra.mxu0 0.0
    %4822 = vmatprep.subr.mxu0 0.0
    %4823 = vmatpush1.msra.mxu0 0.0
    %4824 = vmatprep.subr.mxu0 0.0
    %4825 = vmatpush1.msra.mxu0 0.0
    %4826 = vmatprep.subr.mxu0 0.0
    %4827 = vmatpush1.msra.mxu0 0.0
    %4828 = vmatprep.subr.mxu0 0.0
    %4829 = vmatpush1.msra.mxu0 0.0
    %4830 = vmatprep.subr.mxu0 0.0
    %4831 = vmatpush1.msra.mxu0 0.0
    %4832 = vmatprep.subr.mxu0 0.0
    %4833 = vmatpush1.msra.mxu0 0.0
    %4834 = vmatprep.subr.mxu0 0.0
    %4835 = vmatpush1.msra.mxu0 0.0
    %4836 = vmatprep.subr.mxu0 0.0
    %4837 = vmatpush1.msra.mxu0 0.0
    %4838 = vmatprep.subr.mxu0 0.0
    %4839 = vmatpush1.msra.mxu0 0.0
    %4840 = vmatprep.subr.mxu0 0.0
    %4841 = vmatpush1.msra.mxu0 0.0
    %4842 = vmatprep.subr.mxu0 0.0
    %4843 = vmatpush1.msra.mxu0 0.0
    %4844 = vmatprep.subr.mxu0 0.0
    %4845 = vmatpush1.msra.mxu0 0.0
    %4846 = vmatprep.subr.mxu0 0.0
    %4847 = vmatpush1.msra.mxu0 0.0
    %4848 = vmatprep.subr.mxu0 0.0
    %4849 = vmatpush1.msra.mxu0 0.0
    %4850 = vmatprep.subr.mxu0 0.0
    %4851 = vmatpush1.msra.mxu0 0.0
    %4852 = vmatprep.subr.mxu0 0.0
    %4853 = vmatpush1.msra.mxu0 0.0
    %4854 = vmatprep.mubr.f32.mxu0 0.0
    %4855 = vmatmul.mubr.f32.gmra.mrb[0].mxu0 %v4788
    %v4856 = vpop.f32.mrb[0].mxu0
    %v4857 = vadd.f32 %v4616, %v4856
    %v4858 = vpop.f32.mrb[0].mxu0
    %4859 = vdwg.mxu0
    %v4860 = vxor.u32 %v4857, 2147483648
    %v4861 = vmul.f32 %v4860, 1.442695
    %v4862 = vpow.pop %v4861
    %v4863 = vadd.f32 %v4862, 1.0
    %v4864 = vrcp.pop %v4863
    %v4865 = vmul.f32 1.0, %v4864
    %v4866 = vtanh.pop %v4857
    %v4867 = vmul.f32 %v4865, %v4268
    %4869 = vrot.lane.b32.xlu0 %v4866, 32
    %v4870 = vpop.permute.xlu0 %4869
    %v4872 = vmul.f32 %v4865, %v4870
    %4874 = vrot.lane.b32.xlu0 %v4872, 32
    %v4875 = vpop.permute.xlu0 %4874
    %v4877 = vadd.f32 %v4867, %v4875
    %v4878 = vtanh.pop %v4877
    %4880 = vrot.lane.b32.xlu0 %v4878, 32
    %v4881 = vpop.permute.xlu0 %4880
    %v4883 = vmul.f32 %v4865, %v4881
    %4885 = vrot.lane.b32.xlu0 %v4883, 64
    %v4886 = vpop.permute.xlu0 %4885
    %v4887 = vsel %vm265, %v4886, 0
    %4889 = vmatprep.subr.mxu0 0.0
    %4890 = vmatpush1.msra.mxu0 %v93
    %4891 = vmatprep.subr.mxu0 0.0
    %4892 = vmatpush1.msra.mxu0 %v94
    %4893 = vmatprep.subr.mxu0 0.0
    %4894 = vmatpush1.msra.mxu0 %v95
    %4895 = vmatprep.subr.mxu0 0.0
    %4896 = vmatpush1.msra.mxu0 %v96
    %4897 = vmatprep.subr.mxu0 0.0
    %4898 = vmatpush1.msra.mxu0 0.0
    %4899 = vmatprep.subr.mxu0 0.0
    %4900 = vmatpush1.msra.mxu0 0.0
    %4901 = vmatprep.subr.mxu0 0.0
    %4902 = vmatpush1.msra.mxu0 0.0
    %4903 = vmatprep.subr.mxu0 0.0
    %4904 = vmatpush1.msra.mxu0 0.0
    %4905 = vmatprep.subr.mxu0 0.0
    %4906 = vmatpush1.msra.mxu0 0.0
    %4907 = vmatprep.subr.mxu0 0.0
    %4908 = vmatpush1.msra.mxu0 0.0
    %4909 = vmatprep.subr.mxu0 0.0
    %4910 = vmatpush1.msra.mxu0 0.0
    %4911 = vmatprep.subr.mxu0 0.0
    %4912 = vmatpush1.msra.mxu0 0.0
    %4913 = vmatprep.subr.mxu0 0.0
    %4914 = vmatpush1.msra.mxu0 0.0
    %4915 = vmatprep.subr.mxu0 0.0
    %4916 = vmatpush1.msra.mxu0 0.0
    %4917 = vmatprep.subr.mxu0 0.0
    %4918 = vmatpush1.msra.mxu0 0.0
    %4919 = vmatprep.subr.mxu0 0.0
    %4920 = vmatpush1.msra.mxu0 0.0
    %4921 = vmatprep.subr.mxu0 0.0
    %4922 = vmatpush1.msra.mxu0 0.0
    %4923 = vmatprep.subr.mxu0 0.0
    %4924 = vmatpush1.msra.mxu0 0.0
    %4925 = vmatprep.subr.mxu0 0.0
    %4926 = vmatpush1.msra.mxu0 0.0
    %4927 = vmatprep.subr.mxu0 0.0
    %4928 = vmatpush1.msra.mxu0 0.0
    %4929 = vmatprep.subr.mxu0 0.0
    %4930 = vmatpush1.msra.mxu0 0.0
    %4931 = vmatprep.subr.mxu0 0.0
    %4932 = vmatpush1.msra.mxu0 0.0
    %4933 = vmatprep.subr.mxu0 0.0
    %4934 = vmatpush1.msra.mxu0 0.0
    %4935 = vmatprep.subr.mxu0 0.0
    %4936 = vmatpush1.msra.mxu0 0.0
    %4937 = vmatprep.subr.mxu0 0.0
    %4938 = vmatpush1.msra.mxu0 0.0
    %4939 = vmatprep.subr.mxu0 0.0
    %4940 = vmatpush1.msra.mxu0 0.0
    %4941 = vmatprep.subr.mxu0 0.0
    %4942 = vmatpush1.msra.mxu0 0.0
    %4943 = vmatprep.subr.mxu0 0.0
    %4944 = vmatpush1.msra.mxu0 0.0
    %4945 = vmatprep.subr.mxu0 0.0
    %4946 = vmatpush1.msra.mxu0 0.0
    %4947 = vmatprep.subr.mxu0 0.0
    %4948 = vmatpush1.msra.mxu0 0.0
    %4949 = vmatprep.subr.mxu0 0.0
    %4950 = vmatpush1.msra.mxu0 0.0
    %4951 = vmatprep.subr.mxu0 0.0
    %4952 = vmatpush1.msra.mxu0 0.0
    %4953 = vmatprep.mubr.f32.mxu0 0.0
    %4954 = vmatmul.mubr.f32.gmra.mrb[0].mxu0 %v4887
    %v4955 = vpop.f32.mrb[0].mxu0
    %v4956 = vadd.f32 %v4685, %v4955
    %v4957 = vpop.f32.mrb[0].mxu0
    %4958 = vdwg.mxu0
    %v4959 = vxor.u32 %v4956, 2147483648
    %v4960 = vmul.f32 %v4959, 1.442695
    %v4961 = vpow.pop %v4960
    %v4962 = vadd.f32 %v4961, 1.0
    %v4963 = vrcp.pop %v4962
    %v4964 = vmul.f32 1.0, %v4963
    %v4965 = vtanh.pop %v4956
    %v4966 = vmul.f32 %v4964, %v4367
    %4968 = vrot.lane.b32.xlu0 %v4965, 32
    %v4969 = vpop.permute.xlu0 %4968
    %v4971 = vmul.f32 %v4964, %v4969
    %4973 = vrot.lane.b32.xlu0 %v4971, 32
    %v4974 = vpop.permute.xlu0 %4973
    %v4976 = vadd.f32 %v4966, %v4974
    %v4977 = vtanh.pop %v4976
    %4979 = vrot.lane.b32.xlu0 %v4977, 32
    %v4980 = vpop.permute.xlu0 %4979
    %v4982 = vmul.f32 %v4964, %v4980
    %4984 = vrot.lane.b32.xlu0 %v4982, 64
    %v4985 = vpop.permute.xlu0 %4984
    %v4986 = vsel %vm265, %v4985, 0
    %4988 = vmatprep.subr.mxu0 0.0
    %4989 = vmatpush1.msra.mxu0 %v150
    %4990 = vmatprep.subr.mxu0 0.0
    %4991 = vmatpush1.msra.mxu0 %v151
    %4992 = vmatprep.subr.mxu0 0.0
    %4993 = vmatpush1.msra.mxu0 %v152
    %4994 = vmatprep.subr.mxu0 0.0
    %4995 = vmatpush1.msra.mxu0 %v153
    %4996 = vmatprep.subr.mxu0 0.0
    %4997 = vmatpush1.msra.mxu0 0.0
    %4998 = vmatprep.subr.mxu0 0.0
    %4999 = vmatpush1.msra.mxu0 0.0
    %5000 = vmatprep.subr.mxu0 0.0
    %5001 = vmatpush1.msra.mxu0 0.0
    %5002 = vmatprep.subr.mxu0 0.0
    %5003 = vmatpush1.msra.mxu0 0.0
    %5004 = vmatprep.subr.mxu0 0.0
    %5005 = vmatpush1.msra.mxu0 0.0
    %5006 = vmatprep.subr.mxu0 0.0
    %5007 = vmatpush1.msra.mxu0 0.0
    %5008 = vmatprep.subr.mxu0 0.0
    %5009 = vmatpush1.msra.mxu0 0.0
    %5010 = vmatprep.subr.mxu0 0.0
    %5011 = vmatpush1.msra.mxu0 0.0
    %5012 = vmatprep.subr.mxu0 0.0
    %5013 = vmatpush1.msra.mxu0 0.0
    %5014 = vmatprep.subr.mxu0 0.0
    %5015 = vmatpush1.msra.mxu0 0.0
    %5016 = vmatprep.subr.mxu0 0.0
    %5017 = vmatpush1.msra.mxu0 0.0
    %5018 = vmatprep.subr.mxu0 0.0
    %5019 = vmatpush1.msra.mxu0 0.0
    %5020 = vmatprep.subr.mxu0 0.0
    %5021 = vmatpush1.msra.mxu0 0.0
    %5022 = vmatprep.subr.mxu0 0.0
    %5023 = vmatpush1.msra.mxu0 0.0
    %5024 = vmatprep.subr.mxu0 0.0
    %5025 = vmatpush1.msra.mxu0 0.0
    %5026 = vmatprep.subr.mxu0 0.0
    %5027 = vmatpush1.msra.mxu0 0.0
    %5028 = vmatprep.subr.mxu0 0.0
    %5029 = vmatpush1.msra.mxu0 0.0
    %5030 = vmatprep.subr.mxu0 0.0
    %5031 = vmatpush1.msra.mxu0 0.0
    %5032 = vmatprep.subr.mxu0 0.0
    %5033 = vmatpush1.msra.mxu0 0.0
    %5034 = vmatprep.subr.mxu0 0.0
    %5035 = vmatpush1.msra.mxu0 0.0
    %5036 = vmatprep.subr.mxu0 0.0
    %5037 = vmatpush1.msra.mxu0 0.0
    %5038 = vmatprep.subr.mxu0 0.0
    %5039 = vmatpush1.msra.mxu0 0.0
    %5040 = vmatprep.subr.mxu0 0.0
    %5041 = vmatpush1.msra.mxu0 0.0
    %5042 = vmatprep.subr.mxu0 0.0
    %5043 = vmatpush1.msra.mxu0 0.0
    %5044 = vmatprep.subr.mxu0 0.0
    %5045 = vmatpush1.msra.mxu0 0.0
    %5046 = vmatprep.subr.mxu0 0.0
    %5047 = vmatpush1.msra.mxu0 0.0
    %5048 = vmatprep.subr.mxu0 0.0
    %5049 = vmatpush1.msra.mxu0 0.0
    %5050 = vmatprep.subr.mxu0 0.0
    %5051 = vmatpush1.msra.mxu0 0.0
    %5052 = vmatprep.mubr.f32.mxu0 0.0
    %5053 = vmatmul.mubr.f32.gmra.mrb[0].mxu0 %v4986
    %v5054 = vpop.f32.mrb[0].mxu0
    %v5055 = vadd.f32 %v159, %v5054
    %v5056 = vpop.f32.mrb[0].mxu0
    %5057 = vdwg.mxu0
    %s5058 = scalar_lea.vmem [#allocation7], 14
    %5059 = vst [vmem:[%s5058] sm:$0x3] %v5055
    %vm5061 = vcmask 254976
    %5062 = vst.msk [vmem:[#allocation8] sm:$0x3] %vm5061, %v4787
    %5064 = vrot.lane.b32.xlu0 %v4778, 96
    %v5065 = vpop.permute.xlu0 %5064
    %5067 = vst.msk [vmem:[#allocation10] sm:$0x3] %vm5061, %v5065
    %s5069 = scalar_lea.vmem [#allocation8], 2
    %5070 = vst.msk [vmem:[%s5069] sm:$0x3] %vm5061, %v4886
    %5072 = vrot.lane.b32.xlu0 %v4877, 96
    %v5073 = vpop.permute.xlu0 %5072
    %s5075 = scalar_lea.vmem [#allocation10], 2
    %5076 = vst.msk [vmem:[%s5075] sm:$0x3] %vm5061, %v5073
    %s5078 = scalar_lea.vmem [#allocation8], 4
    %5079 = vst.msk [vmem:[%s5078] sm:$0x3] %vm5061, %v4985
    %5081 = vrot.lane.b32.xlu0 %v4976, 96
    %v5082 = vpop.permute.xlu0 %5081
    %s5084 = scalar_lea.vmem [#allocation10], 4
    %5085 = vst.msk [vmem:[%s5084] sm:$0x3] %vm5061, %v5082
    // Predicated region
    $region50: #{tpu_custom_call.1} parent=1 // pred_check
      _
    $region51: #{tpu_custom_call.1} parent=1 // pred_check_branch
      %5087 = sbr.rel (0) target = $region53
    $region52: #{tpu_custom_call.1} parent=1 // pred_region
      %s5089 = ssub.s32 256, 256
      %5090 = vsyncadd [#allocation4], %s5089
      %s5091 = sshll.u32 [#allocation7], 4
      %s5092 = int_to_ptr.vmem [resolvable:$true] %s5091
      %5097 = dma.vmem_to_hbm [thread:$0]  %s5092, 256, %s10, [#allocation4], 32, 32, 2
    $region53: #{tpu_custom_call.1} parent=1 // pred_fallthru
      _
    // Predicated region
    $region54: #{tpu_custom_call.1} parent=1 // pred_check
      _
    $region55: #{tpu_custom_call.1} parent=1 // pred_check_branch
      %5099 = sbr.rel (0) target = $region57
    $region56: #{tpu_custom_call.1} parent=1 // pred_region
      %s5101 = ssub.s32 96, 96
      %5102 = vsyncadd [#allocation9], %s5101
      %s5103 = sshll.u32 [#allocation8], 4
      %s5104 = int_to_ptr.vmem [resolvable:$true] %s5103
      %5109 = dma.vmem_to_hbm [thread:$0]  %s5104, 96, %s11, [#allocation9], 32, 32, 2
    $region57: #{tpu_custom_call.1} parent=1 // pred_fallthru
      _
    // Predicated region
    $region58: #{tpu_custom_call.1} parent=1 // pred_check
      _
    $region59: #{tpu_custom_call.1} parent=1 // pred_check_branch
      %5111 = sbr.rel (0) target = $region61
    $region60: #{tpu_custom_call.1} parent=1 // pred_region
      %s5113 = ssub.s32 96, 96
      %5114 = vsyncadd [#allocation9], %s5113
      %s5115 = sshll.u32 [#allocation10], 4
      %s5116 = int_to_ptr.vmem [resolvable:$true] %s5115
      %5121 = dma.vmem_to_hbm [thread:$0]  %s5116, 96, %s12, [#allocation9], 32, 32, 2
    $region61: #{tpu_custom_call.1} parent=1 // pred_fallthru
      _
    // Predicated region
    $region62: #{tpu_custom_call.1} parent=1 // pred_check
      _
    $region63: #{tpu_custom_call.1} parent=1 // pred_check_branch
      %5123 = sbr.rel (0) target = $region65
    $region64: #{tpu_custom_call.1} parent=1 // pred_region
      %5124 = dma.done [#allocation4], 256
    $region65: #{tpu_custom_call.1} parent=1 // pred_fallthru
      _
    // Predicated region
    $region66: #{tpu_custom_call.1} parent=1 // pred_check
      _
    $region67: #{tpu_custom_call.1} parent=1 // pred_check_branch
      %5126 = sbr.rel (0) target = $region69
    $region68: #{tpu_custom_call.1} parent=1 // pred_region
      %5127 = dma.done [#allocation9], 96
    $region69: #{tpu_custom_call.1} parent=1 // pred_fallthru
      _
    // Predicated region
    $region70: #{tpu_custom_call.1} parent=1 // pred_check
      _
    $region71: #{tpu_custom_call.1} parent=1 // pred_check_branch
      %5129 = sbr.rel (0) target = $region73
    $region72: #{tpu_custom_call.1} parent=1 // pred_region
      %5130 = dma.done [#allocation9], 96
    $region73: #{tpu_custom_call.1} parent=1 // pred_fallthru
      _
    %5131 = vsyncpa [#allocation3], 1
    %5132 = vsyncpa [#allocation4], 1
    %5133 = vsyncpa [#allocation9], 1
    %5134 = vsyncpa [#allocation5], 1

</llo_original>
